<compile_context>
chip_gen: v7x
topology: tpu7x:2x2x1
jax: 0.10.0
libtpu: 0.0.40
codegen_flags: <defaults>
</compile_context>

<pallas_src>
import functools

import jax
import jax.numpy as jnp
from jax.experimental import pallas as pl
from jax.experimental.pallas import tpu as pltpu

N_FEATURES = 4
# in-50-20-10-2-10-20-50-out  (matches AE_2D_v2.describe())
LAYER_DIMS = [N_FEATURES, 50, 20, 10, 2, 10, 20, 50, N_FEATURES]

LANE = 128
# Batch (lane-axis) tile: multiple of 128, large enough to amortize per-step
# overhead; ~0.5 KB/sample live VMEM -> ~16 MiB peak at 32768, safe everywhere.
DEFAULT_BLOCK_BATCH = 32768


def _round_up(n, m):
    return ((n + m - 1) // m) * m


def _linear(w_ref, b_ref, h):
    # (out, in) @ (in, TB) + (out, 1) -> (out, TB); f32 MXU accumulation.
    return (
        jnp.dot(
            w_ref[...],
            h,
            preferred_element_type=jnp.float32,
            precision=jax.lax.Precision.HIGHEST,
        )
        + b_ref[...]
    )


def ae_2d_v2_kernel(
    x_ref,
    w1, b1, w2, b2, w3, b3, w4, b4,   # encoder: en1..en4
    w5, b5, w6, b6, w7, b7, w8, b8,   # decoder: de1..de4
    out_ref,
):
    h = x_ref[...]                       # (4, TB) f32, batch on lanes

    # encode: en4(tanh(en3(tanh(en2(tanh(en1(x)))))))
    h = jnp.tanh(_linear(w1, b1, h))     # (50, TB)
    h = jnp.tanh(_linear(w2, b2, h))     # (20, TB)
    h = jnp.tanh(_linear(w3, b3, h))     # (10, TB)
    z = _linear(w4, b4, h)               # (2, TB) latent, no tanh here

    # decode: de4(tanh(de3(tanh(de2(tanh(de1(tanh(z))))))))
    h = jnp.tanh(z)                      # decode applies tanh to its input first
    h = jnp.tanh(_linear(w5, b5, h))     # (10, TB)
    h = jnp.tanh(_linear(w6, b6, h))     # (20, TB)
    h = jnp.tanh(_linear(w7, b7, h))     # (50, TB)
    out = _linear(w8, b8, h)             # (4, TB)

    out_ref[...] = out.astype(out_ref.dtype)


@functools.partial(jax.jit, static_argnames=("block_batch",))
def ae_2d_v2_forward(x, params, *, block_batch=DEFAULT_BLOCK_BATCH):
    """x: (batch, 4) f32. params: flat tuple (w1, b1, ..., w8, b8),
    w_i (out, in) as in PyTorch, b_i (out, 1). Returns (batch, 4)."""
    batch = x.shape[0]

    # Lane-axis tile: multiple of 128, no larger than the (rounded) batch.
    tb = max(LANE, min(_round_up(block_batch, LANE), _round_up(batch, LANE)))
    padded = _round_up(batch, tb)

    # Layout change to (features, batch); pad fuses into the same copy.
    xt = jnp.pad(x.T, ((0, 0), (0, padded - batch)))
    grid = (padded // tb,)

    io_spec = pl.BlockSpec((N_FEATURES, tb), lambda i: (0, i))
    # Full-array blocks with a constant index map: loaded once, VMEM-resident.
    param_specs = [pl.BlockSpec(p.shape, lambda i: (0, 0)) for p in params]

    # Advisory cost estimate for XLA's scheduler.
    flops = 2 * padded * sum(a * b for a, b in zip(LAYER_DIMS[:-1], LAYER_DIMS[1:]))
    transcendentals = padded * sum(LAYER_DIMS[1:-1])  # one tanh per hidden elem
    weight_bytes = sum(int(p.size) * p.dtype.itemsize for p in params)
    bytes_accessed = 2 * padded * N_FEATURES * 4 + weight_bytes

    out_t = pl.pallas_call(
        ae_2d_v2_kernel,
        out_shape=jax.ShapeDtypeStruct((N_FEATURES, padded), jnp.float32),
        grid=grid,
        in_specs=[io_spec] + param_specs,
        out_specs=io_spec,
        compiler_params=pltpu.CompilerParams(
            dimension_semantics=("parallel",),       # shards batch over v7x's 2 TCs
            vmem_limit_bytes=48 * 1024 * 1024,       # under v7x's 64 MiB, fine on v5e/v6e
        ),
        cost_estimate=pl.CostEstimate(
            flops=flops,
            transcendentals=transcendentals,
            bytes_accessed=bytes_accessed,
        ),
    )(xt, *params)

    # Slice + transpose back to (batch, 4); fuses into one output copy.
    return out_t[:, :batch].T


def init_params(key):
    """Deterministic init mirroring nn.Linear's U(-1/sqrt(fan_in), 1/sqrt(fan_in)).
    Weights stored (out, in), biases (out, 1)."""
    params = []
    for i in range(len(LAYER_DIMS) - 1):
        fan_in, fan_out = LAYER_DIMS[i], LAYER_DIMS[i + 1]
        key, kw, kb = jax.random.split(key, 3)
        bound = 1.0 / jnp.sqrt(jnp.float32(fan_in))
        w = jax.random.uniform(
            kw, (fan_out, fan_in), jnp.float32, minval=-bound, maxval=bound
        )
        b = jax.random.uniform(
            kb, (fan_out, 1), jnp.float32, minval=-bound, maxval=bound
        )
        params.extend([w, b])
    return tuple(params)


def reference_forward(x, params):
    """Pure-JAX reference for correctness checking (batch-major layout)."""
    ws = params[0::2]
    bs = params[1::2]

    def lin(h, w, b):
        return (
            jnp.dot(h, w.T, precision=jax.lax.Precision.HIGHEST) + b.T
        )

    # encoder
    h = jnp.tanh(lin(x, ws[0], bs[0]))
    h = jnp.tanh(lin(h, ws[1], bs[1]))
    h = jnp.tanh(lin(h, ws[2], bs[2]))
    z = lin(h, ws[3], bs[3])
    # decoder
    h = jnp.tanh(z)
    h = jnp.tanh(lin(h, ws[4], bs[4]))
    h = jnp.tanh(lin(h, ws[5], bs[5]))
    h = jnp.tanh(lin(h, ws[6], bs[6]))
    return lin(h, ws[7], bs[7])


if __name__ == "__main__":
    key = jax.random.PRNGKey(0)
    key, kx = jax.random.split(key)

    # Small single-tile case.
    batch = 8
    x = jax.random.normal(kx, (batch, N_FEATURES), jnp.float32)
    params = init_params(key)

    out = jax.block_until_ready(ae_2d_v2_forward(x, params))
    ref = reference_forward(x, params)
    assert out.shape == (batch, N_FEATURES)
    assert jnp.allclose(out, ref, atol=1e-4, rtol=1e-4), (
        f"max abs err {jnp.max(jnp.abs(out - ref))}"
    )

    # Multi-tile path: remainder padding + several grid steps.
    batch2 = 300
    key, kx2 = jax.random.split(key)
    x2 = jax.random.normal(kx2, (batch2, N_FEATURES), jnp.float32)
    out2 = jax.block_until_ready(ae_2d_v2_forward(x2, params, block_batch=128))
    ref2 = reference_forward(x2, params)
    assert out2.shape == (batch2, N_FEATURES)
    assert jnp.allclose(out2, ref2, atol=1e-4, rtol=1e-4), (
        f"max abs err {jnp.max(jnp.abs(out2 - ref2))}"
    )

    print("KERNEL_OK")
</pallas_src>

<mosaic_0001>
module attributes {stable_mosaic.version = 11 : i64} {
  func.func @ae_2d_v2_kernel(%arg0: i32, %arg1: memref<4x128xf32, #tpu.memory_space<vmem>>, %arg2: memref<50x4xf32, #tpu.memory_space<vmem>>, %arg3: memref<50x1xf32, #tpu.memory_space<vmem>>, %arg4: memref<20x50xf32, #tpu.memory_space<vmem>>, %arg5: memref<20x1xf32, #tpu.memory_space<vmem>>, %arg6: memref<10x20xf32, #tpu.memory_space<vmem>>, %arg7: memref<10x1xf32, #tpu.memory_space<vmem>>, %arg8: memref<2x10xf32, #tpu.memory_space<vmem>>, %arg9: memref<2x1xf32, #tpu.memory_space<vmem>>, %arg10: memref<10x2xf32, #tpu.memory_space<vmem>>, %arg11: memref<10x1xf32, #tpu.memory_space<vmem>>, %arg12: memref<20x10xf32, #tpu.memory_space<vmem>>, %arg13: memref<20x1xf32, #tpu.memory_space<vmem>>, %arg14: memref<50x20xf32, #tpu.memory_space<vmem>>, %arg15: memref<50x1xf32, #tpu.memory_space<vmem>>, %arg16: memref<4x50xf32, #tpu.memory_space<vmem>>, %arg17: memref<4x1xf32, #tpu.memory_space<vmem>>, %arg18: memref<4x128xf32, #tpu.memory_space<vmem>>) attributes {dimension_semantics = [#tpu.dimension_semantics<parallel>], iteration_bounds = array<i64: 1>, scalar_prefetch = 0 : i64, scratch_operands = 0 : i64, tpu.core_type = #tpu.core_type<tc>, window_params = [{transform_indices = @transform_0, window_bounds = array<i64: 4, 128>}, {pipeline_mode = #tpu.pipeline_mode<synchronous>, transform_indices = @transform_1, window_bounds = array<i64: 50, 4>}, {pipeline_mode = #tpu.pipeline_mode<synchronous>, transform_indices = @transform_2, window_bounds = array<i64: 50, 1>}, {pipeline_mode = #tpu.pipeline_mode<synchronous>, transform_indices = @transform_3, window_bounds = array<i64: 20, 50>}, {pipeline_mode = #tpu.pipeline_mode<synchronous>, transform_indices = @transform_4, window_bounds = array<i64: 20, 1>}, {pipeline_mode = #tpu.pipeline_mode<synchronous>, transform_indices = @transform_5, window_bounds = array<i64: 10, 20>}, {pipeline_mode = #tpu.pipeline_mode<synchronous>, transform_indices = @transform_6, window_bounds = array<i64: 10, 1>}, {pipeline_mode = #tpu.pipeline_mode<synchronous>, transform_indices = @transform_7, window_bounds = array<i64: 2, 10>}, {pipeline_mode = #tpu.pipeline_mode<synchronous>, transform_indices = @transform_8, window_bounds = array<i64: 2, 1>}, {pipeline_mode = #tpu.pipeline_mode<synchronous>, transform_indices = @transform_9, window_bounds = array<i64: 10, 2>}, {pipeline_mode = #tpu.pipeline_mode<synchronous>, transform_indices = @transform_10, window_bounds = array<i64: 10, 1>}, {pipeline_mode = #tpu.pipeline_mode<synchronous>, transform_indices = @transform_11, window_bounds = array<i64: 20, 10>}, {pipeline_mode = #tpu.pipeline_mode<synchronous>, transform_indices = @transform_12, window_bounds = array<i64: 20, 1>}, {pipeline_mode = #tpu.pipeline_mode<synchronous>, transform_indices = @transform_13, window_bounds = array<i64: 50, 20>}, {pipeline_mode = #tpu.pipeline_mode<synchronous>, transform_indices = @transform_14, window_bounds = array<i64: 50, 1>}, {pipeline_mode = #tpu.pipeline_mode<synchronous>, transform_indices = @transform_15, window_bounds = array<i64: 4, 50>}, {pipeline_mode = #tpu.pipeline_mode<synchronous>, transform_indices = @transform_16, window_bounds = array<i64: 4, 1>}, {transform_indices = @transform_17, window_bounds = array<i64: 4, 128>}]} {
    %c0 = arith.constant 0 : index
    %c0_0 = arith.constant 0 : index
    %0 = vector.load %arg1[%c0, %c0_0] : memref<4x128xf32, #tpu.memory_space<vmem>>, vector<4x128xf32>
    %c0_1 = arith.constant 0 : index
    %c0_2 = arith.constant 0 : index
    %1 = vector.load %arg2[%c0_1, %c0_2] : memref<50x4xf32, #tpu.memory_space<vmem>>, vector<50x4xf32>
    %cst = arith.constant dense<0.000000e+00> : vector<50x128xf32>
    %2 = tpu.matmul %1, %0, %cst {dimension_numbers = #tpu.dot_dimension_numbers<[1], [0], [0], [1], [0, 0, 1, 1], [], []>, precision = #tpu.contract_precision<fp32>} : vector<50x4xf32>, vector<4x128xf32>, vector<50x128xf32> -> vector<50x128xf32>
    %c0_3 = arith.constant 0 : index
    %c0_4 = arith.constant 0 : index
    %3 = vector.load %arg3[%c0_3, %c0_4] : memref<50x1xf32, #tpu.memory_space<vmem>>, vector<50x1xf32>
    %4 = vector.broadcast %3 : vector<50x1xf32> to vector<50x128xf32>
    %5 = arith.addf %2, %4 : vector<50x128xf32>
    %6 = math.tanh %5 : vector<50x128xf32>
    %c0_5 = arith.constant 0 : index
    %c0_6 = arith.constant 0 : index
    %7 = vector.load %arg4[%c0_5, %c0_6] : memref<20x50xf32, #tpu.memory_space<vmem>>, vector<20x50xf32>
    %cst_7 = arith.constant dense<0.000000e+00> : vector<20x128xf32>
    %8 = tpu.matmul %7, %6, %cst_7 {dimension_numbers = #tpu.dot_dimension_numbers<[1], [0], [0], [1], [0, 0, 1, 1], [], []>, precision = #tpu.contract_precision<fp32>} : vector<20x50xf32>, vector<50x128xf32>, vector<20x128xf32> -> vector<20x128xf32>
    %c0_8 = arith.constant 0 : index
    %c0_9 = arith.constant 0 : index
    %9 = vector.load %arg5[%c0_8, %c0_9] : memref<20x1xf32, #tpu.memory_space<vmem>>, vector<20x1xf32>
    %10 = vector.broadcast %9 : vector<20x1xf32> to vector<20x128xf32>
    %11 = arith.addf %8, %10 : vector<20x128xf32>
    %12 = math.tanh %11 : vector<20x128xf32>
    %c0_10 = arith.constant 0 : index
    %c0_11 = arith.constant 0 : index
    %13 = vector.load %arg6[%c0_10, %c0_11] : memref<10x20xf32, #tpu.memory_space<vmem>>, vector<10x20xf32>
    %cst_12 = arith.constant dense<0.000000e+00> : vector<10x128xf32>
    %14 = tpu.matmul %13, %12, %cst_12 {dimension_numbers = #tpu.dot_dimension_numbers<[1], [0], [0], [1], [0, 0, 1, 1], [], []>, precision = #tpu.contract_precision<fp32>} : vector<10x20xf32>, vector<20x128xf32>, vector<10x128xf32> -> vector<10x128xf32>
    %c0_13 = arith.constant 0 : index
    %c0_14 = arith.constant 0 : index
    %15 = vector.load %arg7[%c0_13, %c0_14] : memref<10x1xf32, #tpu.memory_space<vmem>>, vector<10x1xf32>
    %16 = vector.broadcast %15 : vector<10x1xf32> to vector<10x128xf32>
    %17 = arith.addf %14, %16 : vector<10x128xf32>
    %18 = math.tanh %17 : vector<10x128xf32>
    %c0_15 = arith.constant 0 : index
    %c0_16 = arith.constant 0 : index
    %19 = vector.load %arg8[%c0_15, %c0_16] : memref<2x10xf32, #tpu.memory_space<vmem>>, vector<2x10xf32>
    %cst_17 = arith.constant dense<0.000000e+00> : vector<2x128xf32>
    %20 = tpu.matmul %19, %18, %cst_17 {dimension_numbers = #tpu.dot_dimension_numbers<[1], [0], [0], [1], [0, 0, 1, 1], [], []>, precision = #tpu.contract_precision<fp32>} : vector<2x10xf32>, vector<10x128xf32>, vector<2x128xf32> -> vector<2x128xf32>
    %c0_18 = arith.constant 0 : index
    %c0_19 = arith.constant 0 : index
    %21 = vector.load %arg9[%c0_18, %c0_19] : memref<2x1xf32, #tpu.memory_space<vmem>>, vector<2x1xf32>
    %22 = vector.broadcast %21 : vector<2x1xf32> to vector<2x128xf32>
    %23 = arith.addf %20, %22 : vector<2x128xf32>
    %24 = math.tanh %23 : vector<2x128xf32>
    %c0_20 = arith.constant 0 : index
    %c0_21 = arith.constant 0 : index
    %25 = vector.load %arg10[%c0_20, %c0_21] : memref<10x2xf32, #tpu.memory_space<vmem>>, vector<10x2xf32>
    %cst_22 = arith.constant dense<0.000000e+00> : vector<10x128xf32>
    %26 = tpu.matmul %25, %24, %cst_22 {dimension_numbers = #tpu.dot_dimension_numbers<[1], [0], [0], [1], [0, 0, 1, 1], [], []>, precision = #tpu.contract_precision<fp32>} : vector<10x2xf32>, vector<2x128xf32>, vector<10x128xf32> -> vector<10x128xf32>
    %c0_23 = arith.constant 0 : index
    %c0_24 = arith.constant 0 : index
    %27 = vector.load %arg11[%c0_23, %c0_24] : memref<10x1xf32, #tpu.memory_space<vmem>>, vector<10x1xf32>
    %28 = vector.broadcast %27 : vector<10x1xf32> to vector<10x128xf32>
    %29 = arith.addf %26, %28 : vector<10x128xf32>
    %30 = math.tanh %29 : vector<10x128xf32>
    %c0_25 = arith.constant 0 : index
    %c0_26 = arith.constant 0 : index
    %31 = vector.load %arg12[%c0_25, %c0_26] : memref<20x10xf32, #tpu.memory_space<vmem>>, vector<20x10xf32>
    %cst_27 = arith.constant dense<0.000000e+00> : vector<20x128xf32>
    %32 = tpu.matmul %31, %30, %cst_27 {dimension_numbers = #tpu.dot_dimension_numbers<[1], [0], [0], [1], [0, 0, 1, 1], [], []>, precision = #tpu.contract_precision<fp32>} : vector<20x10xf32>, vector<10x128xf32>, vector<20x128xf32> -> vector<20x128xf32>
    %c0_28 = arith.constant 0 : index
    %c0_29 = arith.constant 0 : index
    %33 = vector.load %arg13[%c0_28, %c0_29] : memref<20x1xf32, #tpu.memory_space<vmem>>, vector<20x1xf32>
    %34 = vector.broadcast %33 : vector<20x1xf32> to vector<20x128xf32>
    %35 = arith.addf %32, %34 : vector<20x128xf32>
    %36 = math.tanh %35 : vector<20x128xf32>
    %c0_30 = arith.constant 0 : index
    %c0_31 = arith.constant 0 : index
    %37 = vector.load %arg14[%c0_30, %c0_31] : memref<50x20xf32, #tpu.memory_space<vmem>>, vector<50x20xf32>
    %cst_32 = arith.constant dense<0.000000e+00> : vector<50x128xf32>
    %38 = tpu.matmul %37, %36, %cst_32 {dimension_numbers = #tpu.dot_dimension_numbers<[1], [0], [0], [1], [0, 0, 1, 1], [], []>, precision = #tpu.contract_precision<fp32>} : vector<50x20xf32>, vector<20x128xf32>, vector<50x128xf32> -> vector<50x128xf32>
    %c0_33 = arith.constant 0 : index
    %c0_34 = arith.constant 0 : index
    %39 = vector.load %arg15[%c0_33, %c0_34] : memref<50x1xf32, #tpu.memory_space<vmem>>, vector<50x1xf32>
    %40 = vector.broadcast %39 : vector<50x1xf32> to vector<50x128xf32>
    %41 = arith.addf %38, %40 : vector<50x128xf32>
    %42 = math.tanh %41 : vector<50x128xf32>
    %c0_35 = arith.constant 0 : index
    %c0_36 = arith.constant 0 : index
    %43 = vector.load %arg16[%c0_35, %c0_36] : memref<4x50xf32, #tpu.memory_space<vmem>>, vector<4x50xf32>
    %cst_37 = arith.constant dense<0.000000e+00> : vector<4x128xf32>
    %44 = tpu.matmul %43, %42, %cst_37 {dimension_numbers = #tpu.dot_dimension_numbers<[1], [0], [0], [1], [0, 0, 1, 1], [], []>, precision = #tpu.contract_precision<fp32>} : vector<4x50xf32>, vector<50x128xf32>, vector<4x128xf32> -> vector<4x128xf32>
    %c0_38 = arith.constant 0 : index
    %c0_39 = arith.constant 0 : index
    %45 = vector.load %arg17[%c0_38, %c0_39] : memref<4x1xf32, #tpu.memory_space<vmem>>, vector<4x1xf32>
    %46 = vector.broadcast %45 : vector<4x1xf32> to vector<4x128xf32>
    %47 = arith.addf %44, %46 : vector<4x128xf32>
    %c0_40 = arith.constant 0 : index
    %c0_41 = arith.constant 0 : index
    %48 = vector.load %arg18[%c0_40, %c0_41] : memref<4x128xf32, #tpu.memory_space<vmem>>, vector<4x128xf32>
    tpu.vector_store %arg18[%c0_40, %c0_41], %47 {strides = array<i32>} : memref<4x128xf32, #tpu.memory_space<vmem>>, vector<4x128xf32>,
    return
  }
  func.func @transform_0(%arg0: i32) -> (i32, i32) {
    %c0_i32 = arith.constant 0 : i32
    %c0_i32_0 = arith.constant 0 : i32
    return %c0_i32, %arg0 : i32, i32
  }
  func.func @transform_1(%arg0: i32) -> (i32, i32) {
    %c0_i32 = arith.constant 0 : i32
    %c0_i32_0 = arith.constant 0 : i32
    %c0_i32_1 = arith.constant 0 : i32
    return %c0_i32, %c0_i32_0 : i32, i32
  }
  func.func @transform_2(%arg0: i32) -> (i32, i32) {
    %c0_i32 = arith.constant 0 : i32
    %c0_i32_0 = arith.constant 0 : i32
    %c0_i32_1 = arith.constant 0 : i32
    return %c0_i32, %c0_i32_0 : i32, i32
  }
  func.func @transform_3(%arg0: i32) -> (i32, i32) {
    %c0_i32 = arith.constant 0 : i32
    %c0_i32_0 = arith.constant 0 : i32
    %c0_i32_1 = arith.constant 0 : i32
    return %c0_i32, %c0_i32_0 : i32, i32
  }
  func.func @transform_4(%arg0: i32) -> (i32, i32) {
    %c0_i32 = arith.constant 0 : i32
    %c0_i32_0 = arith.constant 0 : i32
    %c0_i32_1 = arith.constant 0 : i32
    return %c0_i32, %c0_i32_0 : i32, i32
  }
  func.func @transform_5(%arg0: i32) -> (i32, i32) {
    %c0_i32 = arith.constant 0 : i32
    %c0_i32_0 = arith.constant 0 : i32
    %c0_i32_1 = arith.constant 0 : i32
    return %c0_i32, %c0_i32_0 : i32, i32
  }
  func.func @transform_6(%arg0: i32) -> (i32, i32) {
    %c0_i32 = arith.constant 0 : i32
    %c0_i32_0 = arith.constant 0 : i32
    %c0_i32_1 = arith.constant 0 : i32
    return %c0_i32, %c0_i32_0 : i32, i32
  }
  func.func @transform_7(%arg0: i32) -> (i32, i32) {
    %c0_i32 = arith.constant 0 : i32
    %c0_i32_0 = arith.constant 0 : i32
    %c0_i32_1 = arith.constant 0 : i32
    return %c0_i32, %c0_i32_0 : i32, i32
  }
  func.func @transform_8(%arg0: i32) -> (i32, i32) {
    %c0_i32 = arith.constant 0 : i32
    %c0_i32_0 = arith.constant 0 : i32
    %c0_i32_1 = arith.constant 0 : i32
    return %c0_i32, %c0_i32_0 : i32, i32
  }
  func.func @transform_9(%arg0: i32) -> (i32, i32) {
    %c0_i32 = arith.constant 0 : i32
    %c0_i32_0 = arith.constant 0 : i32
    %c0_i32_1 = arith.constant 0 : i32
    return %c0_i32, %c0_i32_0 : i32, i32
  }
  func.func @transform_10(%arg0: i32) -> (i32, i32) {
    %c0_i32 = arith.constant 0 : i32
    %c0_i32_0 = arith.constant 0 : i32
    %c0_i32_1 = arith.constant 0 : i32
    return %c0_i32, %c0_i32_0 : i32, i32
  }
  func.func @transform_11(%arg0: i32) -> (i32, i32) {
    %c0_i32 = arith.constant 0 : i32
    %c0_i32_0 = arith.constant 0 : i32
    %c0_i32_1 = arith.constant 0 : i32
    return %c0_i32, %c0_i32_0 : i32, i32
  }
  func.func @transform_12(%arg0: i32) -> (i32, i32) {
    %c0_i32 = arith.constant 0 : i32
    %c0_i32_0 = arith.constant 0 : i32
    %c0_i32_1 = arith.constant 0 : i32
    return %c0_i32, %c0_i32_0 : i32, i32
  }
  func.func @transform_13(%arg0: i32) -> (i32, i32) {
    %c0_i32 = arith.constant 0 : i32
    %c0_i32_0 = arith.constant 0 : i32
    %c0_i32_1 = arith.constant 0 : i32
    return %c0_i32, %c0_i32_0 : i32, i32
  }
  func.func @transform_14(%arg0: i32) -> (i32, i32) {
    %c0_i32 = arith.constant 0 : i32
    %c0_i32_0 = arith.constant 0 : i32
    %c0_i32_1 = arith.constant 0 : i32
    return %c0_i32, %c0_i32_0 : i32, i32
  }
  func.func @transform_15(%arg0: i32) -> (i32, i32) {
    %c0_i32 = arith.constant 0 : i32
    %c0_i32_0 = arith.constant 0 : i32
    %c0_i32_1 = arith.constant 0 : i32
    return %c0_i32, %c0_i32_0 : i32, i32
  }
  func.func @transform_16(%arg0: i32) -> (i32, i32) {
    %c0_i32 = arith.constant 0 : i32
    %c0_i32_0 = arith.constant 0 : i32
    %c0_i32_1 = arith.constant 0 : i32
    return %c0_i32, %c0_i32_0 : i32, i32
  }
  func.func @transform_17(%arg0: i32) -> (i32, i32) {
    %c0_i32 = arith.constant 0 : i32
    %c0_i32_0 = arith.constant 0 : i32
    return %c0_i32, %arg0 : i32, i32
  }
}

</mosaic_0001>

<llo_original>
// kernel: ae_2d_v2_forward.1
$region0: #{ae_2d_v2_forward.1}
  #allocation0 [shape = 'u32[]', space=smem, size = 0x4, offset = 0x4, fixed_abs, tag = 'smem constant byte address 0x4 - core index']
  #allocation1 [shape = 'u32[144,128]{1,0:T(1,128)}', space=vmem, size = 0x12000, scoped, tag = 'internal scratch']
  %s0 = inlined_call_operand.vmem [shape: f32[4,128], index: 0, kind: input, shape index: {}]
  %s1 = inlined_call_operand.vmem [shape: f32[50,4], index: 1, kind: input, shape index: {}]
  %s2 = inlined_call_operand.vmem [shape: f32[50,1], index: 2, kind: input, shape index: {}]
  %s3 = inlined_call_operand.vmem [shape: f32[20,50], index: 3, kind: input, shape index: {}]
  %s4 = inlined_call_operand.vmem [shape: f32[20,1], index: 4, kind: input, shape index: {}]
  %s5 = inlined_call_operand.vmem [shape: f32[10,20], index: 5, kind: input, shape index: {}]
  %s6 = inlined_call_operand.vmem [shape: f32[10,1], index: 6, kind: input, shape index: {}]
  %s7 = inlined_call_operand.vmem [shape: f32[2,10], index: 7, kind: input, shape index: {}]
  %s8 = inlined_call_operand.vmem [shape: f32[2,1], index: 8, kind: input, shape index: {}]
  %s9 = inlined_call_operand.vmem [shape: f32[10,2], index: 9, kind: input, shape index: {}]
  %s10 = inlined_call_operand.vmem [shape: f32[10,1], index: 10, kind: input, shape index: {}]
  %s11 = inlined_call_operand.vmem [shape: f32[20,10], index: 11, kind: input, shape index: {}]
  %s12 = inlined_call_operand.vmem [shape: f32[20,1], index: 12, kind: input, shape index: {}]
  %s13 = inlined_call_operand.vmem [shape: f32[50,20], index: 13, kind: input, shape index: {}]
  %s14 = inlined_call_operand.vmem [shape: f32[50,1], index: 14, kind: input, shape index: {}]
  %s15 = inlined_call_operand.vmem [shape: f32[4,50], index: 15, kind: input, shape index: {}]
  %s16 = inlined_call_operand.vmem [shape: f32[4,1], index: 16, kind: input, shape index: {}]
  %s17 = inlined_call_operand.vmem [shape: f32[4,128], index: 17, kind: output, shape index: {}]
  %s18 = sld [smem:[#allocation0]]
  $region78: #{ae_2d_v2_forward.1} parent=0
    _
  %s20 = ssub.s32 1, %s18
  %s21 = scalar_select 0, %s20, %s18
  // Predicated region
  $region2: #{ae_2d_v2_forward.1} parent=0 // pred_check
    _
  $region3: #{ae_2d_v2_forward.1} parent=0 // pred_check_branch
    %23 = sbr.rel (0) target = $region5
  $region4: #{ae_2d_v2_forward.1} parent=0 // pred_region
    _
  $region5: #{ae_2d_v2_forward.1} parent=0 // pred_fallthru
    _
  // Predicated region
  $region6: #{ae_2d_v2_forward.1} parent=0 // pred_check
    _
  $region7: #{ae_2d_v2_forward.1} parent=0 // pred_check_branch
    %25 = sbr.rel (0) target = $region9
  $region8: #{ae_2d_v2_forward.1} parent=0 // pred_region
    _
  $region9: #{ae_2d_v2_forward.1} parent=0 // pred_fallthru
    _
  // Predicated region
  $region10: #{ae_2d_v2_forward.1} parent=0 // pred_check
    _
  $region11: #{ae_2d_v2_forward.1} parent=0 // pred_check_branch
    %27 = sbr.rel (0) target = $region13
  $region12: #{ae_2d_v2_forward.1} parent=0 // pred_region
    _
  $region13: #{ae_2d_v2_forward.1} parent=0 // pred_fallthru
    _
  // Predicated region
  $region14: #{ae_2d_v2_forward.1} parent=0 // pred_check
    _
  $region15: #{ae_2d_v2_forward.1} parent=0 // pred_check_branch
    %29 = sbr.rel (0) target = $region17
  $region16: #{ae_2d_v2_forward.1} parent=0 // pred_region
    _
  $region17: #{ae_2d_v2_forward.1} parent=0 // pred_fallthru
    _
  // Predicated region
  $region18: #{ae_2d_v2_forward.1} parent=0 // pred_check
    _
  $region19: #{ae_2d_v2_forward.1} parent=0 // pred_check_branch
    %31 = sbr.rel (0) target = $region21
  $region20: #{ae_2d_v2_forward.1} parent=0 // pred_region
    _
  $region21: #{ae_2d_v2_forward.1} parent=0 // pred_fallthru
    _
  // Predicated region
  $region22: #{ae_2d_v2_forward.1} parent=0 // pred_check
    _
  $region23: #{ae_2d_v2_forward.1} parent=0 // pred_check_branch
    %33 = sbr.rel (0) target = $region25
  $region24: #{ae_2d_v2_forward.1} parent=0 // pred_region
    _
  $region25: #{ae_2d_v2_forward.1} parent=0 // pred_fallthru
    _
  // Predicated region
  $region26: #{ae_2d_v2_forward.1} parent=0 // pred_check
    _
  $region27: #{ae_2d_v2_forward.1} parent=0 // pred_check_branch
    %35 = sbr.rel (0) target = $region29
  $region28: #{ae_2d_v2_forward.1} parent=0 // pred_region
    _
  $region29: #{ae_2d_v2_forward.1} parent=0 // pred_fallthru
    _
  // Predicated region
  $region30: #{ae_2d_v2_forward.1} parent=0 // pred_check
    _
  $region31: #{ae_2d_v2_forward.1} parent=0 // pred_check_branch
    %37 = sbr.rel (0) target = $region33
  $region32: #{ae_2d_v2_forward.1} parent=0 // pred_region
    _
  $region33: #{ae_2d_v2_forward.1} parent=0 // pred_fallthru
    _
  // Predicated region
  $region34: #{ae_2d_v2_forward.1} parent=0 // pred_check
    _
  $region35: #{ae_2d_v2_forward.1} parent=0 // pred_check_branch
    %39 = sbr.rel (0) target = $region37
  $region36: #{ae_2d_v2_forward.1} parent=0 // pred_region
    _
  $region37: #{ae_2d_v2_forward.1} parent=0 // pred_fallthru
    _
  // Predicated region
  $region38: #{ae_2d_v2_forward.1} parent=0 // pred_check
    _
  $region39: #{ae_2d_v2_forward.1} parent=0 // pred_check_branch
    %41 = sbr.rel (0) target = $region41
  $region40: #{ae_2d_v2_forward.1} parent=0 // pred_region
    _
  $region41: #{ae_2d_v2_forward.1} parent=0 // pred_fallthru
    _
  // Predicated region
  $region42: #{ae_2d_v2_forward.1} parent=0 // pred_check
    _
  $region43: #{ae_2d_v2_forward.1} parent=0 // pred_check_branch
    %43 = sbr.rel (0) target = $region45
  $region44: #{ae_2d_v2_forward.1} parent=0 // pred_region
    _
  $region45: #{ae_2d_v2_forward.1} parent=0 // pred_fallthru
    _
  // Predicated region
  $region46: #{ae_2d_v2_forward.1} parent=0 // pred_check
    _
  $region47: #{ae_2d_v2_forward.1} parent=0 // pred_check_branch
    %45 = sbr.rel (0) target = $region49
  $region48: #{ae_2d_v2_forward.1} parent=0 // pred_region
    _
  $region49: #{ae_2d_v2_forward.1} parent=0 // pred_fallthru
    _
  // Predicated region
  $region50: #{ae_2d_v2_forward.1} parent=0 // pred_check
    _
  $region51: #{ae_2d_v2_forward.1} parent=0 // pred_check_branch
    %47 = sbr.rel (0) target = $region53
  $region52: #{ae_2d_v2_forward.1} parent=0 // pred_region
    _
  $region53: #{ae_2d_v2_forward.1} parent=0 // pred_fallthru
    _
  // Predicated region
  $region54: #{ae_2d_v2_forward.1} parent=0 // pred_check
    _
  $region55: #{ae_2d_v2_forward.1} parent=0 // pred_check_branch
    %49 = sbr.rel (0) target = $region57
  $region56: #{ae_2d_v2_forward.1} parent=0 // pred_region
    _
  $region57: #{ae_2d_v2_forward.1} parent=0 // pred_fallthru
    _
  // Predicated region
  $region58: #{ae_2d_v2_forward.1} parent=0 // pred_check
    _
  $region59: #{ae_2d_v2_forward.1} parent=0 // pred_check_branch
    %51 = sbr.rel (0) target = $region61
  $region60: #{ae_2d_v2_forward.1} parent=0 // pred_region
    _
  $region61: #{ae_2d_v2_forward.1} parent=0 // pred_fallthru
    _
  // Predicated region
  $region62: #{ae_2d_v2_forward.1} parent=0 // pred_check
    _
  $region63: #{ae_2d_v2_forward.1} parent=0 // pred_check_branch
    %53 = sbr.rel (0) target = $region65
  $region64: #{ae_2d_v2_forward.1} parent=0 // pred_region
    _
  $region65: #{ae_2d_v2_forward.1} parent=0 // pred_fallthru
    _
  // Predicated region
  $region66: #{ae_2d_v2_forward.1} parent=0 // pred_check
    _
  $region67: #{ae_2d_v2_forward.1} parent=0 // pred_check_branch
    %55 = sbr.rel (0) target = $region69
  $region68: #{ae_2d_v2_forward.1} parent=0 // pred_region
    _
  $region69: #{ae_2d_v2_forward.1} parent=0 // pred_fallthru
    _
  %v56 = vld [vmem:[%s0] sm:$0xf]
  %v57 = vld [vmem:[%s1] sm:$0xff]
  %v58 = vld [vmem:[%s1 + $0x8] sm:$0xff]
  %v59 = vld [vmem:[%s1 + $0x10] sm:$0xff]
  %v60 = vld [vmem:[%s1 + $0x18] sm:$0xff]
  %v61 = vld [vmem:[%s1 + $0x20] sm:$0xff]
  %v62 = vld [vmem:[%s1 + $0x28] sm:$0xff]
  %v63 = vld [vmem:[%s1 + $0x30] sm:$0x3]
  %v64 = vld [vmem:[%s2] sm:$0xff]
  %v65 = vld [vmem:[%s2 + $0x8] sm:$0xff]
  %v66 = vld [vmem:[%s2 + $0x10] sm:$0xff]
  %v67 = vld [vmem:[%s2 + $0x18] sm:$0xff]
  %v68 = vld [vmem:[%s2 + $0x20] sm:$0xff]
  %v69 = vld [vmem:[%s2 + $0x28] sm:$0xff]
  %v70 = vld [vmem:[%s2 + $0x30] sm:$0x3]
  %72 = vset.pattern.permute.xlu0 0
  %73 = vperm.xlu0 %72, %v64
  %v74 = vpop.permute.xlu0 %73
  %77 = vset.pattern.permute.xlu0 0
  %78 = vperm.xlu0 %77, %v65
  %v79 = vpop.permute.xlu0 %78
  %82 = vset.pattern.permute.xlu0 0
  %83 = vperm.xlu0 %82, %v66
  %v84 = vpop.permute.xlu0 %83
  %87 = vset.pattern.permute.xlu0 0
  %88 = vperm.xlu0 %87, %v67
  %v89 = vpop.permute.xlu0 %88
  %92 = vset.pattern.permute.xlu0 0
  %93 = vperm.xlu0 %92, %v68
  %v94 = vpop.permute.xlu0 %93
  %97 = vset.pattern.permute.xlu0 0
  %98 = vperm.xlu0 %97, %v69
  %v99 = vpop.permute.xlu0 %98
  %102 = vset.pattern.permute.xlu0 0
  %103 = vperm.xlu0 %102, %v70
  %v104 = vpop.permute.xlu0 %103
  %vm106 = vcmask 31744
  %v108 = vsel %vm106, %v57, 0
  %v111 = vsel %vm106, %v58, 0
  %v114 = vsel %vm106, %v59, 0
  %v117 = vsel %vm106, %v60, 0
  %v120 = vsel %vm106, %v61, 0
  %v123 = vsel %vm106, %v62, 0
  %v126 = vsel %vm106, %v63, 0
  %vm128 = vcmask 1043456
  %v130 = vsel %vm128, %v56, 0
  %132 = vmatprep.subr.mxu0 0.0
  %v133 = vand.u32 %v130, 4294901760
  %134 = vmatpush1.msra.mxu0 %v133
  %135 = vmatprep.subr.mxu0 0.0
  %136 = vmatpush1.msra.mxu0 0.0
  %137 = vmatprep.subr.mxu0 0.0
  %138 = vmatpush1.msra.mxu0 0.0
  %139 = vmatprep.subr.mxu0 0.0
  %140 = vmatpush1.msra.mxu0 0.0
  %141 = vmatprep.subr.mxu0 0.0
  %142 = vmatpush1.msra.mxu0 0.0
  %143 = vmatprep.subr.mxu0 0.0
  %144 = vmatpush1.msra.mxu0 0.0
  %145 = vmatprep.subr.mxu0 0.0
  %146 = vmatpush1.msra.mxu0 0.0
  %147 = vmatprep.subr.mxu0 0.0
  %148 = vmatpush1.msra.mxu0 0.0
  %149 = vmatprep.subr.mxu0 0.0
  %150 = vmatpush1.msra.mxu0 0.0
  %151 = vmatprep.subr.mxu0 0.0
  %152 = vmatpush1.msra.mxu0 0.0
  %153 = vmatprep.subr.mxu0 0.0
  %154 = vmatpush1.msra.mxu0 0.0
  %155 = vmatprep.subr.mxu0 0.0
  %156 = vmatpush1.msra.mxu0 0.0
  %157 = vmatprep.subr.mxu0 0.0
  %158 = vmatpush1.msra.mxu0 0.0
  %159 = vmatprep.subr.mxu0 0.0
  %160 = vmatpush1.msra.mxu0 0.0
  %161 = vmatprep.subr.mxu0 0.0
  %162 = vmatpush1.msra.mxu0 0.0
  %163 = vmatprep.subr.mxu0 0.0
  %164 = vmatpush1.msra.mxu0 0.0
  %165 = vmatprep.subr.mxu0 0.0
  %166 = vmatpush1.msra.mxu0 0.0
  %167 = vmatprep.subr.mxu0 0.0
  %168 = vmatpush1.msra.mxu0 0.0
  %169 = vmatprep.subr.mxu0 0.0
  %170 = vmatpush1.msra.mxu0 0.0
  %171 = vmatprep.subr.mxu0 0.0
  %172 = vmatpush1.msra.mxu0 0.0
  %173 = vmatprep.subr.mxu0 0.0
  %174 = vmatpush1.msra.mxu0 0.0
  %175 = vmatprep.subr.mxu0 0.0
  %176 = vmatpush1.msra.mxu0 0.0
  %177 = vmatprep.subr.mxu0 0.0
  %178 = vmatpush1.msra.mxu0 0.0
  %179 = vmatprep.subr.mxu0 0.0
  %180 = vmatpush1.msra.mxu0 0.0
  %181 = vmatprep.subr.mxu0 0.0
  %182 = vmatpush1.msra.mxu0 0.0
  %183 = vmatprep.subr.mxu0 0.0
  %184 = vmatpush1.msra.mxu0 0.0
  %185 = vmatprep.subr.mxu0 0.0
  %186 = vmatpush1.msra.mxu0 0.0
  %187 = vmatprep.subr.mxu0 0.0
  %188 = vmatpush1.msra.mxu0 0.0
  %189 = vmatprep.subr.mxu0 0.0
  %190 = vmatpush1.msra.mxu0 0.0
  %191 = vmatprep.subr.mxu0 0.0
  %192 = vmatpush1.msra.mxu0 0.0
  %193 = vmatprep.subr.mxu0 0.0
  %194 = vmatpush1.msra.mxu0 0.0
  %195 = vmatprep.subr.mxu0 0.0
  %196 = vmatpush1.msra.mxu0 0.0
  %197 = vmatprep.mubr.f32.mxu0 0.0
  %v198 = vand.u32 %v108, 4294901760
  %v199 = vsub.f32 %v108, %v198
  %v200 = vand.u32 %v199, 4294901760
  %v201 = vsub.f32 %v199, %v200
  %v202 = vand.u32 %v201, 4294901760
  %203 = vmatmul.mubr.f32.gmra.mrb[0].mxu0 %v202
  %v204 = vpop.f32.mrb[0].mxu0
  %v205 = vadd.f32 %v74, %v204
  %v206 = vpop.f32.mrb[0].mxu0
  %207 = vmatprep.mubr.f32.mxu0 0.0
  %v208 = vand.u32 %v111, 4294901760
  %v209 = vsub.f32 %v111, %v208
  %v210 = vand.u32 %v209, 4294901760
  %v211 = vsub.f32 %v209, %v210
  %v212 = vand.u32 %v211, 4294901760
  %213 = vmatmul.mubr.f32.gmra.mrb[0].mxu0 %v212
  %v214 = vpop.f32.mrb[0].mxu0
  %v215 = vadd.f32 %v79, %v214
  %v216 = vpop.f32.mrb[0].mxu0
  %217 = vmatprep.mubr.f32.mxu0 0.0
  %v218 = vand.u32 %v114, 4294901760
  %v219 = vsub.f32 %v114, %v218
  %v220 = vand.u32 %v219, 4294901760
  %v221 = vsub.f32 %v219, %v220
  %v222 = vand.u32 %v221, 4294901760
  %223 = vmatmul.mubr.f32.gmra.mrb[0].mxu0 %v222
  %v224 = vpop.f32.mrb[0].mxu0
  %v225 = vadd.f32 %v84, %v224
  %v226 = vpop.f32.mrb[0].mxu0
  %227 = vmatprep.mubr.f32.mxu0 0.0
  %v228 = vand.u32 %v117, 4294901760
  %v229 = vsub.f32 %v117, %v228
  %v230 = vand.u32 %v229, 4294901760
  %v231 = vsub.f32 %v229, %v230
  %v232 = vand.u32 %v231, 4294901760
  %233 = vmatmul.mubr.f32.gmra.mrb[0].mxu0 %v232
  %v234 = vpop.f32.mrb[0].mxu0
  %v235 = vadd.f32 %v89, %v234
  %v236 = vpop.f32.mrb[0].mxu0
  %237 = vmatprep.mubr.f32.mxu0 0.0
  %v238 = vand.u32 %v120, 4294901760
  %v239 = vsub.f32 %v120, %v238
  %v240 = vand.u32 %v239, 4294901760
  %v241 = vsub.f32 %v239, %v240
  %v242 = vand.u32 %v241, 4294901760
  %243 = vmatmul.mubr.f32.gmra.mrb[0].mxu0 %v242
  %v244 = vpop.f32.mrb[0].mxu0
  %v245 = vadd.f32 %v94, %v244
  %v246 = vpop.f32.mrb[0].mxu0
  %247 = vmatprep.mubr.f32.mxu0 0.0
  %v248 = vand.u32 %v123, 4294901760
  %v249 = vsub.f32 %v123, %v248
  %v250 = vand.u32 %v249, 4294901760
  %v251 = vsub.f32 %v249, %v250
  %v252 = vand.u32 %v251, 4294901760
  %253 = vmatmul.mubr.f32.gmra.mrb[0].mxu0 %v252
  %v254 = vpop.f32.mrb[0].mxu0
  %v255 = vadd.f32 %v99, %v254
  %v256 = vpop.f32.mrb[0].mxu0
  %257 = vmatprep.mubr.f32.mxu0 0.0
  %v258 = vand.u32 %v126, 4294901760
  %v259 = vsub.f32 %v126, %v258
  %v260 = vand.u32 %v259, 4294901760
  %v261 = vsub.f32 %v259, %v260
  %v262 = vand.u32 %v261, 4294901760
  %263 = vmatmul.mubr.f32.gmra.mrb[0].mxu0 %v262
  %v264 = vpop.f32.mrb[0].mxu0
  %v265 = vadd.f32 %v104, %v264
  %v266 = vpop.f32.mrb[0].mxu0
  %267 = vdwg.mxu0
  %268 = vmatprep.subr.mxu0 0.0
  %v269 = vand.u32 %v130, 4294901760
  %v270 = vsub.f32 %v130, %v269
  %v271 = vand.u32 %v270, 4294901760
  %v272 = vsub.f32 %v270, %v271
  %v273 = vand.u32 %v272, 4294901760
  %274 = vmatpush1.msra.mxu0 %v273
  %275 = vmatprep.subr.mxu0 0.0
  %276 = vmatpush1.msra.mxu0 0.0
  %277 = vmatprep.subr.mxu0 0.0
  %278 = vmatpush1.msra.mxu0 0.0
  %279 = vmatprep.subr.mxu0 0.0
  %280 = vmatpush1.msra.mxu0 0.0
  %281 = vmatprep.subr.mxu0 0.0
  %282 = vmatpush1.msra.mxu0 0.0
  %283 = vmatprep.subr.mxu0 0.0
  %284 = vmatpush1.msra.mxu0 0.0
  %285 = vmatprep.subr.mxu0 0.0
  %286 = vmatpush1.msra.mxu0 0.0
  %287 = vmatprep.subr.mxu0 0.0
  %288 = vmatpush1.msra.mxu0 0.0
  %289 = vmatprep.subr.mxu0 0.0
  %290 = vmatpush1.msra.mxu0 0.0
  %291 = vmatprep.subr.mxu0 0.0
  %292 = vmatpush1.msra.mxu0 0.0
  %293 = vmatprep.subr.mxu0 0.0
  %294 = vmatpush1.msra.mxu0 0.0
  %295 = vmatprep.subr.mxu0 0.0
  %296 = vmatpush1.msra.mxu0 0.0
  %297 = vmatprep.subr.mxu0 0.0
  %298 = vmatpush1.msra.mxu0 0.0
  %299 = vmatprep.subr.mxu0 0.0
  %300 = vmatpush1.msra.mxu0 0.0
  %301 = vmatprep.subr.mxu0 0.0
  %302 = vmatpush1.msra.mxu0 0.0
  %303 = vmatprep.subr.mxu0 0.0
  %304 = vmatpush1.msra.mxu0 0.0
  %305 = vmatprep.subr.mxu0 0.0
  %306 = vmatpush1.msra.mxu0 0.0
  %307 = vmatprep.subr.mxu0 0.0
  %308 = vmatpush1.msra.mxu0 0.0
  %309 = vmatprep.subr.mxu0 0.0
  %310 = vmatpush1.msra.mxu0 0.0
  %311 = vmatprep.subr.mxu0 0.0
  %312 = vmatpush1.msra.mxu0 0.0
  %313 = vmatprep.subr.mxu0 0.0
  %314 = vmatpush1.msra.mxu0 0.0
  %315 = vmatprep.subr.mxu0 0.0
  %316 = vmatpush1.msra.mxu0 0.0
  %317 = vmatprep.subr.mxu0 0.0
  %318 = vmatpush1.msra.mxu0 0.0
  %319 = vmatprep.subr.mxu0 0.0
  %320 = vmatpush1.msra.mxu0 0.0
  %321 = vmatprep.subr.mxu0 0.0
  %322 = vmatpush1.msra.mxu0 0.0
  %323 = vmatprep.subr.mxu0 0.0
  %324 = vmatpush1.msra.mxu0 0.0
  %325 = vmatprep.subr.mxu0 0.0
  %326 = vmatpush1.msra.mxu0 0.0
  %327 = vmatprep.subr.mxu0 0.0
  %328 = vmatpush1.msra.mxu0 0.0
  %329 = vmatprep.subr.mxu0 0.0
  %330 = vmatpush1.msra.mxu0 0.0
  %331 = vmatprep.subr.mxu0 0.0
  %332 = vmatpush1.msra.mxu0 0.0
  %333 = vmatprep.subr.mxu0 0.0
  %334 = vmatpush1.msra.mxu0 0.0
  %335 = vmatprep.subr.mxu0 0.0
  %336 = vmatpush1.msra.mxu0 0.0
  %337 = vmatprep.mubr.f32.mxu0 0.0
  %v338 = vand.u32 %v108, 4294901760
  %339 = vmatmul.mubr.f32.gmra.mrb[0].mxu0 %v338
  %v340 = vpop.f32.mrb[0].mxu0
  %v341 = vadd.f32 %v205, %v340
  %v342 = vpop.f32.mrb[0].mxu0
  %343 = vmatprep.mubr.f32.mxu0 0.0
  %v344 = vand.u32 %v111, 4294901760
  %345 = vmatmul.mubr.f32.gmra.mrb[0].mxu0 %v344
  %v346 = vpop.f32.mrb[0].mxu0
  %v347 = vadd.f32 %v215, %v346
  %v348 = vpop.f32.mrb[0].mxu0
  %349 = vmatprep.mubr.f32.mxu0 0.0
  %v350 = vand.u32 %v114, 4294901760
  %351 = vmatmul.mubr.f32.gmra.mrb[0].mxu0 %v350
  %v352 = vpop.f32.mrb[0].mxu0
  %v353 = vadd.f32 %v225, %v352
  %v354 = vpop.f32.mrb[0].mxu0
  %355 = vmatprep.mubr.f32.mxu0 0.0
  %v356 = vand.u32 %v117, 4294901760
  %357 = vmatmul.mubr.f32.gmra.mrb[0].mxu0 %v356
  %v358 = vpop.f32.mrb[0].mxu0
  %v359 = vadd.f32 %v235, %v358
  %v360 = vpop.f32.mrb[0].mxu0
  %361 = vmatprep.mubr.f32.mxu0 0.0
  %v362 = vand.u32 %v120, 4294901760
  %363 = vmatmul.mubr.f32.gmra.mrb[0].mxu0 %v362
  %v364 = vpop.f32.mrb[0].mxu0
  %v365 = vadd.f32 %v245, %v364
  %v366 = vpop.f32.mrb[0].mxu0
  %367 = vmatprep.mubr.f32.mxu0 0.0
  %v368 = vand.u32 %v123, 4294901760
  %369 = vmatmul.mubr.f32.gmra.mrb[0].mxu0 %v368
  %v370 = vpop.f32.mrb[0].mxu0
  %v371 = vadd.f32 %v255, %v370
  %v372 = vpop.f32.mrb[0].mxu0
  %373 = vmatprep.mubr.f32.mxu0 0.0
  %v374 = vand.u32 %v126, 4294901760
  %375 = vmatmul.mubr.f32.gmra.mrb[0].mxu0 %v374
  %v376 = vpop.f32.mrb[0].mxu0
  %v377 = vadd.f32 %v265, %v376
  %v378 = vpop.f32.mrb[0].mxu0
  %379 = vdwg.mxu0
  %380 = vmatprep.subr.mxu0 0.0
  %v381 = vand.u32 %v130, 4294901760
  %v382 = vsub.f32 %v130, %v381
  %383 = vmatpush1.msra.mxu0 %v382
  %384 = vmatprep.subr.mxu0 0.0
  %385 = vmatpush1.msra.mxu0 0.0
  %386 = vmatprep.subr.mxu0 0.0
  %387 = vmatpush1.msra.mxu0 0.0
  %388 = vmatprep.subr.mxu0 0.0
  %389 = vmatpush1.msra.mxu0 0.0
  %390 = vmatprep.subr.mxu0 0.0
  %391 = vmatpush1.msra.mxu0 0.0
  %392 = vmatprep.subr.mxu0 0.0
  %393 = vmatpush1.msra.mxu0 0.0
  %394 = vmatprep.subr.mxu0 0.0
  %395 = vmatpush1.msra.mxu0 0.0
  %396 = vmatprep.subr.mxu0 0.0
  %397 = vmatpush1.msra.mxu0 0.0
  %398 = vmatprep.subr.mxu0 0.0
  %399 = vmatpush1.msra.mxu0 0.0
  %400 = vmatprep.subr.mxu0 0.0
  %401 = vmatpush1.msra.mxu0 0.0
  %402 = vmatprep.subr.mxu0 0.0
  %403 = vmatpush1.msra.mxu0 0.0
  %404 = vmatprep.subr.mxu0 0.0
  %405 = vmatpush1.msra.mxu0 0.0
  %406 = vmatprep.subr.mxu0 0.0
  %407 = vmatpush1.msra.mxu0 0.0
  %408 = vmatprep.subr.mxu0 0.0
  %409 = vmatpush1.msra.mxu0 0.0
  %410 = vmatprep.subr.mxu0 0.0
  %411 = vmatpush1.msra.mxu0 0.0
  %412 = vmatprep.subr.mxu0 0.0
  %413 = vmatpush1.msra.mxu0 0.0
  %414 = vmatprep.subr.mxu0 0.0
  %415 = vmatpush1.msra.mxu0 0.0
  %416 = vmatprep.subr.mxu0 0.0
  %417 = vmatpush1.msra.mxu0 0.0
  %418 = vmatprep.subr.mxu0 0.0
  %419 = vmatpush1.msra.mxu0 0.0
  %420 = vmatprep.subr.mxu0 0.0
  %421 = vmatpush1.msra.mxu0 0.0
  %422 = vmatprep.subr.mxu0 0.0
  %423 = vmatpush1.msra.mxu0 0.0
  %424 = vmatprep.subr.mxu0 0.0
  %425 = vmatpush1.msra.mxu0 0.0
  %426 = vmatprep.subr.mxu0 0.0
  %427 = vmatpush1.msra.mxu0 0.0
  %428 = vmatprep.subr.mxu0 0.0
  %429 = vmatpush1.msra.mxu0 0.0
  %430 = vmatprep.subr.mxu0 0.0
  %431 = vmatpush1.msra.mxu0 0.0
  %432 = vmatprep.subr.mxu0 0.0
  %433 = vmatpush1.msra.mxu0 0.0
  %434 = vmatprep.subr.mxu0 0.0
  %435 = vmatpush1.msra.mxu0 0.0
  %436 = vmatprep.subr.mxu0 0.0
  %437 = vmatpush1.msra.mxu0 0.0
  %438 = vmatprep.subr.mxu0 0.0
  %439 = vmatpush1.msra.mxu0 0.0
  %440 = vmatprep.subr.mxu0 0.0
  %441 = vmatpush1.msra.mxu0 0.0
  %442 = vmatprep.subr.mxu0 0.0
  %443 = vmatpush1.msra.mxu0 0.0
  %444 = vmatprep.subr.mxu0 0.0
  %445 = vmatpush1.msra.mxu0 0.0
  %446 = vmatprep.mubr.f32.mxu0 0.0
  %v447 = vand.u32 %v108, 4294901760
  %v448 = vsub.f32 %v108, %v447
  %449 = vmatmul.mubr.f32.gmra.mrb[0].mxu0 %v448
  %v450 = vpop.f32.mrb[0].mxu0
  %v451 = vadd.f32 %v341, %v450
  %v452 = vpop.f32.mrb[0].mxu0
  %453 = vmatprep.mubr.f32.mxu0 0.0
  %v454 = vand.u32 %v111, 4294901760
  %v455 = vsub.f32 %v111, %v454
  %456 = vmatmul.mubr.f32.gmra.mrb[0].mxu0 %v455
  %v457 = vpop.f32.mrb[0].mxu0
  %v458 = vadd.f32 %v347, %v457
  %v459 = vpop.f32.mrb[0].mxu0
  %460 = vmatprep.mubr.f32.mxu0 0.0
  %v461 = vand.u32 %v114, 4294901760
  %v462 = vsub.f32 %v114, %v461
  %463 = vmatmul.mubr.f32.gmra.mrb[0].mxu0 %v462
  %v464 = vpop.f32.mrb[0].mxu0
  %v465 = vadd.f32 %v353, %v464
  %v466 = vpop.f32.mrb[0].mxu0
  %467 = vmatprep.mubr.f32.mxu0 0.0
  %v468 = vand.u32 %v117, 4294901760
  %v469 = vsub.f32 %v117, %v468
  %470 = vmatmul.mubr.f32.gmra.mrb[0].mxu0 %v469
  %v471 = vpop.f32.mrb[0].mxu0
  %v472 = vadd.f32 %v359, %v471
  %v473 = vpop.f32.mrb[0].mxu0
  %474 = vmatprep.mubr.f32.mxu0 0.0
  %v475 = vand.u32 %v120, 4294901760
  %v476 = vsub.f32 %v120, %v475
  %477 = vmatmul.mubr.f32.gmra.mrb[0].mxu0 %v476
  %v478 = vpop.f32.mrb[0].mxu0
  %v479 = vadd.f32 %v365, %v478
  %v480 = vpop.f32.mrb[0].mxu0
  %481 = vmatprep.mubr.f32.mxu0 0.0
  %v482 = vand.u32 %v123, 4294901760
  %v483 = vsub.f32 %v123, %v482
  %484 = vmatmul.mubr.f32.gmra.mrb[0].mxu0 %v483
  %v485 = vpop.f32.mrb[0].mxu0
  %v486 = vadd.f32 %v371, %v485
  %v487 = vpop.f32.mrb[0].mxu0
  %488 = vmatprep.mubr.f32.mxu0 0.0
  %v489 = vand.u32 %v126, 4294901760
  %v490 = vsub.f32 %v126, %v489
  %491 = vmatmul.mubr.f32.gmra.mrb[0].mxu0 %v490
  %v492 = vpop.f32.mrb[0].mxu0
  %v493 = vadd.f32 %v377, %v492
  %v494 = vpop.f32.mrb[0].mxu0
  %495 = vdwg.mxu0
  %496 = vmatprep.subr.mxu0 0.0
  %v497 = vand.u32 %v130, 4294901760
  %498 = vmatpush1.msra.mxu0 %v497
  %499 = vmatprep.subr.mxu0 0.0
  %500 = vmatpush1.msra.mxu0 0.0
  %501 = vmatprep.subr.mxu0 0.0
  %502 = vmatpush1.msra.mxu0 0.0
  %503 = vmatprep.subr.mxu0 0.0
  %504 = vmatpush1.msra.mxu0 0.0
  %505 = vmatprep.subr.mxu0 0.0
  %506 = vmatpush1.msra.mxu0 0.0
  %507 = vmatprep.subr.mxu0 0.0
  %508 = vmatpush1.msra.mxu0 0.0
  %509 = vmatprep.subr.mxu0 0.0
  %510 = vmatpush1.msra.mxu0 0.0
  %511 = vmatprep.subr.mxu0 0.0
  %512 = vmatpush1.msra.mxu0 0.0
  %513 = vmatprep.subr.mxu0 0.0
  %514 = vmatpush1.msra.mxu0 0.0
  %515 = vmatprep.subr.mxu0 0.0
  %516 = vmatpush1.msra.mxu0 0.0
  %517 = vmatprep.subr.mxu0 0.0
  %518 = vmatpush1.msra.mxu0 0.0
  %519 = vmatprep.subr.mxu0 0.0
  %520 = vmatpush1.msra.mxu0 0.0
  %521 = vmatprep.subr.mxu0 0.0
  %522 = vmatpush1.msra.mxu0 0.0
  %523 = vmatprep.subr.mxu0 0.0
  %524 = vmatpush1.msra.mxu0 0.0
  %525 = vmatprep.subr.mxu0 0.0
  %526 = vmatpush1.msra.mxu0 0.0
  %527 = vmatprep.subr.mxu0 0.0
  %528 = vmatpush1.msra.mxu0 0.0
  %529 = vmatprep.subr.mxu0 0.0
  %530 = vmatpush1.msra.mxu0 0.0
  %531 = vmatprep.subr.mxu0 0.0
  %532 = vmatpush1.msra.mxu0 0.0
  %533 = vmatprep.subr.mxu0 0.0
  %534 = vmatpush1.msra.mxu0 0.0
  %535 = vmatprep.subr.mxu0 0.0
  %536 = vmatpush1.msra.mxu0 0.0
  %537 = vmatprep.subr.mxu0 0.0
  %538 = vmatpush1.msra.mxu0 0.0
  %539 = vmatprep.subr.mxu0 0.0
  %540 = vmatpush1.msra.mxu0 0.0
  %541 = vmatprep.subr.mxu0 0.0
  %542 = vmatpush1.msra.mxu0 0.0
  %543 = vmatprep.subr.mxu0 0.0
  %544 = vmatpush1.msra.mxu0 0.0
  %545 = vmatprep.subr.mxu0 0.0
  %546 = vmatpush1.msra.mxu0 0.0
  %547 = vmatprep.subr.mxu0 0.0
  %548 = vmatpush1.msra.mxu0 0.0
  %549 = vmatprep.subr.mxu0 0.0
  %550 = vmatpush1.msra.mxu0 0.0
  %551 = vmatprep.subr.mxu0 0.0
  %552 = vmatpush1.msra.mxu0 0.0
  %553 = vmatprep.subr.mxu0 0.0
  %554 = vmatpush1.msra.mxu0 0.0
  %555 = vmatprep.subr.mxu0 0.0
  %556 = vmatpush1.msra.mxu0 0.0
  %557 = vmatprep.subr.mxu0 0.0
  %558 = vmatpush1.msra.mxu0 0.0
  %559 = vmatprep.subr.mxu0 0.0
  %560 = vmatpush1.msra.mxu0 0.0
  %561 = vmatprep.mubr.f32.mxu0 0.0
  %v562 = vand.u32 %v108, 4294901760
  %v563 = vsub.f32 %v108, %v562
  %v564 = vand.u32 %v563, 4294901760
  %565 = vmatmul.mubr.f32.gmra.mrb[0].mxu0 %v564
  %v566 = vpop.f32.mrb[0].mxu0
  %v567 = vadd.f32 %v451, %v566
  %v568 = vpop.f32.mrb[0].mxu0
  %569 = vmatprep.mubr.f32.mxu0 0.0
  %v570 = vand.u32 %v111, 4294901760
  %v571 = vsub.f32 %v111, %v570
  %v572 = vand.u32 %v571, 4294901760
  %573 = vmatmul.mubr.f32.gmra.mrb[0].mxu0 %v572
  %v574 = vpop.f32.mrb[0].mxu0
  %v575 = vadd.f32 %v458, %v574
  %v576 = vpop.f32.mrb[0].mxu0
  %577 = vmatprep.mubr.f32.mxu0 0.0
  %v578 = vand.u32 %v114, 4294901760
  %v579 = vsub.f32 %v114, %v578
  %v580 = vand.u32 %v579, 4294901760
  %581 = vmatmul.mubr.f32.gmra.mrb[0].mxu0 %v580
  %v582 = vpop.f32.mrb[0].mxu0
  %v583 = vadd.f32 %v465, %v582
  %v584 = vpop.f32.mrb[0].mxu0
  %585 = vmatprep.mubr.f32.mxu0 0.0
  %v586 = vand.u32 %v117, 4294901760
  %v587 = vsub.f32 %v117, %v586
  %v588 = vand.u32 %v587, 4294901760
  %589 = vmatmul.mubr.f32.gmra.mrb[0].mxu0 %v588
  %v590 = vpop.f32.mrb[0].mxu0
  %v591 = vadd.f32 %v472, %v590
  %v592 = vpop.f32.mrb[0].mxu0
  %593 = vmatprep.mubr.f32.mxu0 0.0
  %v594 = vand.u32 %v120, 4294901760
  %v595 = vsub.f32 %v120, %v594
  %v596 = vand.u32 %v595, 4294901760
  %597 = vmatmul.mubr.f32.gmra.mrb[0].mxu0 %v596
  %v598 = vpop.f32.mrb[0].mxu0
  %v599 = vadd.f32 %v479, %v598
  %v600 = vpop.f32.mrb[0].mxu0
  %601 = vmatprep.mubr.f32.mxu0 0.0
  %v602 = vand.u32 %v123, 4294901760
  %v603 = vsub.f32 %v123, %v602
  %v604 = vand.u32 %v603, 4294901760
  %605 = vmatmul.mubr.f32.gmra.mrb[0].mxu0 %v604
  %v606 = vpop.f32.mrb[0].mxu0
  %v607 = vadd.f32 %v486, %v606
  %v608 = vpop.f32.mrb[0].mxu0
  %609 = vmatprep.mubr.f32.mxu0 0.0
  %v610 = vand.u32 %v126, 4294901760
  %v611 = vsub.f32 %v126, %v610
  %v612 = vand.u32 %v611, 4294901760
  %613 = vmatmul.mubr.f32.gmra.mrb[0].mxu0 %v612
  %v614 = vpop.f32.mrb[0].mxu0
  %v615 = vadd.f32 %v493, %v614
  %v616 = vpop.f32.mrb[0].mxu0
  %617 = vdwg.mxu0
  %618 = vmatprep.subr.mxu0 0.0
  %v619 = vand.u32 %v130, 4294901760
  %v620 = vsub.f32 %v130, %v619
  %v621 = vand.u32 %v620, 4294901760
  %622 = vmatpush1.msra.mxu0 %v621
  %623 = vmatprep.subr.mxu0 0.0
  %624 = vmatpush1.msra.mxu0 0.0
  %625 = vmatprep.subr.mxu0 0.0
  %626 = vmatpush1.msra.mxu0 0.0
  %627 = vmatprep.subr.mxu0 0.0
  %628 = vmatpush1.msra.mxu0 0.0
  %629 = vmatprep.subr.mxu0 0.0
  %630 = vmatpush1.msra.mxu0 0.0
  %631 = vmatprep.subr.mxu0 0.0
  %632 = vmatpush1.msra.mxu0 0.0
  %633 = vmatprep.subr.mxu0 0.0
  %634 = vmatpush1.msra.mxu0 0.0
  %635 = vmatprep.subr.mxu0 0.0
  %636 = vmatpush1.msra.mxu0 0.0
  %637 = vmatprep.subr.mxu0 0.0
  %638 = vmatpush1.msra.mxu0 0.0
  %639 = vmatprep.subr.mxu0 0.0
  %640 = vmatpush1.msra.mxu0 0.0
  %641 = vmatprep.subr.mxu0 0.0
  %642 = vmatpush1.msra.mxu0 0.0
  %643 = vmatprep.subr.mxu0 0.0
  %644 = vmatpush1.msra.mxu0 0.0
  %645 = vmatprep.subr.mxu0 0.0
  %646 = vmatpush1.msra.mxu0 0.0
  %647 = vmatprep.subr.mxu0 0.0
  %648 = vmatpush1.msra.mxu0 0.0
  %649 = vmatprep.subr.mxu0 0.0
  %650 = vmatpush1.msra.mxu0 0.0
  %651 = vmatprep.subr.mxu0 0.0
  %652 = vmatpush1.msra.mxu0 0.0
  %653 = vmatprep.subr.mxu0 0.0
  %654 = vmatpush1.msra.mxu0 0.0
  %655 = vmatprep.subr.mxu0 0.0
  %656 = vmatpush1.msra.mxu0 0.0
  %657 = vmatprep.subr.mxu0 0.0
  %658 = vmatpush1.msra.mxu0 0.0
  %659 = vmatprep.subr.mxu0 0.0
  %660 = vmatpush1.msra.mxu0 0.0
  %661 = vmatprep.subr.mxu0 0.0
  %662 = vmatpush1.msra.mxu0 0.0
  %663 = vmatprep.subr.mxu0 0.0
  %664 = vmatpush1.msra.mxu0 0.0
  %665 = vmatprep.subr.mxu0 0.0
  %666 = vmatpush1.msra.mxu0 0.0
  %667 = vmatprep.subr.mxu0 0.0
  %668 = vmatpush1.msra.mxu0 0.0
  %669 = vmatprep.subr.mxu0 0.0
  %670 = vmatpush1.msra.mxu0 0.0
  %671 = vmatprep.subr.mxu0 0.0
  %672 = vmatpush1.msra.mxu0 0.0
  %673 = vmatprep.subr.mxu0 0.0
  %674 = vmatpush1.msra.mxu0 0.0
  %675 = vmatprep.subr.mxu0 0.0
  %676 = vmatpush1.msra.mxu0 0.0
  %677 = vmatprep.subr.mxu0 0.0
  %678 = vmatpush1.msra.mxu0 0.0
  %679 = vmatprep.subr.mxu0 0.0
  %680 = vmatpush1.msra.mxu0 0.0
  %681 = vmatprep.subr.mxu0 0.0
  %682 = vmatpush1.msra.mxu0 0.0
  %683 = vmatprep.subr.mxu0 0.0
  %684 = vmatpush1.msra.mxu0 0.0
  %685 = vmatprep.mubr.f32.mxu0 0.0
  %v686 = vand.u32 %v108, 4294901760
  %687 = vmatmul.mubr.f32.gmra.mrb[0].mxu0 %v686
  %v688 = vpop.f32.mrb[0].mxu0
  %v689 = vadd.f32 %v567, %v688
  %v690 = vpop.f32.mrb[0].mxu0
  %691 = vmatprep.mubr.f32.mxu0 0.0
  %v692 = vand.u32 %v111, 4294901760
  %693 = vmatmul.mubr.f32.gmra.mrb[0].mxu0 %v692
  %v694 = vpop.f32.mrb[0].mxu0
  %v695 = vadd.f32 %v575, %v694
  %v696 = vpop.f32.mrb[0].mxu0
  %697 = vmatprep.mubr.f32.mxu0 0.0
  %v698 = vand.u32 %v114, 4294901760
  %699 = vmatmul.mubr.f32.gmra.mrb[0].mxu0 %v698
  %v700 = vpop.f32.mrb[0].mxu0
  %v701 = vadd.f32 %v583, %v700
  %v702 = vpop.f32.mrb[0].mxu0
  %703 = vmatprep.mubr.f32.mxu0 0.0
  %v704 = vand.u32 %v117, 4294901760
  %705 = vmatmul.mubr.f32.gmra.mrb[0].mxu0 %v704
  %v706 = vpop.f32.mrb[0].mxu0
  %v707 = vadd.f32 %v591, %v706
  %v708 = vpop.f32.mrb[0].mxu0
  %709 = vmatprep.mubr.f32.mxu0 0.0
  %v710 = vand.u32 %v120, 4294901760
  %711 = vmatmul.mubr.f32.gmra.mrb[0].mxu0 %v710
  %v712 = vpop.f32.mrb[0].mxu0
  %v713 = vadd.f32 %v599, %v712
  %v714 = vpop.f32.mrb[0].mxu0
  %715 = vmatprep.mubr.f32.mxu0 0.0
  %v716 = vand.u32 %v123, 4294901760
  %717 = vmatmul.mubr.f32.gmra.mrb[0].mxu0 %v716
  %v718 = vpop.f32.mrb[0].mxu0
  %v719 = vadd.f32 %v607, %v718
  %v720 = vpop.f32.mrb[0].mxu0
  %721 = vmatprep.mubr.f32.mxu0 0.0
  %v722 = vand.u32 %v126, 4294901760
  %723 = vmatmul.mubr.f32.gmra.mrb[0].mxu0 %v722
  %v724 = vpop.f32.mrb[0].mxu0
  %v725 = vadd.f32 %v615, %v724
  %v726 = vpop.f32.mrb[0].mxu0
  %727 = vdwg.mxu0
  %728 = vmatprep.subr.mxu0 0.0
  %v729 = vand.u32 %v130, 4294901760
  %730 = vmatpush1.msra.mxu0 %v729
  %731 = vmatprep.subr.mxu0 0.0
  %732 = vmatpush1.msra.mxu0 0.0
  %733 = vmatprep.subr.mxu0 0.0
  %734 = vmatpush1.msra.mxu0 0.0
  %735 = vmatprep.subr.mxu0 0.0
  %736 = vmatpush1.msra.mxu0 0.0
  %737 = vmatprep.subr.mxu0 0.0
  %738 = vmatpush1.msra.mxu0 0.0
  %739 = vmatprep.subr.mxu0 0.0
  %740 = vmatpush1.msra.mxu0 0.0
  %741 = vmatprep.subr.mxu0 0.0
  %742 = vmatpush1.msra.mxu0 0.0
  %743 = vmatprep.subr.mxu0 0.0
  %744 = vmatpush1.msra.mxu0 0.0
  %745 = vmatprep.subr.mxu0 0.0
  %746 = vmatpush1.msra.mxu0 0.0
  %747 = vmatprep.subr.mxu0 0.0
  %748 = vmatpush1.msra.mxu0 0.0
  %749 = vmatprep.subr.mxu0 0.0
  %750 = vmatpush1.msra.mxu0 0.0
  %751 = vmatprep.subr.mxu0 0.0
  %752 = vmatpush1.msra.mxu0 0.0
  %753 = vmatprep.subr.mxu0 0.0
  %754 = vmatpush1.msra.mxu0 0.0
  %755 = vmatprep.subr.mxu0 0.0
  %756 = vmatpush1.msra.mxu0 0.0
  %757 = vmatprep.subr.mxu0 0.0
  %758 = vmatpush1.msra.mxu0 0.0
  %759 = vmatprep.subr.mxu0 0.0
  %760 = vmatpush1.msra.mxu0 0.0
  %761 = vmatprep.subr.mxu0 0.0
  %762 = vmatpush1.msra.mxu0 0.0
  %763 = vmatprep.subr.mxu0 0.0
  %764 = vmatpush1.msra.mxu0 0.0
  %765 = vmatprep.subr.mxu0 0.0
  %766 = vmatpush1.msra.mxu0 0.0
  %767 = vmatprep.subr.mxu0 0.0
  %768 = vmatpush1.msra.mxu0 0.0
  %769 = vmatprep.subr.mxu0 0.0
  %770 = vmatpush1.msra.mxu0 0.0
  %771 = vmatprep.subr.mxu0 0.0
  %772 = vmatpush1.msra.mxu0 0.0
  %773 = vmatprep.subr.mxu0 0.0
  %774 = vmatpush1.msra.mxu0 0.0
  %775 = vmatprep.subr.mxu0 0.0
  %776 = vmatpush1.msra.mxu0 0.0
  %777 = vmatprep.subr.mxu0 0.0
  %778 = vmatpush1.msra.mxu0 0.0
  %779 = vmatprep.subr.mxu0 0.0
  %780 = vmatpush1.msra.mxu0 0.0
  %781 = vmatprep.subr.mxu0 0.0
  %782 = vmatpush1.msra.mxu0 0.0
  %783 = vmatprep.subr.mxu0 0.0
  %784 = vmatpush1.msra.mxu0 0.0
  %785 = vmatprep.subr.mxu0 0.0
  %786 = vmatpush1.msra.mxu0 0.0
  %787 = vmatprep.subr.mxu0 0.0
  %788 = vmatpush1.msra.mxu0 0.0
  %789 = vmatprep.subr.mxu0 0.0
  %790 = vmatpush1.msra.mxu0 0.0
  %791 = vmatprep.subr.mxu0 0.0
  %792 = vmatpush1.msra.mxu0 0.0
  %793 = vmatprep.mubr.f32.mxu0 0.0
  %v794 = vand.u32 %v108, 4294901760
  %795 = vmatmul.mubr.f32.gmra.mrb[0].mxu0 %v794
  %v796 = vpop.f32.mrb[0].mxu0
  %v797 = vadd.f32 %v689, %v796
  %v798 = vpop.f32.mrb[0].mxu0
  %799 = vmatprep.mubr.f32.mxu0 0.0
  %v800 = vand.u32 %v111, 4294901760
  %801 = vmatmul.mubr.f32.gmra.mrb[0].mxu0 %v800
  %v802 = vpop.f32.mrb[0].mxu0
  %v803 = vadd.f32 %v695, %v802
  %v804 = vpop.f32.mrb[0].mxu0
  %805 = vmatprep.mubr.f32.mxu0 0.0
  %v806 = vand.u32 %v114, 4294901760
  %807 = vmatmul.mubr.f32.gmra.mrb[0].mxu0 %v806
  %v808 = vpop.f32.mrb[0].mxu0
  %v809 = vadd.f32 %v701, %v808
  %v810 = vpop.f32.mrb[0].mxu0
  %811 = vmatprep.mubr.f32.mxu0 0.0
  %v812 = vand.u32 %v117, 4294901760
  %813 = vmatmul.mubr.f32.gmra.mrb[0].mxu0 %v812
  %v814 = vpop.f32.mrb[0].mxu0
  %v815 = vadd.f32 %v707, %v814
  %v816 = vpop.f32.mrb[0].mxu0
  %817 = vmatprep.mubr.f32.mxu0 0.0
  %v818 = vand.u32 %v120, 4294901760
  %819 = vmatmul.mubr.f32.gmra.mrb[0].mxu0 %v818
  %v820 = vpop.f32.mrb[0].mxu0
  %v821 = vadd.f32 %v713, %v820
  %v822 = vpop.f32.mrb[0].mxu0
  %823 = vmatprep.mubr.f32.mxu0 0.0
  %v824 = vand.u32 %v123, 4294901760
  %825 = vmatmul.mubr.f32.gmra.mrb[0].mxu0 %v824
  %v826 = vpop.f32.mrb[0].mxu0
  %v827 = vadd.f32 %v719, %v826
  %v828 = vpop.f32.mrb[0].mxu0
  %829 = vmatprep.mubr.f32.mxu0 0.0
  %v830 = vand.u32 %v126, 4294901760
  %831 = vmatmul.mubr.f32.gmra.mrb[0].mxu0 %v830
  %v832 = vpop.f32.mrb[0].mxu0
  %v833 = vadd.f32 %v725, %v832
  %v834 = vpop.f32.mrb[0].mxu0
  %835 = vdwg.mxu0
  %v836 = vtanh.pop %v797
  %v837 = vtanh.pop %v803
  %v838 = vtanh.pop %v809
  %v839 = vtanh.pop %v815
  %v840 = vtanh.pop %v821
  %v841 = vtanh.pop %v827
  %v842 = vtanh.pop %v833
  %v843 = vld [vmem:[%s3] sm:$0xff]
  %v844 = vld [vmem:[%s3 + $0x8] sm:$0xff]
  %v845 = vld [vmem:[%s3 + $0x10] sm:$0xf]
  %v846 = vld [vmem:[%s4] sm:$0xff]
  %v847 = vld [vmem:[%s4 + $0x8] sm:$0xff]
  %v848 = vld [vmem:[%s4 + $0x10] sm:$0xf]
  %850 = vset.pattern.permute.xlu0 0
  %851 = vperm.xlu0 %850, %v846
  %v852 = vpop.permute.xlu0 %851
  %855 = vset.pattern.permute.xlu0 0
  %856 = vperm.xlu0 %855, %v847
  %v857 = vpop.permute.xlu0 %856
  %860 = vset.pattern.permute.xlu0 0
  %861 = vperm.xlu0 %860, %v848
  %v862 = vpop.permute.xlu0 %861
  %vm864 = vcmask 408576
  %v866 = vsel %vm864, %v843, 0
  %v869 = vsel %vm864, %v844, 0
  %v872 = vsel %vm864, %v845, 0
  %vm874 = vcmask 1041408
  %v876 = vsel %vm874, %v842, 0
  %878 = vmatprep.subr.mxu0 0.0
  %v879 = vand.u32 %v836, 4294901760
  %880 = vmatpush1.msra.mxu0 %v879
  %881 = vmatprep.subr.mxu0 0.0
  %v882 = vand.u32 %v837, 4294901760
  %883 = vmatpush1.msra.mxu0 %v882
  %884 = vmatprep.subr.mxu0 0.0
  %v885 = vand.u32 %v838, 4294901760
  %886 = vmatpush1.msra.mxu0 %v885
  %887 = vmatprep.subr.mxu0 0.0
  %v888 = vand.u32 %v839, 4294901760
  %889 = vmatpush1.msra.mxu0 %v888
  %890 = vmatprep.subr.mxu0 0.0
  %v891 = vand.u32 %v840, 4294901760
  %892 = vmatpush1.msra.mxu0 %v891
  %893 = vmatprep.subr.mxu0 0.0
  %v894 = vand.u32 %v841, 4294901760
  %895 = vmatpush1.msra.mxu0 %v894
  %896 = vmatprep.subr.mxu0 0.0
  %v897 = vand.u32 %v876, 4294901760
  %898 = vmatpush1.msra.mxu0 %v897
  %899 = vmatprep.subr.mxu0 0.0
  %900 = vmatpush1.msra.mxu0 0.0
  %901 = vmatprep.subr.mxu0 0.0
  %902 = vmatpush1.msra.mxu0 0.0
  %903 = vmatprep.subr.mxu0 0.0
  %904 = vmatpush1.msra.mxu0 0.0
  %905 = vmatprep.subr.mxu0 0.0
  %906 = vmatpush1.msra.mxu0 0.0
  %907 = vmatprep.subr.mxu0 0.0
  %908 = vmatpush1.msra.mxu0 0.0
  %909 = vmatprep.subr.mxu0 0.0
  %910 = vmatpush1.msra.mxu0 0.0
  %911 = vmatprep.subr.mxu0 0.0
  %912 = vmatpush1.msra.mxu0 0.0
  %913 = vmatprep.subr.mxu0 0.0
  %914 = vmatpush1.msra.mxu0 0.0
  %915 = vmatprep.subr.mxu0 0.0
  %916 = vmatpush1.msra.mxu0 0.0
  %917 = vmatprep.subr.mxu0 0.0
  %918 = vmatpush1.msra.mxu0 0.0
  %919 = vmatprep.subr.mxu0 0.0
  %920 = vmatpush1.msra.mxu0 0.0
  %921 = vmatprep.subr.mxu0 0.0
  %922 = vmatpush1.msra.mxu0 0.0
  %923 = vmatprep.subr.mxu0 0.0
  %924 = vmatpush1.msra.mxu0 0.0
  %925 = vmatprep.subr.mxu0 0.0
  %926 = vmatpush1.msra.mxu0 0.0
  %927 = vmatprep.subr.mxu0 0.0
  %928 = vmatpush1.msra.mxu0 0.0
  %929 = vmatprep.subr.mxu0 0.0
  %930 = vmatpush1.msra.mxu0 0.0
  %931 = vmatprep.subr.mxu0 0.0
  %932 = vmatpush1.msra.mxu0 0.0
  %933 = vmatprep.subr.mxu0 0.0
  %934 = vmatpush1.msra.mxu0 0.0
  %935 = vmatprep.subr.mxu0 0.0
  %936 = vmatpush1.msra.mxu0 0.0
  %937 = vmatprep.subr.mxu0 0.0
  %938 = vmatpush1.msra.mxu0 0.0
  %939 = vmatprep.subr.mxu0 0.0
  %940 = vmatpush1.msra.mxu0 0.0
  %941 = vmatprep.subr.mxu0 0.0
  %942 = vmatpush1.msra.mxu0 0.0
  %943 = vmatprep.subr.mxu0 0.0
  %944 = vmatpush1.msra.mxu0 0.0
  %945 = vmatprep.subr.mxu0 0.0
  %946 = vmatpush1.msra.mxu0 0.0
  %947 = vmatprep.subr.mxu0 0.0
  %948 = vmatpush1.msra.mxu0 0.0
  %949 = vmatprep.mubr.f32.mxu0 0.0
  %v950 = vand.u32 %v866, 4294901760
  %v951 = vsub.f32 %v866, %v950
  %v952 = vand.u32 %v951, 4294901760
  %v953 = vsub.f32 %v951, %v952
  %v954 = vand.u32 %v953, 4294901760
  %955 = vmatmul.mubr.f32.gmra.mrb[0].mxu0 %v954
  %v956 = vpop.f32.mrb[0].mxu0
  %v957 = vadd.f32 %v852, %v956
  %v958 = vpop.f32.mrb[0].mxu0
  %959 = vmatprep.mubr.f32.mxu0 0.0
  %v960 = vand.u32 %v869, 4294901760
  %v961 = vsub.f32 %v869, %v960
  %v962 = vand.u32 %v961, 4294901760
  %v963 = vsub.f32 %v961, %v962
  %v964 = vand.u32 %v963, 4294901760
  %965 = vmatmul.mubr.f32.gmra.mrb[0].mxu0 %v964
  %v966 = vpop.f32.mrb[0].mxu0
  %v967 = vadd.f32 %v857, %v966
  %v968 = vpop.f32.mrb[0].mxu0
  %969 = vmatprep.mubr.f32.mxu0 0.0
  %v970 = vand.u32 %v872, 4294901760
  %v971 = vsub.f32 %v872, %v970
  %v972 = vand.u32 %v971, 4294901760
  %v973 = vsub.f32 %v971, %v972
  %v974 = vand.u32 %v973, 4294901760
  %975 = vmatmul.mubr.f32.gmra.mrb[0].mxu0 %v974
  %v976 = vpop.f32.mrb[0].mxu0
  %v977 = vadd.f32 %v862, %v976
  %v978 = vpop.f32.mrb[0].mxu0
  %979 = vdwg.mxu0
  %980 = vmatprep.subr.mxu0 0.0
  %v981 = vand.u32 %v836, 4294901760
  %v982 = vsub.f32 %v836, %v981
  %v983 = vand.u32 %v982, 4294901760
  %v984 = vsub.f32 %v982, %v983
  %v985 = vand.u32 %v984, 4294901760
  %986 = vmatpush1.msra.mxu0 %v985
  %987 = vmatprep.subr.mxu0 0.0
  %v988 = vand.u32 %v837, 4294901760
  %v989 = vsub.f32 %v837, %v988
  %v990 = vand.u32 %v989, 4294901760
  %v991 = vsub.f32 %v989, %v990
  %v992 = vand.u32 %v991, 4294901760
  %993 = vmatpush1.msra.mxu0 %v992
  %994 = vmatprep.subr.mxu0 0.0
  %v995 = vand.u32 %v838, 4294901760
  %v996 = vsub.f32 %v838, %v995
  %v997 = vand.u32 %v996, 4294901760
  %v998 = vsub.f32 %v996, %v997
  %v999 = vand.u32 %v998, 4294901760
  %1000 = vmatpush1.msra.mxu0 %v999
  %1001 = vmatprep.subr.mxu0 0.0
  %v1002 = vand.u32 %v839, 4294901760
  %v1003 = vsub.f32 %v839, %v1002
  %v1004 = vand.u32 %v1003, 4294901760
  %v1005 = vsub.f32 %v1003, %v1004
  %v1006 = vand.u32 %v1005, 4294901760
  %1007 = vmatpush1.msra.mxu0 %v1006
  %1008 = vmatprep.subr.mxu0 0.0
  %v1009 = vand.u32 %v840, 4294901760
  %v1010 = vsub.f32 %v840, %v1009
  %v1011 = vand.u32 %v1010, 4294901760
  %v1012 = vsub.f32 %v1010, %v1011
  %v1013 = vand.u32 %v1012, 4294901760
  %1014 = vmatpush1.msra.mxu0 %v1013
  %1015 = vmatprep.subr.mxu0 0.0
  %v1016 = vand.u32 %v841, 4294901760
  %v1017 = vsub.f32 %v841, %v1016
  %v1018 = vand.u32 %v1017, 4294901760
  %v1019 = vsub.f32 %v1017, %v1018
  %v1020 = vand.u32 %v1019, 4294901760
  %1021 = vmatpush1.msra.mxu0 %v1020
  %1022 = vmatprep.subr.mxu0 0.0
  %v1023 = vand.u32 %v876, 4294901760
  %v1024 = vsub.f32 %v876, %v1023
  %v1025 = vand.u32 %v1024, 4294901760
  %v1026 = vsub.f32 %v1024, %v1025
  %v1027 = vand.u32 %v1026, 4294901760
  %1028 = vmatpush1.msra.mxu0 %v1027
  %1029 = vmatprep.subr.mxu0 0.0
  %1030 = vmatpush1.msra.mxu0 0.0
  %1031 = vmatprep.subr.mxu0 0.0
  %1032 = vmatpush1.msra.mxu0 0.0
  %1033 = vmatprep.subr.mxu0 0.0
  %1034 = vmatpush1.msra.mxu0 0.0
  %1035 = vmatprep.subr.mxu0 0.0
  %1036 = vmatpush1.msra.mxu0 0.0
  %1037 = vmatprep.subr.mxu0 0.0
  %1038 = vmatpush1.msra.mxu0 0.0
  %1039 = vmatprep.subr.mxu0 0.0
  %1040 = vmatpush1.msra.mxu0 0.0
  %1041 = vmatprep.subr.mxu0 0.0
  %1042 = vmatpush1.msra.mxu0 0.0
  %1043 = vmatprep.subr.mxu0 0.0
  %1044 = vmatpush1.msra.mxu0 0.0
  %1045 = vmatprep.subr.mxu0 0.0
  %1046 = vmatpush1.msra.mxu0 0.0
  %1047 = vmatprep.subr.mxu0 0.0
  %1048 = vmatpush1.msra.mxu0 0.0
  %1049 = vmatprep.subr.mxu0 0.0
  %1050 = vmatpush1.msra.mxu0 0.0
  %1051 = vmatprep.subr.mxu0 0.0
  %1052 = vmatpush1.msra.mxu0 0.0
  %1053 = vmatprep.subr.mxu0 0.0
  %1054 = vmatpush1.msra.mxu0 0.0
  %1055 = vmatprep.subr.mxu0 0.0
  %1056 = vmatpush1.msra.mxu0 0.0
  %1057 = vmatprep.subr.mxu0 0.0
  %1058 = vmatpush1.msra.mxu0 0.0
  %1059 = vmatprep.subr.mxu0 0.0
  %1060 = vmatpush1.msra.mxu0 0.0
  %1061 = vmatprep.subr.mxu0 0.0
  %1062 = vmatpush1.msra.mxu0 0.0
  %1063 = vmatprep.subr.mxu0 0.0
  %1064 = vmatpush1.msra.mxu0 0.0
  %1065 = vmatprep.subr.mxu0 0.0
  %1066 = vmatpush1.msra.mxu0 0.0
  %1067 = vmatprep.subr.mxu0 0.0
  %1068 = vmatpush1.msra.mxu0 0.0
  %1069 = vmatprep.subr.mxu0 0.0
  %1070 = vmatpush1.msra.mxu0 0.0
  %1071 = vmatprep.subr.mxu0 0.0
  %1072 = vmatpush1.msra.mxu0 0.0
  %1073 = vmatprep.subr.mxu0 0.0
  %1074 = vmatpush1.msra.mxu0 0.0
  %1075 = vmatprep.subr.mxu0 0.0
  %1076 = vmatpush1.msra.mxu0 0.0
  %1077 = vmatprep.subr.mxu0 0.0
  %1078 = vmatpush1.msra.mxu0 0.0
  %1079 = vmatprep.mubr.f32.mxu0 0.0
  %v1080 = vand.u32 %v866, 4294901760
  %1081 = vmatmul.mubr.f32.gmra.mrb[0].mxu0 %v1080
  %v1082 = vpop.f32.mrb[0].mxu0
  %v1083 = vadd.f32 %v957, %v1082
  %v1084 = vpop.f32.mrb[0].mxu0
  %1085 = vmatprep.mubr.f32.mxu0 0.0
  %v1086 = vand.u32 %v869, 4294901760
  %1087 = vmatmul.mubr.f32.gmra.mrb[0].mxu0 %v1086
  %v1088 = vpop.f32.mrb[0].mxu0
  %v1089 = vadd.f32 %v967, %v1088
  %v1090 = vpop.f32.mrb[0].mxu0
  %1091 = vmatprep.mubr.f32.mxu0 0.0
  %v1092 = vand.u32 %v872, 4294901760
  %1093 = vmatmul.mubr.f32.gmra.mrb[0].mxu0 %v1092
  %v1094 = vpop.f32.mrb[0].mxu0
  %v1095 = vadd.f32 %v977, %v1094
  %v1096 = vpop.f32.mrb[0].mxu0
  %1097 = vdwg.mxu0
  %1098 = vmatprep.subr.mxu0 0.0
  %v1099 = vand.u32 %v836, 4294901760
  %v1100 = vsub.f32 %v836, %v1099
  %1101 = vmatpush1.msra.mxu0 %v1100
  %1102 = vmatprep.subr.mxu0 0.0
  %v1103 = vand.u32 %v837, 4294901760
  %v1104 = vsub.f32 %v837, %v1103
  %1105 = vmatpush1.msra.mxu0 %v1104
  %1106 = vmatprep.subr.mxu0 0.0
  %v1107 = vand.u32 %v838, 4294901760
  %v1108 = vsub.f32 %v838, %v1107
  %1109 = vmatpush1.msra.mxu0 %v1108
  %1110 = vmatprep.subr.mxu0 0.0
  %v1111 = vand.u32 %v839, 4294901760
  %v1112 = vsub.f32 %v839, %v1111
  %1113 = vmatpush1.msra.mxu0 %v1112
  %1114 = vmatprep.subr.mxu0 0.0
  %v1115 = vand.u32 %v840, 4294901760
  %v1116 = vsub.f32 %v840, %v1115
  %1117 = vmatpush1.msra.mxu0 %v1116
  %1118 = vmatprep.subr.mxu0 0.0
  %v1119 = vand.u32 %v841, 4294901760
  %v1120 = vsub.f32 %v841, %v1119
  %1121 = vmatpush1.msra.mxu0 %v1120
  %1122 = vmatprep.subr.mxu0 0.0
  %v1123 = vand.u32 %v876, 4294901760
  %v1124 = vsub.f32 %v876, %v1123
  %1125 = vmatpush1.msra.mxu0 %v1124
  %1126 = vmatprep.subr.mxu0 0.0
  %1127 = vmatpush1.msra.mxu0 0.0
  %1128 = vmatprep.subr.mxu0 0.0
  %1129 = vmatpush1.msra.mxu0 0.0
  %1130 = vmatprep.subr.mxu0 0.0
  %1131 = vmatpush1.msra.mxu0 0.0
  %1132 = vmatprep.subr.mxu0 0.0
  %1133 = vmatpush1.msra.mxu0 0.0
  %1134 = vmatprep.subr.mxu0 0.0
  %1135 = vmatpush1.msra.mxu0 0.0
  %1136 = vmatprep.subr.mxu0 0.0
  %1137 = vmatpush1.msra.mxu0 0.0
  %1138 = vmatprep.subr.mxu0 0.0
  %1139 = vmatpush1.msra.mxu0 0.0
  %1140 = vmatprep.subr.mxu0 0.0
  %1141 = vmatpush1.msra.mxu0 0.0
  %1142 = vmatprep.subr.mxu0 0.0
  %1143 = vmatpush1.msra.mxu0 0.0
  %1144 = vmatprep.subr.mxu0 0.0
  %1145 = vmatpush1.msra.mxu0 0.0
  %1146 = vmatprep.subr.mxu0 0.0
  %1147 = vmatpush1.msra.mxu0 0.0
  %1148 = vmatprep.subr.mxu0 0.0
  %1149 = vmatpush1.msra.mxu0 0.0
  %1150 = vmatprep.subr.mxu0 0.0
  %1151 = vmatpush1.msra.mxu0 0.0
  %1152 = vmatprep.subr.mxu0 0.0
  %1153 = vmatpush1.msra.mxu0 0.0
  %1154 = vmatprep.subr.mxu0 0.0
  %1155 = vmatpush1.msra.mxu0 0.0
  %1156 = vmatprep.subr.mxu0 0.0
  %1157 = vmatpush1.msra.mxu0 0.0
  %1158 = vmatprep.subr.mxu0 0.0
  %1159 = vmatpush1.msra.mxu0 0.0
  %1160 = vmatprep.subr.mxu0 0.0
  %1161 = vmatpush1.msra.mxu0 0.0
  %1162 = vmatprep.subr.mxu0 0.0
  %1163 = vmatpush1.msra.mxu0 0.0
  %1164 = vmatprep.subr.mxu0 0.0
  %1165 = vmatpush1.msra.mxu0 0.0
  %1166 = vmatprep.subr.mxu0 0.0
  %1167 = vmatpush1.msra.mxu0 0.0
  %1168 = vmatprep.subr.mxu0 0.0
  %1169 = vmatpush1.msra.mxu0 0.0
  %1170 = vmatprep.subr.mxu0 0.0
  %1171 = vmatpush1.msra.mxu0 0.0
  %1172 = vmatprep.subr.mxu0 0.0
  %1173 = vmatpush1.msra.mxu0 0.0
  %1174 = vmatprep.subr.mxu0 0.0
  %1175 = vmatpush1.msra.mxu0 0.0
  %1176 = vmatprep.mubr.f32.mxu0 0.0
  %v1177 = vand.u32 %v866, 4294901760
  %v1178 = vsub.f32 %v866, %v1177
  %1179 = vmatmul.mubr.f32.gmra.mrb[0].mxu0 %v1178
  %v1180 = vpop.f32.mrb[0].mxu0
  %v1181 = vadd.f32 %v1083, %v1180
  %v1182 = vpop.f32.mrb[0].mxu0
  %1183 = vmatprep.mubr.f32.mxu0 0.0
  %v1184 = vand.u32 %v869, 4294901760
  %v1185 = vsub.f32 %v869, %v1184
  %1186 = vmatmul.mubr.f32.gmra.mrb[0].mxu0 %v1185
  %v1187 = vpop.f32.mrb[0].mxu0
  %v1188 = vadd.f32 %v1089, %v1187
  %v1189 = vpop.f32.mrb[0].mxu0
  %1190 = vmatprep.mubr.f32.mxu0 0.0
  %v1191 = vand.u32 %v872, 4294901760
  %v1192 = vsub.f32 %v872, %v1191
  %1193 = vmatmul.mubr.f32.gmra.mrb[0].mxu0 %v1192
  %v1194 = vpop.f32.mrb[0].mxu0
  %v1195 = vadd.f32 %v1095, %v1194
  %v1196 = vpop.f32.mrb[0].mxu0
  %1197 = vdwg.mxu0
  %1198 = vmatprep.subr.mxu0 0.0
  %v1199 = vand.u32 %v836, 4294901760
  %1200 = vmatpush1.msra.mxu0 %v1199
  %1201 = vmatprep.subr.mxu0 0.0
  %v1202 = vand.u32 %v837, 4294901760
  %1203 = vmatpush1.msra.mxu0 %v1202
  %1204 = vmatprep.subr.mxu0 0.0
  %v1205 = vand.u32 %v838, 4294901760
  %1206 = vmatpush1.msra.mxu0 %v1205
  %1207 = vmatprep.subr.mxu0 0.0
  %v1208 = vand.u32 %v839, 4294901760
  %1209 = vmatpush1.msra.mxu0 %v1208
  %1210 = vmatprep.subr.mxu0 0.0
  %v1211 = vand.u32 %v840, 4294901760
  %1212 = vmatpush1.msra.mxu0 %v1211
  %1213 = vmatprep.subr.mxu0 0.0
  %v1214 = vand.u32 %v841, 4294901760
  %1215 = vmatpush1.msra.mxu0 %v1214
  %1216 = vmatprep.subr.mxu0 0.0
  %v1217 = vand.u32 %v876, 4294901760
  %1218 = vmatpush1.msra.mxu0 %v1217
  %1219 = vmatprep.subr.mxu0 0.0
  %1220 = vmatpush1.msra.mxu0 0.0
  %1221 = vmatprep.subr.mxu0 0.0
  %1222 = vmatpush1.msra.mxu0 0.0
  %1223 = vmatprep.subr.mxu0 0.0
  %1224 = vmatpush1.msra.mxu0 0.0
  %1225 = vmatprep.subr.mxu0 0.0
  %1226 = vmatpush1.msra.mxu0 0.0
  %1227 = vmatprep.subr.mxu0 0.0
  %1228 = vmatpush1.msra.mxu0 0.0
  %1229 = vmatprep.subr.mxu0 0.0
  %1230 = vmatpush1.msra.mxu0 0.0
  %1231 = vmatprep.subr.mxu0 0.0
  %1232 = vmatpush1.msra.mxu0 0.0
  %1233 = vmatprep.subr.mxu0 0.0
  %1234 = vmatpush1.msra.mxu0 0.0
  %1235 = vmatprep.subr.mxu0 0.0
  %1236 = vmatpush1.msra.mxu0 0.0
  %1237 = vmatprep.subr.mxu0 0.0
  %1238 = vmatpush1.msra.mxu0 0.0
  %1239 = vmatprep.subr.mxu0 0.0
  %1240 = vmatpush1.msra.mxu0 0.0
  %1241 = vmatprep.subr.mxu0 0.0
  %1242 = vmatpush1.msra.mxu0 0.0
  %1243 = vmatprep.subr.mxu0 0.0
  %1244 = vmatpush1.msra.mxu0 0.0
  %1245 = vmatprep.subr.mxu0 0.0
  %1246 = vmatpush1.msra.mxu0 0.0
  %1247 = vmatprep.subr.mxu0 0.0
  %1248 = vmatpush1.msra.mxu0 0.0
  %1249 = vmatprep.subr.mxu0 0.0
  %1250 = vmatpush1.msra.mxu0 0.0
  %1251 = vmatprep.subr.mxu0 0.0
  %1252 = vmatpush1.msra.mxu0 0.0
  %1253 = vmatprep.subr.mxu0 0.0
  %1254 = vmatpush1.msra.mxu0 0.0
  %1255 = vmatprep.subr.mxu0 0.0
  %1256 = vmatpush1.msra.mxu0 0.0
  %1257 = vmatprep.subr.mxu0 0.0
  %1258 = vmatpush1.msra.mxu0 0.0
  %1259 = vmatprep.subr.mxu0 0.0
  %1260 = vmatpush1.msra.mxu0 0.0
  %1261 = vmatprep.subr.mxu0 0.0
  %1262 = vmatpush1.msra.mxu0 0.0
  %1263 = vmatprep.subr.mxu0 0.0
  %1264 = vmatpush1.msra.mxu0 0.0
  %1265 = vmatprep.subr.mxu0 0.0
  %1266 = vmatpush1.msra.mxu0 0.0
  %1267 = vmatprep.subr.mxu0 0.0
  %1268 = vmatpush1.msra.mxu0 0.0
  %1269 = vmatprep.mubr.f32.mxu0 0.0
  %v1270 = vand.u32 %v866, 4294901760
  %v1271 = vsub.f32 %v866, %v1270
  %v1272 = vand.u32 %v1271, 4294901760
  %1273 = vmatmul.mubr.f32.gmra.mrb[0].mxu0 %v1272
  %v1274 = vpop.f32.mrb[0].mxu0
  %v1275 = vadd.f32 %v1181, %v1274
  %v1276 = vpop.f32.mrb[0].mxu0
  %1277 = vmatprep.mubr.f32.mxu0 0.0
  %v1278 = vand.u32 %v869, 4294901760
  %v1279 = vsub.f32 %v869, %v1278
  %v1280 = vand.u32 %v1279, 4294901760
  %1281 = vmatmul.mubr.f32.gmra.mrb[0].mxu0 %v1280
  %v1282 = vpop.f32.mrb[0].mxu0
  %v1283 = vadd.f32 %v1188, %v1282
  %v1284 = vpop.f32.mrb[0].mxu0
  %1285 = vmatprep.mubr.f32.mxu0 0.0
  %v1286 = vand.u32 %v872, 4294901760
  %v1287 = vsub.f32 %v872, %v1286
  %v1288 = vand.u32 %v1287, 4294901760
  %1289 = vmatmul.mubr.f32.gmra.mrb[0].mxu0 %v1288
  %v1290 = vpop.f32.mrb[0].mxu0
  %v1291 = vadd.f32 %v1195, %v1290
  %v1292 = vpop.f32.mrb[0].mxu0
  %1293 = vdwg.mxu0
  %1294 = vmatprep.subr.mxu0 0.0
  %v1295 = vand.u32 %v836, 4294901760
  %v1296 = vsub.f32 %v836, %v1295
  %v1297 = vand.u32 %v1296, 4294901760
  %1298 = vmatpush1.msra.mxu0 %v1297
  %1299 = vmatprep.subr.mxu0 0.0
  %v1300 = vand.u32 %v837, 4294901760
  %v1301 = vsub.f32 %v837, %v1300
  %v1302 = vand.u32 %v1301, 4294901760
  %1303 = vmatpush1.msra.mxu0 %v1302
  %1304 = vmatprep.subr.mxu0 0.0
  %v1305 = vand.u32 %v838, 4294901760
  %v1306 = vsub.f32 %v838, %v1305
  %v1307 = vand.u32 %v1306, 4294901760
  %1308 = vmatpush1.msra.mxu0 %v1307
  %1309 = vmatprep.subr.mxu0 0.0
  %v1310 = vand.u32 %v839, 4294901760
  %v1311 = vsub.f32 %v839, %v1310
  %v1312 = vand.u32 %v1311, 4294901760
  %1313 = vmatpush1.msra.mxu0 %v1312
  %1314 = vmatprep.subr.mxu0 0.0
  %v1315 = vand.u32 %v840, 4294901760
  %v1316 = vsub.f32 %v840, %v1315
  %v1317 = vand.u32 %v1316, 4294901760
  %1318 = vmatpush1.msra.mxu0 %v1317
  %1319 = vmatprep.subr.mxu0 0.0
  %v1320 = vand.u32 %v841, 4294901760
  %v1321 = vsub.f32 %v841, %v1320
  %v1322 = vand.u32 %v1321, 4294901760
  %1323 = vmatpush1.msra.mxu0 %v1322
  %1324 = vmatprep.subr.mxu0 0.0
  %v1325 = vand.u32 %v876, 4294901760
  %v1326 = vsub.f32 %v876, %v1325
  %v1327 = vand.u32 %v1326, 4294901760
  %1328 = vmatpush1.msra.mxu0 %v1327
  %1329 = vmatprep.subr.mxu0 0.0
  %1330 = vmatpush1.msra.mxu0 0.0
  %1331 = vmatprep.subr.mxu0 0.0
  %1332 = vmatpush1.msra.mxu0 0.0
  %1333 = vmatprep.subr.mxu0 0.0
  %1334 = vmatpush1.msra.mxu0 0.0
  %1335 = vmatprep.subr.mxu0 0.0
  %1336 = vmatpush1.msra.mxu0 0.0
  %1337 = vmatprep.subr.mxu0 0.0
  %1338 = vmatpush1.msra.mxu0 0.0
  %1339 = vmatprep.subr.mxu0 0.0
  %1340 = vmatpush1.msra.mxu0 0.0
  %1341 = vmatprep.subr.mxu0 0.0
  %1342 = vmatpush1.msra.mxu0 0.0
  %1343 = vmatprep.subr.mxu0 0.0
  %1344 = vmatpush1.msra.mxu0 0.0
  %1345 = vmatprep.subr.mxu0 0.0
  %1346 = vmatpush1.msra.mxu0 0.0
  %1347 = vmatprep.subr.mxu0 0.0
  %1348 = vmatpush1.msra.mxu0 0.0
  %1349 = vmatprep.subr.mxu0 0.0
  %1350 = vmatpush1.msra.mxu0 0.0
  %1351 = vmatprep.subr.mxu0 0.0
  %1352 = vmatpush1.msra.mxu0 0.0
  %1353 = vmatprep.subr.mxu0 0.0
  %1354 = vmatpush1.msra.mxu0 0.0
  %1355 = vmatprep.subr.mxu0 0.0
  %1356 = vmatpush1.msra.mxu0 0.0
  %1357 = vmatprep.subr.mxu0 0.0
  %1358 = vmatpush1.msra.mxu0 0.0
  %1359 = vmatprep.subr.mxu0 0.0
  %1360 = vmatpush1.msra.mxu0 0.0
  %1361 = vmatprep.subr.mxu0 0.0
  %1362 = vmatpush1.msra.mxu0 0.0
  %1363 = vmatprep.subr.mxu0 0.0
  %1364 = vmatpush1.msra.mxu0 0.0
  %1365 = vmatprep.subr.mxu0 0.0
  %1366 = vmatpush1.msra.mxu0 0.0
  %1367 = vmatprep.subr.mxu0 0.0
  %1368 = vmatpush1.msra.mxu0 0.0
  %1369 = vmatprep.subr.mxu0 0.0
  %1370 = vmatpush1.msra.mxu0 0.0
  %1371 = vmatprep.subr.mxu0 0.0
  %1372 = vmatpush1.msra.mxu0 0.0
  %1373 = vmatprep.subr.mxu0 0.0
  %1374 = vmatpush1.msra.mxu0 0.0
  %1375 = vmatprep.subr.mxu0 0.0
  %1376 = vmatpush1.msra.mxu0 0.0
  %1377 = vmatprep.subr.mxu0 0.0
  %1378 = vmatpush1.msra.mxu0 0.0
  %1379 = vmatprep.mubr.f32.mxu0 0.0
  %v1380 = vand.u32 %v866, 4294901760
  %1381 = vmatmul.mubr.f32.gmra.mrb[0].mxu0 %v1380
  %v1382 = vpop.f32.mrb[0].mxu0
  %v1383 = vadd.f32 %v1275, %v1382
  %v1384 = vpop.f32.mrb[0].mxu0
  %1385 = vmatprep.mubr.f32.mxu0 0.0
  %v1386 = vand.u32 %v869, 4294901760
  %1387 = vmatmul.mubr.f32.gmra.mrb[0].mxu0 %v1386
  %v1388 = vpop.f32.mrb[0].mxu0
  %v1389 = vadd.f32 %v1283, %v1388
  %v1390 = vpop.f32.mrb[0].mxu0
  %1391 = vmatprep.mubr.f32.mxu0 0.0
  %v1392 = vand.u32 %v872, 4294901760
  %1393 = vmatmul.mubr.f32.gmra.mrb[0].mxu0 %v1392
  %v1394 = vpop.f32.mrb[0].mxu0
  %v1395 = vadd.f32 %v1291, %v1394
  %v1396 = vpop.f32.mrb[0].mxu0
  %1397 = vdwg.mxu0
  %1398 = vmatprep.subr.mxu0 0.0
  %v1399 = vand.u32 %v836, 4294901760
  %1400 = vmatpush1.msra.mxu0 %v1399
  %1401 = vmatprep.subr.mxu0 0.0
  %v1402 = vand.u32 %v837, 4294901760
  %1403 = vmatpush1.msra.mxu0 %v1402
  %1404 = vmatprep.subr.mxu0 0.0
  %v1405 = vand.u32 %v838, 4294901760
  %1406 = vmatpush1.msra.mxu0 %v1405
  %1407 = vmatprep.subr.mxu0 0.0
  %v1408 = vand.u32 %v839, 4294901760
  %1409 = vmatpush1.msra.mxu0 %v1408
  %1410 = vmatprep.subr.mxu0 0.0
  %v1411 = vand.u32 %v840, 4294901760
  %1412 = vmatpush1.msra.mxu0 %v1411
  %1413 = vmatprep.subr.mxu0 0.0
  %v1414 = vand.u32 %v841, 4294901760
  %1415 = vmatpush1.msra.mxu0 %v1414
  %1416 = vmatprep.subr.mxu0 0.0
  %v1417 = vand.u32 %v876, 4294901760
  %1418 = vmatpush1.msra.mxu0 %v1417
  %1419 = vmatprep.subr.mxu0 0.0
  %1420 = vmatpush1.msra.mxu0 0.0
  %1421 = vmatprep.subr.mxu0 0.0
  %1422 = vmatpush1.msra.mxu0 0.0
  %1423 = vmatprep.subr.mxu0 0.0
  %1424 = vmatpush1.msra.mxu0 0.0
  %1425 = vmatprep.subr.mxu0 0.0
  %1426 = vmatpush1.msra.mxu0 0.0
  %1427 = vmatprep.subr.mxu0 0.0
  %1428 = vmatpush1.msra.mxu0 0.0
  %1429 = vmatprep.subr.mxu0 0.0
  %1430 = vmatpush1.msra.mxu0 0.0
  %1431 = vmatprep.subr.mxu0 0.0
  %1432 = vmatpush1.msra.mxu0 0.0
  %1433 = vmatprep.subr.mxu0 0.0
  %1434 = vmatpush1.msra.mxu0 0.0
  %1435 = vmatprep.subr.mxu0 0.0
  %1436 = vmatpush1.msra.mxu0 0.0
  %1437 = vmatprep.subr.mxu0 0.0
  %1438 = vmatpush1.msra.mxu0 0.0
  %1439 = vmatprep.subr.mxu0 0.0
  %1440 = vmatpush1.msra.mxu0 0.0
  %1441 = vmatprep.subr.mxu0 0.0
  %1442 = vmatpush1.msra.mxu0 0.0
  %1443 = vmatprep.subr.mxu0 0.0
  %1444 = vmatpush1.msra.mxu0 0.0
  %1445 = vmatprep.subr.mxu0 0.0
  %1446 = vmatpush1.msra.mxu0 0.0
  %1447 = vmatprep.subr.mxu0 0.0
  %1448 = vmatpush1.msra.mxu0 0.0
  %1449 = vmatprep.subr.mxu0 0.0
  %1450 = vmatpush1.msra.mxu0 0.0
  %1451 = vmatprep.subr.mxu0 0.0
  %1452 = vmatpush1.msra.mxu0 0.0
  %1453 = vmatprep.subr.mxu0 0.0
  %1454 = vmatpush1.msra.mxu0 0.0
  %1455 = vmatprep.subr.mxu0 0.0
  %1456 = vmatpush1.msra.mxu0 0.0
  %1457 = vmatprep.subr.mxu0 0.0
  %1458 = vmatpush1.msra.mxu0 0.0
  %1459 = vmatprep.subr.mxu0 0.0
  %1460 = vmatpush1.msra.mxu0 0.0
  %1461 = vmatprep.subr.mxu0 0.0
  %1462 = vmatpush1.msra.mxu0 0.0
  %1463 = vmatprep.subr.mxu0 0.0
  %1464 = vmatpush1.msra.mxu0 0.0
  %1465 = vmatprep.subr.mxu0 0.0
  %1466 = vmatpush1.msra.mxu0 0.0
  %1467 = vmatprep.subr.mxu0 0.0
  %1468 = vmatpush1.msra.mxu0 0.0
  %1469 = vmatprep.mubr.f32.mxu0 0.0
  %v1470 = vand.u32 %v866, 4294901760
  %1471 = vmatmul.mubr.f32.gmra.mrb[0].mxu0 %v1470
  %v1472 = vpop.f32.mrb[0].mxu0
  %v1473 = vadd.f32 %v1383, %v1472
  %v1474 = vpop.f32.mrb[0].mxu0
  %1475 = vmatprep.mubr.f32.mxu0 0.0
  %v1476 = vand.u32 %v869, 4294901760
  %1477 = vmatmul.mubr.f32.gmra.mrb[0].mxu0 %v1476
  %v1478 = vpop.f32.mrb[0].mxu0
  %v1479 = vadd.f32 %v1389, %v1478
  %v1480 = vpop.f32.mrb[0].mxu0
  %1481 = vmatprep.mubr.f32.mxu0 0.0
  %v1482 = vand.u32 %v872, 4294901760
  %1483 = vmatmul.mubr.f32.gmra.mrb[0].mxu0 %v1482
  %v1484 = vpop.f32.mrb[0].mxu0
  %v1485 = vadd.f32 %v1395, %v1484
  %v1486 = vpop.f32.mrb[0].mxu0
  %1487 = vdwg.mxu0
  %v1488 = vtanh.pop %v1473
  %v1489 = vtanh.pop %v1479
  %v1490 = vtanh.pop %v1485
  %v1491 = vld [vmem:[%s5] sm:$0xff]
  %v1492 = vld [vmem:[%s5 + $0x8] sm:$0x3]
  %v1493 = vld [vmem:[%s6] sm:$0xff]
  %v1494 = vld [vmem:[%s6 + $0x8] sm:$0x3]
  %1496 = vset.pattern.permute.xlu0 0
  %1497 = vperm.xlu0 %1496, %v1493
  %v1498 = vpop.permute.xlu0 %1497
  %1501 = vset.pattern.permute.xlu0 0
  %1502 = vperm.xlu0 %1501, %v1494
  %v1503 = vpop.permute.xlu0 %1502
  %vm1505 = vcmask 162816
  %v1507 = vsel %vm1505, %v1491, 0
  %v1510 = vsel %vm1505, %v1492, 0
  %v1513 = vsel %vm128, %v1490, 0
  %1515 = vmatprep.subr.mxu0 0.0
  %v1516 = vand.u32 %v1488, 4294901760
  %1517 = vmatpush1.msra.mxu0 %v1516
  %1518 = vmatprep.subr.mxu0 0.0
  %v1519 = vand.u32 %v1489, 4294901760
  %1520 = vmatpush1.msra.mxu0 %v1519
  %1521 = vmatprep.subr.mxu0 0.0
  %v1522 = vand.u32 %v1513, 4294901760
  %1523 = vmatpush1.msra.mxu0 %v1522
  %1524 = vmatprep.subr.mxu0 0.0
  %1525 = vmatpush1.msra.mxu0 0.0
  %1526 = vmatprep.subr.mxu0 0.0
  %1527 = vmatpush1.msra.mxu0 0.0
  %1528 = vmatprep.subr.mxu0 0.0
  %1529 = vmatpush1.msra.mxu0 0.0
  %1530 = vmatprep.subr.mxu0 0.0
  %1531 = vmatpush1.msra.mxu0 0.0
  %1532 = vmatprep.subr.mxu0 0.0
  %1533 = vmatpush1.msra.mxu0 0.0
  %1534 = vmatprep.subr.mxu0 0.0
  %1535 = vmatpush1.msra.mxu0 0.0
  %1536 = vmatprep.subr.mxu0 0.0
  %1537 = vmatpush1.msra.mxu0 0.0
  %1538 = vmatprep.subr.mxu0 0.0
  %1539 = vmatpush1.msra.mxu0 0.0
  %1540 = vmatprep.subr.mxu0 0.0
  %1541 = vmatpush1.msra.mxu0 0.0
  %1542 = vmatprep.subr.mxu0 0.0
  %1543 = vmatpush1.msra.mxu0 0.0
  %1544 = vmatprep.subr.mxu0 0.0
  %1545 = vmatpush1.msra.mxu0 0.0
  %1546 = vmatprep.subr.mxu0 0.0
  %1547 = vmatpush1.msra.mxu0 0.0
  %1548 = vmatprep.subr.mxu0 0.0
  %1549 = vmatpush1.msra.mxu0 0.0
  %1550 = vmatprep.subr.mxu0 0.0
  %1551 = vmatpush1.msra.mxu0 0.0
  %1552 = vmatprep.subr.mxu0 0.0
  %1553 = vmatpush1.msra.mxu0 0.0
  %1554 = vmatprep.subr.mxu0 0.0
  %1555 = vmatpush1.msra.mxu0 0.0
  %1556 = vmatprep.subr.mxu0 0.0
  %1557 = vmatpush1.msra.mxu0 0.0
  %1558 = vmatprep.subr.mxu0 0.0
  %1559 = vmatpush1.msra.mxu0 0.0
  %1560 = vmatprep.subr.mxu0 0.0
  %1561 = vmatpush1.msra.mxu0 0.0
  %1562 = vmatprep.subr.mxu0 0.0
  %1563 = vmatpush1.msra.mxu0 0.0
  %1564 = vmatprep.subr.mxu0 0.0
  %1565 = vmatpush1.msra.mxu0 0.0
  %1566 = vmatprep.subr.mxu0 0.0
  %1567 = vmatpush1.msra.mxu0 0.0
  %1568 = vmatprep.subr.mxu0 0.0
  %1569 = vmatpush1.msra.mxu0 0.0
  %1570 = vmatprep.subr.mxu0 0.0
  %1571 = vmatpush1.msra.mxu0 0.0
  %1572 = vmatprep.subr.mxu0 0.0
  %1573 = vmatpush1.msra.mxu0 0.0
  %1574 = vmatprep.subr.mxu0 0.0
  %1575 = vmatpush1.msra.mxu0 0.0
  %1576 = vmatprep.subr.mxu0 0.0
  %1577 = vmatpush1.msra.mxu0 0.0
  %1578 = vmatprep.subr.mxu0 0.0
  %1579 = vmatpush1.msra.mxu0 0.0
  %1580 = vmatprep.subr.mxu0 0.0
  %1581 = vmatpush1.msra.mxu0 0.0
  %1582 = vmatprep.mubr.f32.mxu0 0.0
  %v1583 = vand.u32 %v1507, 4294901760
  %v1584 = vsub.f32 %v1507, %v1583
  %v1585 = vand.u32 %v1584, 4294901760
  %v1586 = vsub.f32 %v1584, %v1585
  %v1587 = vand.u32 %v1586, 4294901760
  %1588 = vmatmul.mubr.f32.gmra.mrb[0].mxu0 %v1587
  %v1589 = vpop.f32.mrb[0].mxu0
  %v1590 = vadd.f32 %v1498, %v1589
  %v1591 = vpop.f32.mrb[0].mxu0
  %1592 = vmatprep.mubr.f32.mxu0 0.0
  %v1593 = vand.u32 %v1510, 4294901760
  %v1594 = vsub.f32 %v1510, %v1593
  %v1595 = vand.u32 %v1594, 4294901760
  %v1596 = vsub.f32 %v1594, %v1595
  %v1597 = vand.u32 %v1596, 4294901760
  %1598 = vmatmul.mubr.f32.gmra.mrb[0].mxu0 %v1597
  %v1599 = vpop.f32.mrb[0].mxu0
  %v1600 = vadd.f32 %v1503, %v1599
  %v1601 = vpop.f32.mrb[0].mxu0
  %1602 = vdwg.mxu0
  %1603 = vmatprep.subr.mxu0 0.0
  %v1604 = vand.u32 %v1488, 4294901760
  %v1605 = vsub.f32 %v1488, %v1604
  %v1606 = vand.u32 %v1605, 4294901760
  %v1607 = vsub.f32 %v1605, %v1606
  %v1608 = vand.u32 %v1607, 4294901760
  %1609 = vmatpush1.msra.mxu0 %v1608
  %1610 = vmatprep.subr.mxu0 0.0
  %v1611 = vand.u32 %v1489, 4294901760
  %v1612 = vsub.f32 %v1489, %v1611
  %v1613 = vand.u32 %v1612, 4294901760
  %v1614 = vsub.f32 %v1612, %v1613
  %v1615 = vand.u32 %v1614, 4294901760
  %1616 = vmatpush1.msra.mxu0 %v1615
  %1617 = vmatprep.subr.mxu0 0.0
  %v1618 = vand.u32 %v1513, 4294901760
  %v1619 = vsub.f32 %v1513, %v1618
  %v1620 = vand.u32 %v1619, 4294901760
  %v1621 = vsub.f32 %v1619, %v1620
  %v1622 = vand.u32 %v1621, 4294901760
  %1623 = vmatpush1.msra.mxu0 %v1622
  %1624 = vmatprep.subr.mxu0 0.0
  %1625 = vmatpush1.msra.mxu0 0.0
  %1626 = vmatprep.subr.mxu0 0.0
  %1627 = vmatpush1.msra.mxu0 0.0
  %1628 = vmatprep.subr.mxu0 0.0
  %1629 = vmatpush1.msra.mxu0 0.0
  %1630 = vmatprep.subr.mxu0 0.0
  %1631 = vmatpush1.msra.mxu0 0.0
  %1632 = vmatprep.subr.mxu0 0.0
  %1633 = vmatpush1.msra.mxu0 0.0
  %1634 = vmatprep.subr.mxu0 0.0
  %1635 = vmatpush1.msra.mxu0 0.0
  %1636 = vmatprep.subr.mxu0 0.0
  %1637 = vmatpush1.msra.mxu0 0.0
  %1638 = vmatprep.subr.mxu0 0.0
  %1639 = vmatpush1.msra.mxu0 0.0
  %1640 = vmatprep.subr.mxu0 0.0
  %1641 = vmatpush1.msra.mxu0 0.0
  %1642 = vmatprep.subr.mxu0 0.0
  %1643 = vmatpush1.msra.mxu0 0.0
  %1644 = vmatprep.subr.mxu0 0.0
  %1645 = vmatpush1.msra.mxu0 0.0
  %1646 = vmatprep.subr.mxu0 0.0
  %1647 = vmatpush1.msra.mxu0 0.0
  %1648 = vmatprep.subr.mxu0 0.0
  %1649 = vmatpush1.msra.mxu0 0.0
  %1650 = vmatprep.subr.mxu0 0.0
  %1651 = vmatpush1.msra.mxu0 0.0
  %1652 = vmatprep.subr.mxu0 0.0
  %1653 = vmatpush1.msra.mxu0 0.0
  %1654 = vmatprep.subr.mxu0 0.0
  %1655 = vmatpush1.msra.mxu0 0.0
  %1656 = vmatprep.subr.mxu0 0.0
  %1657 = vmatpush1.msra.mxu0 0.0
  %1658 = vmatprep.subr.mxu0 0.0
  %1659 = vmatpush1.msra.mxu0 0.0
  %1660 = vmatprep.subr.mxu0 0.0
  %1661 = vmatpush1.msra.mxu0 0.0
  %1662 = vmatprep.subr.mxu0 0.0
  %1663 = vmatpush1.msra.mxu0 0.0
  %1664 = vmatprep.subr.mxu0 0.0
  %1665 = vmatpush1.msra.mxu0 0.0
  %1666 = vmatprep.subr.mxu0 0.0
  %1667 = vmatpush1.msra.mxu0 0.0
  %1668 = vmatprep.subr.mxu0 0.0
  %1669 = vmatpush1.msra.mxu0 0.0
  %1670 = vmatprep.subr.mxu0 0.0
  %1671 = vmatpush1.msra.mxu0 0.0
  %1672 = vmatprep.subr.mxu0 0.0
  %1673 = vmatpush1.msra.mxu0 0.0
  %1674 = vmatprep.subr.mxu0 0.0
  %1675 = vmatpush1.msra.mxu0 0.0
  %1676 = vmatprep.subr.mxu0 0.0
  %1677 = vmatpush1.msra.mxu0 0.0
  %1678 = vmatprep.subr.mxu0 0.0
  %1679 = vmatpush1.msra.mxu0 0.0
  %1680 = vmatprep.subr.mxu0 0.0
  %1681 = vmatpush1.msra.mxu0 0.0
  %1682 = vmatprep.mubr.f32.mxu0 0.0
  %v1683 = vand.u32 %v1507, 4294901760
  %1684 = vmatmul.mubr.f32.gmra.mrb[0].mxu0 %v1683
  %v1685 = vpop.f32.mrb[0].mxu0
  %v1686 = vadd.f32 %v1590, %v1685
  %v1687 = vpop.f32.mrb[0].mxu0
  %1688 = vmatprep.mubr.f32.mxu0 0.0
  %v1689 = vand.u32 %v1510, 4294901760
  %1690 = vmatmul.mubr.f32.gmra.mrb[0].mxu0 %v1689
  %v1691 = vpop.f32.mrb[0].mxu0
  %v1692 = vadd.f32 %v1600, %v1691
  %v1693 = vpop.f32.mrb[0].mxu0
  %1694 = vdwg.mxu0
  %1695 = vmatprep.subr.mxu0 0.0
  %v1696 = vand.u32 %v1488, 4294901760
  %v1697 = vsub.f32 %v1488, %v1696
  %1698 = vmatpush1.msra.mxu0 %v1697
  %1699 = vmatprep.subr.mxu0 0.0
  %v1700 = vand.u32 %v1489, 4294901760
  %v1701 = vsub.f32 %v1489, %v1700
  %1702 = vmatpush1.msra.mxu0 %v1701
  %1703 = vmatprep.subr.mxu0 0.0
  %v1704 = vand.u32 %v1513, 4294901760
  %v1705 = vsub.f32 %v1513, %v1704
  %1706 = vmatpush1.msra.mxu0 %v1705
  %1707 = vmatprep.subr.mxu0 0.0
  %1708 = vmatpush1.msra.mxu0 0.0
  %1709 = vmatprep.subr.mxu0 0.0
  %1710 = vmatpush1.msra.mxu0 0.0
  %1711 = vmatprep.subr.mxu0 0.0
  %1712 = vmatpush1.msra.mxu0 0.0
  %1713 = vmatprep.subr.mxu0 0.0
  %1714 = vmatpush1.msra.mxu0 0.0
  %1715 = vmatprep.subr.mxu0 0.0
  %1716 = vmatpush1.msra.mxu0 0.0
  %1717 = vmatprep.subr.mxu0 0.0
  %1718 = vmatpush1.msra.mxu0 0.0
  %1719 = vmatprep.subr.mxu0 0.0
  %1720 = vmatpush1.msra.mxu0 0.0
  %1721 = vmatprep.subr.mxu0 0.0
  %1722 = vmatpush1.msra.mxu0 0.0
  %1723 = vmatprep.subr.mxu0 0.0
  %1724 = vmatpush1.msra.mxu0 0.0
  %1725 = vmatprep.subr.mxu0 0.0
  %1726 = vmatpush1.msra.mxu0 0.0
  %1727 = vmatprep.subr.mxu0 0.0
  %1728 = vmatpush1.msra.mxu0 0.0
  %1729 = vmatprep.subr.mxu0 0.0
  %1730 = vmatpush1.msra.mxu0 0.0
  %1731 = vmatprep.subr.mxu0 0.0
  %1732 = vmatpush1.msra.mxu0 0.0
  %1733 = vmatprep.subr.mxu0 0.0
  %1734 = vmatpush1.msra.mxu0 0.0
  %1735 = vmatprep.subr.mxu0 0.0
  %1736 = vmatpush1.msra.mxu0 0.0
  %1737 = vmatprep.subr.mxu0 0.0
  %1738 = vmatpush1.msra.mxu0 0.0
  %1739 = vmatprep.subr.mxu0 0.0
  %1740 = vmatpush1.msra.mxu0 0.0
  %1741 = vmatprep.subr.mxu0 0.0
  %1742 = vmatpush1.msra.mxu0 0.0
  %1743 = vmatprep.subr.mxu0 0.0
  %1744 = vmatpush1.msra.mxu0 0.0
  %1745 = vmatprep.subr.mxu0 0.0
  %1746 = vmatpush1.msra.mxu0 0.0
  %1747 = vmatprep.subr.mxu0 0.0
  %1748 = vmatpush1.msra.mxu0 0.0
  %1749 = vmatprep.subr.mxu0 0.0
  %1750 = vmatpush1.msra.mxu0 0.0
  %1751 = vmatprep.subr.mxu0 0.0
  %1752 = vmatpush1.msra.mxu0 0.0
  %1753 = vmatprep.subr.mxu0 0.0
  %1754 = vmatpush1.msra.mxu0 0.0
  %1755 = vmatprep.subr.mxu0 0.0
  %1756 = vmatpush1.msra.mxu0 0.0
  %1757 = vmatprep.subr.mxu0 0.0
  %1758 = vmatpush1.msra.mxu0 0.0
  %1759 = vmatprep.subr.mxu0 0.0
  %1760 = vmatpush1.msra.mxu0 0.0
  %1761 = vmatprep.subr.mxu0 0.0
  %1762 = vmatpush1.msra.mxu0 0.0
  %1763 = vmatprep.subr.mxu0 0.0
  %1764 = vmatpush1.msra.mxu0 0.0
  %1765 = vmatprep.mubr.f32.mxu0 0.0
  %v1766 = vand.u32 %v1507, 4294901760
  %v1767 = vsub.f32 %v1507, %v1766
  %1768 = vmatmul.mubr.f32.gmra.mrb[0].mxu0 %v1767
  %v1769 = vpop.f32.mrb[0].mxu0
  %v1770 = vadd.f32 %v1686, %v1769
  %v1771 = vpop.f32.mrb[0].mxu0
  %1772 = vmatprep.mubr.f32.mxu0 0.0
  %v1773 = vand.u32 %v1510, 4294901760
  %v1774 = vsub.f32 %v1510, %v1773
  %1775 = vmatmul.mubr.f32.gmra.mrb[0].mxu0 %v1774
  %v1776 = vpop.f32.mrb[0].mxu0
  %v1777 = vadd.f32 %v1692, %v1776
  %v1778 = vpop.f32.mrb[0].mxu0
  %1779 = vdwg.mxu0
  %1780 = vmatprep.subr.mxu0 0.0
  %v1781 = vand.u32 %v1488, 4294901760
  %1782 = vmatpush1.msra.mxu0 %v1781
  %1783 = vmatprep.subr.mxu0 0.0
  %v1784 = vand.u32 %v1489, 4294901760
  %1785 = vmatpush1.msra.mxu0 %v1784
  %1786 = vmatprep.subr.mxu0 0.0
  %v1787 = vand.u32 %v1513, 4294901760
  %1788 = vmatpush1.msra.mxu0 %v1787
  %1789 = vmatprep.subr.mxu0 0.0
  %1790 = vmatpush1.msra.mxu0 0.0
  %1791 = vmatprep.subr.mxu0 0.0
  %1792 = vmatpush1.msra.mxu0 0.0
  %1793 = vmatprep.subr.mxu0 0.0
  %1794 = vmatpush1.msra.mxu0 0.0
  %1795 = vmatprep.subr.mxu0 0.0
  %1796 = vmatpush1.msra.mxu0 0.0
  %1797 = vmatprep.subr.mxu0 0.0
  %1798 = vmatpush1.msra.mxu0 0.0
  %1799 = vmatprep.subr.mxu0 0.0
  %1800 = vmatpush1.msra.mxu0 0.0
  %1801 = vmatprep.subr.mxu0 0.0
  %1802 = vmatpush1.msra.mxu0 0.0
  %1803 = vmatprep.subr.mxu0 0.0
  %1804 = vmatpush1.msra.mxu0 0.0
  %1805 = vmatprep.subr.mxu0 0.0
  %1806 = vmatpush1.msra.mxu0 0.0
  %1807 = vmatprep.subr.mxu0 0.0
  %1808 = vmatpush1.msra.mxu0 0.0
  %1809 = vmatprep.subr.mxu0 0.0
  %1810 = vmatpush1.msra.mxu0 0.0
  %1811 = vmatprep.subr.mxu0 0.0
  %1812 = vmatpush1.msra.mxu0 0.0
  %1813 = vmatprep.subr.mxu0 0.0
  %1814 = vmatpush1.msra.mxu0 0.0
  %1815 = vmatprep.subr.mxu0 0.0
  %1816 = vmatpush1.msra.mxu0 0.0
  %1817 = vmatprep.subr.mxu0 0.0
  %1818 = vmatpush1.msra.mxu0 0.0
  %1819 = vmatprep.subr.mxu0 0.0
  %1820 = vmatpush1.msra.mxu0 0.0
  %1821 = vmatprep.subr.mxu0 0.0
  %1822 = vmatpush1.msra.mxu0 0.0
  %1823 = vmatprep.subr.mxu0 0.0
  %1824 = vmatpush1.msra.mxu0 0.0
  %1825 = vmatprep.subr.mxu0 0.0
  %1826 = vmatpush1.msra.mxu0 0.0
  %1827 = vmatprep.subr.mxu0 0.0
  %1828 = vmatpush1.msra.mxu0 0.0
  %1829 = vmatprep.subr.mxu0 0.0
  %1830 = vmatpush1.msra.mxu0 0.0
  %1831 = vmatprep.subr.mxu0 0.0
  %1832 = vmatpush1.msra.mxu0 0.0
  %1833 = vmatprep.subr.mxu0 0.0
  %1834 = vmatpush1.msra.mxu0 0.0
  %1835 = vmatprep.subr.mxu0 0.0
  %1836 = vmatpush1.msra.mxu0 0.0
  %1837 = vmatprep.subr.mxu0 0.0
  %1838 = vmatpush1.msra.mxu0 0.0
  %1839 = vmatprep.subr.mxu0 0.0
  %1840 = vmatpush1.msra.mxu0 0.0
  %1841 = vmatprep.subr.mxu0 0.0
  %1842 = vmatpush1.msra.mxu0 0.0
  %1843 = vmatprep.subr.mxu0 0.0
  %1844 = vmatpush1.msra.mxu0 0.0
  %1845 = vmatprep.subr.mxu0 0.0
  %1846 = vmatpush1.msra.mxu0 0.0
  %1847 = vmatprep.mubr.f32.mxu0 0.0
  %v1848 = vand.u32 %v1507, 4294901760
  %v1849 = vsub.f32 %v1507, %v1848
  %v1850 = vand.u32 %v1849, 4294901760
  %1851 = vmatmul.mubr.f32.gmra.mrb[0].mxu0 %v1850
  %v1852 = vpop.f32.mrb[0].mxu0
  %v1853 = vadd.f32 %v1770, %v1852
  %v1854 = vpop.f32.mrb[0].mxu0
  %1855 = vmatprep.mubr.f32.mxu0 0.0
  %v1856 = vand.u32 %v1510, 4294901760
  %v1857 = vsub.f32 %v1510, %v1856
  %v1858 = vand.u32 %v1857, 4294901760
  %1859 = vmatmul.mubr.f32.gmra.mrb[0].mxu0 %v1858
  %v1860 = vpop.f32.mrb[0].mxu0
  %v1861 = vadd.f32 %v1777, %v1860
  %v1862 = vpop.f32.mrb[0].mxu0
  %1863 = vdwg.mxu0
  %1864 = vmatprep.subr.mxu0 0.0
  %v1865 = vand.u32 %v1488, 4294901760
  %v1866 = vsub.f32 %v1488, %v1865
  %v1867 = vand.u32 %v1866, 4294901760
  %1868 = vmatpush1.msra.mxu0 %v1867
  %1869 = vmatprep.subr.mxu0 0.0
  %v1870 = vand.u32 %v1489, 4294901760
  %v1871 = vsub.f32 %v1489, %v1870
  %v1872 = vand.u32 %v1871, 4294901760
  %1873 = vmatpush1.msra.mxu0 %v1872
  %1874 = vmatprep.subr.mxu0 0.0
  %v1875 = vand.u32 %v1513, 4294901760
  %v1876 = vsub.f32 %v1513, %v1875
  %v1877 = vand.u32 %v1876, 4294901760
  %1878 = vmatpush1.msra.mxu0 %v1877
  %1879 = vmatprep.subr.mxu0 0.0
  %1880 = vmatpush1.msra.mxu0 0.0
  %1881 = vmatprep.subr.mxu0 0.0
  %1882 = vmatpush1.msra.mxu0 0.0
  %1883 = vmatprep.subr.mxu0 0.0
  %1884 = vmatpush1.msra.mxu0 0.0
  %1885 = vmatprep.subr.mxu0 0.0
  %1886 = vmatpush1.msra.mxu0 0.0
  %1887 = vmatprep.subr.mxu0 0.0
  %1888 = vmatpush1.msra.mxu0 0.0
  %1889 = vmatprep.subr.mxu0 0.0
  %1890 = vmatpush1.msra.mxu0 0.0
  %1891 = vmatprep.subr.mxu0 0.0
  %1892 = vmatpush1.msra.mxu0 0.0
  %1893 = vmatprep.subr.mxu0 0.0
  %1894 = vmatpush1.msra.mxu0 0.0
  %1895 = vmatprep.subr.mxu0 0.0
  %1896 = vmatpush1.msra.mxu0 0.0
  %1897 = vmatprep.subr.mxu0 0.0
  %1898 = vmatpush1.msra.mxu0 0.0
  %1899 = vmatprep.subr.mxu0 0.0
  %1900 = vmatpush1.msra.mxu0 0.0
  %1901 = vmatprep.subr.mxu0 0.0
  %1902 = vmatpush1.msra.mxu0 0.0
  %1903 = vmatprep.subr.mxu0 0.0
  %1904 = vmatpush1.msra.mxu0 0.0
  %1905 = vmatprep.subr.mxu0 0.0
  %1906 = vmatpush1.msra.mxu0 0.0
  %1907 = vmatprep.subr.mxu0 0.0
  %1908 = vmatpush1.msra.mxu0 0.0
  %1909 = vmatprep.subr.mxu0 0.0
  %1910 = vmatpush1.msra.mxu0 0.0
  %1911 = vmatprep.subr.mxu0 0.0
  %1912 = vmatpush1.msra.mxu0 0.0
  %1913 = vmatprep.subr.mxu0 0.0
  %1914 = vmatpush1.msra.mxu0 0.0
  %1915 = vmatprep.subr.mxu0 0.0
  %1916 = vmatpush1.msra.mxu0 0.0
  %1917 = vmatprep.subr.mxu0 0.0
  %1918 = vmatpush1.msra.mxu0 0.0
  %1919 = vmatprep.subr.mxu0 0.0
  %1920 = vmatpush1.msra.mxu0 0.0
  %1921 = vmatprep.subr.mxu0 0.0
  %1922 = vmatpush1.msra.mxu0 0.0
  %1923 = vmatprep.subr.mxu0 0.0
  %1924 = vmatpush1.msra.mxu0 0.0
  %1925 = vmatprep.subr.mxu0 0.0
  %1926 = vmatpush1.msra.mxu0 0.0
  %1927 = vmatprep.subr.mxu0 0.0
  %1928 = vmatpush1.msra.mxu0 0.0
  %1929 = vmatprep.subr.mxu0 0.0
  %1930 = vmatpush1.msra.mxu0 0.0
  %1931 = vmatprep.subr.mxu0 0.0
  %1932 = vmatpush1.msra.mxu0 0.0
  %1933 = vmatprep.subr.mxu0 0.0
  %1934 = vmatpush1.msra.mxu0 0.0
  %1935 = vmatprep.subr.mxu0 0.0
  %1936 = vmatpush1.msra.mxu0 0.0
  %1937 = vmatprep.mubr.f32.mxu0 0.0
  %v1938 = vand.u32 %v1507, 4294901760
  %1939 = vmatmul.mubr.f32.gmra.mrb[0].mxu0 %v1938
  %v1940 = vpop.f32.mrb[0].mxu0
  %v1941 = vadd.f32 %v1853, %v1940
  %v1942 = vpop.f32.mrb[0].mxu0
  %1943 = vmatprep.mubr.f32.mxu0 0.0
  %v1944 = vand.u32 %v1510, 4294901760
  %1945 = vmatmul.mubr.f32.gmra.mrb[0].mxu0 %v1944
  %v1946 = vpop.f32.mrb[0].mxu0
  %v1947 = vadd.f32 %v1861, %v1946
  %v1948 = vpop.f32.mrb[0].mxu0
  %1949 = vdwg.mxu0
  %1950 = vmatprep.subr.mxu0 0.0
  %v1951 = vand.u32 %v1488, 4294901760
  %1952 = vmatpush1.msra.mxu0 %v1951
  %1953 = vmatprep.subr.mxu0 0.0
  %v1954 = vand.u32 %v1489, 4294901760
  %1955 = vmatpush1.msra.mxu0 %v1954
  %1956 = vmatprep.subr.mxu0 0.0
  %v1957 = vand.u32 %v1513, 4294901760
  %1958 = vmatpush1.msra.mxu0 %v1957
  %1959 = vmatprep.subr.mxu0 0.0
  %1960 = vmatpush1.msra.mxu0 0.0
  %1961 = vmatprep.subr.mxu0 0.0
  %1962 = vmatpush1.msra.mxu0 0.0
  %1963 = vmatprep.subr.mxu0 0.0
  %1964 = vmatpush1.msra.mxu0 0.0
  %1965 = vmatprep.subr.mxu0 0.0
  %1966 = vmatpush1.msra.mxu0 0.0
  %1967 = vmatprep.subr.mxu0 0.0
  %1968 = vmatpush1.msra.mxu0 0.0
  %1969 = vmatprep.subr.mxu0 0.0
  %1970 = vmatpush1.msra.mxu0 0.0
  %1971 = vmatprep.subr.mxu0 0.0
  %1972 = vmatpush1.msra.mxu0 0.0
  %1973 = vmatprep.subr.mxu0 0.0
  %1974 = vmatpush1.msra.mxu0 0.0
  %1975 = vmatprep.subr.mxu0 0.0
  %1976 = vmatpush1.msra.mxu0 0.0
  %1977 = vmatprep.subr.mxu0 0.0
  %1978 = vmatpush1.msra.mxu0 0.0
  %1979 = vmatprep.subr.mxu0 0.0
  %1980 = vmatpush1.msra.mxu0 0.0
  %1981 = vmatprep.subr.mxu0 0.0
  %1982 = vmatpush1.msra.mxu0 0.0
  %1983 = vmatprep.subr.mxu0 0.0
  %1984 = vmatpush1.msra.mxu0 0.0
  %1985 = vmatprep.subr.mxu0 0.0
  %1986 = vmatpush1.msra.mxu0 0.0
  %1987 = vmatprep.subr.mxu0 0.0
  %1988 = vmatpush1.msra.mxu0 0.0
  %1989 = vmatprep.subr.mxu0 0.0
  %1990 = vmatpush1.msra.mxu0 0.0
  %1991 = vmatprep.subr.mxu0 0.0
  %1992 = vmatpush1.msra.mxu0 0.0
  %1993 = vmatprep.subr.mxu0 0.0
  %1994 = vmatpush1.msra.mxu0 0.0
  %1995 = vmatprep.subr.mxu0 0.0
  %1996 = vmatpush1.msra.mxu0 0.0
  %1997 = vmatprep.subr.mxu0 0.0
  %1998 = vmatpush1.msra.mxu0 0.0
  %1999 = vmatprep.subr.mxu0 0.0
  %2000 = vmatpush1.msra.mxu0 0.0
  %2001 = vmatprep.subr.mxu0 0.0
  %2002 = vmatpush1.msra.mxu0 0.0
  %2003 = vmatprep.subr.mxu0 0.0
  %2004 = vmatpush1.msra.mxu0 0.0
  %2005 = vmatprep.subr.mxu0 0.0
  %2006 = vmatpush1.msra.mxu0 0.0
  %2007 = vmatprep.subr.mxu0 0.0
  %2008 = vmatpush1.msra.mxu0 0.0
  %2009 = vmatprep.subr.mxu0 0.0
  %2010 = vmatpush1.msra.mxu0 0.0
  %2011 = vmatprep.subr.mxu0 0.0
  %2012 = vmatpush1.msra.mxu0 0.0
  %2013 = vmatprep.subr.mxu0 0.0
  %2014 = vmatpush1.msra.mxu0 0.0
  %2015 = vmatprep.subr.mxu0 0.0
  %2016 = vmatpush1.msra.mxu0 0.0
  %2017 = vmatprep.mubr.f32.mxu0 0.0
  %v2018 = vand.u32 %v1507, 4294901760
  %2019 = vmatmul.mubr.f32.gmra.mrb[0].mxu0 %v2018
  %v2020 = vpop.f32.mrb[0].mxu0
  %v2021 = vadd.f32 %v1941, %v2020
  %v2022 = vpop.f32.mrb[0].mxu0
  %2023 = vmatprep.mubr.f32.mxu0 0.0
  %v2024 = vand.u32 %v1510, 4294901760
  %2025 = vmatmul.mubr.f32.gmra.mrb[0].mxu0 %v2024
  %v2026 = vpop.f32.mrb[0].mxu0
  %v2027 = vadd.f32 %v1947, %v2026
  %v2028 = vpop.f32.mrb[0].mxu0
  %2029 = vdwg.mxu0
  %v2030 = vtanh.pop %v2021
  %v2031 = vtanh.pop %v2027
  %v2032 = vld [vmem:[%s7] sm:$0x3]
  %v2033 = vld [vmem:[%s8] sm:$0x3]
  %2035 = vset.pattern.permute.xlu0 0
  %2036 = vperm.xlu0 %2035, %v2033
  %v2037 = vpop.permute.xlu0 %2036
  %vm2039 = vcmask 80896
  %v2041 = vsel %vm2039, %v2032, 0
  %v2044 = vsel %vm874, %v2031, 0
  %2046 = vmatprep.subr.mxu0 0.0
  %v2047 = vand.u32 %v2030, 4294901760
  %2048 = vmatpush1.msra.mxu0 %v2047
  %2049 = vmatprep.subr.mxu0 0.0
  %v2050 = vand.u32 %v2044, 4294901760
  %2051 = vmatpush1.msra.mxu0 %v2050
  %2052 = vmatprep.subr.mxu0 0.0
  %2053 = vmatpush1.msra.mxu0 0.0
  %2054 = vmatprep.subr.mxu0 0.0
  %2055 = vmatpush1.msra.mxu0 0.0
  %2056 = vmatprep.subr.mxu0 0.0
  %2057 = vmatpush1.msra.mxu0 0.0
  %2058 = vmatprep.subr.mxu0 0.0
  %2059 = vmatpush1.msra.mxu0 0.0
  %2060 = vmatprep.subr.mxu0 0.0
  %2061 = vmatpush1.msra.mxu0 0.0
  %2062 = vmatprep.subr.mxu0 0.0
  %2063 = vmatpush1.msra.mxu0 0.0
  %2064 = vmatprep.subr.mxu0 0.0
  %2065 = vmatpush1.msra.mxu0 0.0
  %2066 = vmatprep.subr.mxu0 0.0
  %2067 = vmatpush1.msra.mxu0 0.0
  %2068 = vmatprep.subr.mxu0 0.0
  %2069 = vmatpush1.msra.mxu0 0.0
  %2070 = vmatprep.subr.mxu0 0.0
  %2071 = vmatpush1.msra.mxu0 0.0
  %2072 = vmatprep.subr.mxu0 0.0
  %2073 = vmatpush1.msra.mxu0 0.0
  %2074 = vmatprep.subr.mxu0 0.0
  %2075 = vmatpush1.msra.mxu0 0.0
  %2076 = vmatprep.subr.mxu0 0.0
  %2077 = vmatpush1.msra.mxu0 0.0
  %2078 = vmatprep.subr.mxu0 0.0
  %2079 = vmatpush1.msra.mxu0 0.0
  %2080 = vmatprep.subr.mxu0 0.0
  %2081 = vmatpush1.msra.mxu0 0.0
  %2082 = vmatprep.subr.mxu0 0.0
  %2083 = vmatpush1.msra.mxu0 0.0
  %2084 = vmatprep.subr.mxu0 0.0
  %2085 = vmatpush1.msra.mxu0 0.0
  %2086 = vmatprep.subr.mxu0 0.0
  %2087 = vmatpush1.msra.mxu0 0.0
  %2088 = vmatprep.subr.mxu0 0.0
  %2089 = vmatpush1.msra.mxu0 0.0
  %2090 = vmatprep.subr.mxu0 0.0
  %2091 = vmatpush1.msra.mxu0 0.0
  %2092 = vmatprep.subr.mxu0 0.0
  %2093 = vmatpush1.msra.mxu0 0.0
  %2094 = vmatprep.subr.mxu0 0.0
  %2095 = vmatpush1.msra.mxu0 0.0
  %2096 = vmatprep.subr.mxu0 0.0
  %2097 = vmatpush1.msra.mxu0 0.0
  %2098 = vmatprep.subr.mxu0 0.0
  %2099 = vmatpush1.msra.mxu0 0.0
  %2100 = vmatprep.subr.mxu0 0.0
  %2101 = vmatpush1.msra.mxu0 0.0
  %2102 = vmatprep.subr.mxu0 0.0
  %2103 = vmatpush1.msra.mxu0 0.0
  %2104 = vmatprep.subr.mxu0 0.0
  %2105 = vmatpush1.msra.mxu0 0.0
  %2106 = vmatprep.subr.mxu0 0.0
  %2107 = vmatpush1.msra.mxu0 0.0
  %2108 = vmatprep.subr.mxu0 0.0
  %2109 = vmatpush1.msra.mxu0 0.0
  %2110 = vmatprep.subr.mxu0 0.0
  %2111 = vmatpush1.msra.mxu0 0.0
  %2112 = vmatprep.mubr.f32.mxu0 0.0
  %v2113 = vand.u32 %v2041, 4294901760
  %v2114 = vsub.f32 %v2041, %v2113
  %v2115 = vand.u32 %v2114, 4294901760
  %v2116 = vsub.f32 %v2114, %v2115
  %v2117 = vand.u32 %v2116, 4294901760
  %2118 = vmatmul.mubr.f32.gmra.mrb[0].mxu0 %v2117
  %v2119 = vpop.f32.mrb[0].mxu0
  %v2120 = vadd.f32 %v2037, %v2119
  %v2121 = vpop.f32.mrb[0].mxu0
  %2122 = vdwg.mxu0
  %2123 = vmatprep.subr.mxu0 0.0
  %v2124 = vand.u32 %v2030, 4294901760
  %v2125 = vsub.f32 %v2030, %v2124
  %v2126 = vand.u32 %v2125, 4294901760
  %v2127 = vsub.f32 %v2125, %v2126
  %v2128 = vand.u32 %v2127, 4294901760
  %2129 = vmatpush1.msra.mxu0 %v2128
  %2130 = vmatprep.subr.mxu0 0.0
  %v2131 = vand.u32 %v2044, 4294901760
  %v2132 = vsub.f32 %v2044, %v2131
  %v2133 = vand.u32 %v2132, 4294901760
  %v2134 = vsub.f32 %v2132, %v2133
  %v2135 = vand.u32 %v2134, 4294901760
  %2136 = vmatpush1.msra.mxu0 %v2135
  %2137 = vmatprep.subr.mxu0 0.0
  %2138 = vmatpush1.msra.mxu0 0.0
  %2139 = vmatprep.subr.mxu0 0.0
  %2140 = vmatpush1.msra.mxu0 0.0
  %2141 = vmatprep.subr.mxu0 0.0
  %2142 = vmatpush1.msra.mxu0 0.0
  %2143 = vmatprep.subr.mxu0 0.0
  %2144 = vmatpush1.msra.mxu0 0.0
  %2145 = vmatprep.subr.mxu0 0.0
  %2146 = vmatpush1.msra.mxu0 0.0
  %2147 = vmatprep.subr.mxu0 0.0
  %2148 = vmatpush1.msra.mxu0 0.0
  %2149 = vmatprep.subr.mxu0 0.0
  %2150 = vmatpush1.msra.mxu0 0.0
  %2151 = vmatprep.subr.mxu0 0.0
  %2152 = vmatpush1.msra.mxu0 0.0
  %2153 = vmatprep.subr.mxu0 0.0
  %2154 = vmatpush1.msra.mxu0 0.0
  %2155 = vmatprep.subr.mxu0 0.0
  %2156 = vmatpush1.msra.mxu0 0.0
  %2157 = vmatprep.subr.mxu0 0.0
  %2158 = vmatpush1.msra.mxu0 0.0
  %2159 = vmatprep.subr.mxu0 0.0
  %2160 = vmatpush1.msra.mxu0 0.0
  %2161 = vmatprep.subr.mxu0 0.0
  %2162 = vmatpush1.msra.mxu0 0.0
  %2163 = vmatprep.subr.mxu0 0.0
  %2164 = vmatpush1.msra.mxu0 0.0
  %2165 = vmatprep.subr.mxu0 0.0
  %2166 = vmatpush1.msra.mxu0 0.0
  %2167 = vmatprep.subr.mxu0 0.0
  %2168 = vmatpush1.msra.mxu0 0.0
  %2169 = vmatprep.subr.mxu0 0.0
  %2170 = vmatpush1.msra.mxu0 0.0
  %2171 = vmatprep.subr.mxu0 0.0
  %2172 = vmatpush1.msra.mxu0 0.0
  %2173 = vmatprep.subr.mxu0 0.0
  %2174 = vmatpush1.msra.mxu0 0.0
  %2175 = vmatprep.subr.mxu0 0.0
  %2176 = vmatpush1.msra.mxu0 0.0
  %2177 = vmatprep.subr.mxu0 0.0
  %2178 = vmatpush1.msra.mxu0 0.0
  %2179 = vmatprep.subr.mxu0 0.0
  %2180 = vmatpush1.msra.mxu0 0.0
  %2181 = vmatprep.subr.mxu0 0.0
  %2182 = vmatpush1.msra.mxu0 0.0
  %2183 = vmatprep.subr.mxu0 0.0
  %2184 = vmatpush1.msra.mxu0 0.0
  %2185 = vmatprep.subr.mxu0 0.0
  %2186 = vmatpush1.msra.mxu0 0.0
  %2187 = vmatprep.subr.mxu0 0.0
  %2188 = vmatpush1.msra.mxu0 0.0
  %2189 = vmatprep.subr.mxu0 0.0
  %2190 = vmatpush1.msra.mxu0 0.0
  %2191 = vmatprep.subr.mxu0 0.0
  %2192 = vmatpush1.msra.mxu0 0.0
  %2193 = vmatprep.subr.mxu0 0.0
  %2194 = vmatpush1.msra.mxu0 0.0
  %2195 = vmatprep.subr.mxu0 0.0
  %2196 = vmatpush1.msra.mxu0 0.0
  %2197 = vmatprep.mubr.f32.mxu0 0.0
  %v2198 = vand.u32 %v2041, 4294901760
  %2199 = vmatmul.mubr.f32.gmra.mrb[0].mxu0 %v2198
  %v2200 = vpop.f32.mrb[0].mxu0
  %v2201 = vadd.f32 %v2120, %v2200
  %v2202 = vpop.f32.mrb[0].mxu0
  %2203 = vdwg.mxu0
  %2204 = vmatprep.subr.mxu0 0.0
  %v2205 = vand.u32 %v2030, 4294901760
  %v2206 = vsub.f32 %v2030, %v2205
  %2207 = vmatpush1.msra.mxu0 %v2206
  %2208 = vmatprep.subr.mxu0 0.0
  %v2209 = vand.u32 %v2044, 4294901760
  %v2210 = vsub.f32 %v2044, %v2209
  %2211 = vmatpush1.msra.mxu0 %v2210
  %2212 = vmatprep.subr.mxu0 0.0
  %2213 = vmatpush1.msra.mxu0 0.0
  %2214 = vmatprep.subr.mxu0 0.0
  %2215 = vmatpush1.msra.mxu0 0.0
  %2216 = vmatprep.subr.mxu0 0.0
  %2217 = vmatpush1.msra.mxu0 0.0
  %2218 = vmatprep.subr.mxu0 0.0
  %2219 = vmatpush1.msra.mxu0 0.0
  %2220 = vmatprep.subr.mxu0 0.0
  %2221 = vmatpush1.msra.mxu0 0.0
  %2222 = vmatprep.subr.mxu0 0.0
  %2223 = vmatpush1.msra.mxu0 0.0
  %2224 = vmatprep.subr.mxu0 0.0
  %2225 = vmatpush1.msra.mxu0 0.0
  %2226 = vmatprep.subr.mxu0 0.0
  %2227 = vmatpush1.msra.mxu0 0.0
  %2228 = vmatprep.subr.mxu0 0.0
  %2229 = vmatpush1.msra.mxu0 0.0
  %2230 = vmatprep.subr.mxu0 0.0
  %2231 = vmatpush1.msra.mxu0 0.0
  %2232 = vmatprep.subr.mxu0 0.0
  %2233 = vmatpush1.msra.mxu0 0.0
  %2234 = vmatprep.subr.mxu0 0.0
  %2235 = vmatpush1.msra.mxu0 0.0
  %2236 = vmatprep.subr.mxu0 0.0
  %2237 = vmatpush1.msra.mxu0 0.0
  %2238 = vmatprep.subr.mxu0 0.0
  %2239 = vmatpush1.msra.mxu0 0.0
  %2240 = vmatprep.subr.mxu0 0.0
  %2241 = vmatpush1.msra.mxu0 0.0
  %2242 = vmatprep.subr.mxu0 0.0
  %2243 = vmatpush1.msra.mxu0 0.0
  %2244 = vmatprep.subr.mxu0 0.0
  %2245 = vmatpush1.msra.mxu0 0.0
  %2246 = vmatprep.subr.mxu0 0.0
  %2247 = vmatpush1.msra.mxu0 0.0
  %2248 = vmatprep.subr.mxu0 0.0
  %2249 = vmatpush1.msra.mxu0 0.0
  %2250 = vmatprep.subr.mxu0 0.0
  %2251 = vmatpush1.msra.mxu0 0.0
  %2252 = vmatprep.subr.mxu0 0.0
  %2253 = vmatpush1.msra.mxu0 0.0
  %2254 = vmatprep.subr.mxu0 0.0
  %2255 = vmatpush1.msra.mxu0 0.0
  %2256 = vmatprep.subr.mxu0 0.0
  %2257 = vmatpush1.msra.mxu0 0.0
  %2258 = vmatprep.subr.mxu0 0.0
  %2259 = vmatpush1.msra.mxu0 0.0
  %2260 = vmatprep.subr.mxu0 0.0
  %2261 = vmatpush1.msra.mxu0 0.0
  %2262 = vmatprep.subr.mxu0 0.0
  %2263 = vmatpush1.msra.mxu0 0.0
  %2264 = vmatprep.subr.mxu0 0.0
  %2265 = vmatpush1.msra.mxu0 0.0
  %2266 = vmatprep.subr.mxu0 0.0
  %2267 = vmatpush1.msra.mxu0 0.0
  %2268 = vmatprep.subr.mxu0 0.0
  %2269 = vmatpush1.msra.mxu0 0.0
  %2270 = vmatprep.subr.mxu0 0.0
  %2271 = vmatpush1.msra.mxu0 0.0
  %2272 = vmatprep.mubr.f32.mxu0 0.0
  %v2273 = vand.u32 %v2041, 4294901760
  %v2274 = vsub.f32 %v2041, %v2273
  %2275 = vmatmul.mubr.f32.gmra.mrb[0].mxu0 %v2274
  %v2276 = vpop.f32.mrb[0].mxu0
  %v2277 = vadd.f32 %v2201, %v2276
  %v2278 = vpop.f32.mrb[0].mxu0
  %2279 = vdwg.mxu0
  %2280 = vmatprep.subr.mxu0 0.0
  %v2281 = vand.u32 %v2030, 4294901760
  %2282 = vmatpush1.msra.mxu0 %v2281
  %2283 = vmatprep.subr.mxu0 0.0
  %v2284 = vand.u32 %v2044, 4294901760
  %2285 = vmatpush1.msra.mxu0 %v2284
  %2286 = vmatprep.subr.mxu0 0.0
  %2287 = vmatpush1.msra.mxu0 0.0
  %2288 = vmatprep.subr.mxu0 0.0
  %2289 = vmatpush1.msra.mxu0 0.0
  %2290 = vmatprep.subr.mxu0 0.0
  %2291 = vmatpush1.msra.mxu0 0.0
  %2292 = vmatprep.subr.mxu0 0.0
  %2293 = vmatpush1.msra.mxu0 0.0
  %2294 = vmatprep.subr.mxu0 0.0
  %2295 = vmatpush1.msra.mxu0 0.0
  %2296 = vmatprep.subr.mxu0 0.0
  %2297 = vmatpush1.msra.mxu0 0.0
  %2298 = vmatprep.subr.mxu0 0.0
  %2299 = vmatpush1.msra.mxu0 0.0
  %2300 = vmatprep.subr.mxu0 0.0
  %2301 = vmatpush1.msra.mxu0 0.0
  %2302 = vmatprep.subr.mxu0 0.0
  %2303 = vmatpush1.msra.mxu0 0.0
  %2304 = vmatprep.subr.mxu0 0.0
  %2305 = vmatpush1.msra.mxu0 0.0
  %2306 = vmatprep.subr.mxu0 0.0
  %2307 = vmatpush1.msra.mxu0 0.0
  %2308 = vmatprep.subr.mxu0 0.0
  %2309 = vmatpush1.msra.mxu0 0.0
  %2310 = vmatprep.subr.mxu0 0.0
  %2311 = vmatpush1.msra.mxu0 0.0
  %2312 = vmatprep.subr.mxu0 0.0
  %2313 = vmatpush1.msra.mxu0 0.0
  %2314 = vmatprep.subr.mxu0 0.0
  %2315 = vmatpush1.msra.mxu0 0.0
  %2316 = vmatprep.subr.mxu0 0.0
  %2317 = vmatpush1.msra.mxu0 0.0
  %2318 = vmatprep.subr.mxu0 0.0
  %2319 = vmatpush1.msra.mxu0 0.0
  %2320 = vmatprep.subr.mxu0 0.0
  %2321 = vmatpush1.msra.mxu0 0.0
  %2322 = vmatprep.subr.mxu0 0.0
  %2323 = vmatpush1.msra.mxu0 0.0
  %2324 = vmatprep.subr.mxu0 0.0
  %2325 = vmatpush1.msra.mxu0 0.0
  %2326 = vmatprep.subr.mxu0 0.0
  %2327 = vmatpush1.msra.mxu0 0.0
  %2328 = vmatprep.subr.mxu0 0.0
  %2329 = vmatpush1.msra.mxu0 0.0
  %2330 = vmatprep.subr.mxu0 0.0
  %2331 = vmatpush1.msra.mxu0 0.0
  %2332 = vmatprep.subr.mxu0 0.0
  %2333 = vmatpush1.msra.mxu0 0.0
  %2334 = vmatprep.subr.mxu0 0.0
  %2335 = vmatpush1.msra.mxu0 0.0
  %2336 = vmatprep.subr.mxu0 0.0
  %2337 = vmatpush1.msra.mxu0 0.0
  %2338 = vmatprep.subr.mxu0 0.0
  %2339 = vmatpush1.msra.mxu0 0.0
  %2340 = vmatprep.subr.mxu0 0.0
  %2341 = vmatpush1.msra.mxu0 0.0
  %2342 = vmatprep.subr.mxu0 0.0
  %2343 = vmatpush1.msra.mxu0 0.0
  %2344 = vmatprep.subr.mxu0 0.0
  %2345 = vmatpush1.msra.mxu0 0.0
  %2346 = vmatprep.mubr.f32.mxu0 0.0
  %v2347 = vand.u32 %v2041, 4294901760
  %v2348 = vsub.f32 %v2041, %v2347
  %v2349 = vand.u32 %v2348, 4294901760
  %2350 = vmatmul.mubr.f32.gmra.mrb[0].mxu0 %v2349
  %v2351 = vpop.f32.mrb[0].mxu0
  %v2352 = vadd.f32 %v2277, %v2351
  %v2353 = vpop.f32.mrb[0].mxu0
  %2354 = vdwg.mxu0
  %2355 = vmatprep.subr.mxu0 0.0
  %v2356 = vand.u32 %v2030, 4294901760
  %v2357 = vsub.f32 %v2030, %v2356
  %v2358 = vand.u32 %v2357, 4294901760
  %2359 = vmatpush1.msra.mxu0 %v2358
  %2360 = vmatprep.subr.mxu0 0.0
  %v2361 = vand.u32 %v2044, 4294901760
  %v2362 = vsub.f32 %v2044, %v2361
  %v2363 = vand.u32 %v2362, 4294901760
  %2364 = vmatpush1.msra.mxu0 %v2363
  %2365 = vmatprep.subr.mxu0 0.0
  %2366 = vmatpush1.msra.mxu0 0.0
  %2367 = vmatprep.subr.mxu0 0.0
  %2368 = vmatpush1.msra.mxu0 0.0
  %2369 = vmatprep.subr.mxu0 0.0
  %2370 = vmatpush1.msra.mxu0 0.0
  %2371 = vmatprep.subr.mxu0 0.0
  %2372 = vmatpush1.msra.mxu0 0.0
  %2373 = vmatprep.subr.mxu0 0.0
  %2374 = vmatpush1.msra.mxu0 0.0
  %2375 = vmatprep.subr.mxu0 0.0
  %2376 = vmatpush1.msra.mxu0 0.0
  %2377 = vmatprep.subr.mxu0 0.0
  %2378 = vmatpush1.msra.mxu0 0.0
  %2379 = vmatprep.subr.mxu0 0.0
  %2380 = vmatpush1.msra.mxu0 0.0
  %2381 = vmatprep.subr.mxu0 0.0
  %2382 = vmatpush1.msra.mxu0 0.0
  %2383 = vmatprep.subr.mxu0 0.0
  %2384 = vmatpush1.msra.mxu0 0.0
  %2385 = vmatprep.subr.mxu0 0.0
  %2386 = vmatpush1.msra.mxu0 0.0
  %2387 = vmatprep.subr.mxu0 0.0
  %2388 = vmatpush1.msra.mxu0 0.0
  %2389 = vmatprep.subr.mxu0 0.0
  %2390 = vmatpush1.msra.mxu0 0.0
  %2391 = vmatprep.subr.mxu0 0.0
  %2392 = vmatpush1.msra.mxu0 0.0
  %2393 = vmatprep.subr.mxu0 0.0
  %2394 = vmatpush1.msra.mxu0 0.0
  %2395 = vmatprep.subr.mxu0 0.0
  %2396 = vmatpush1.msra.mxu0 0.0
  %2397 = vmatprep.subr.mxu0 0.0
  %2398 = vmatpush1.msra.mxu0 0.0
  %2399 = vmatprep.subr.mxu0 0.0
  %2400 = vmatpush1.msra.mxu0 0.0
  %2401 = vmatprep.subr.mxu0 0.0
  %2402 = vmatpush1.msra.mxu0 0.0
  %2403 = vmatprep.subr.mxu0 0.0
  %2404 = vmatpush1.msra.mxu0 0.0
  %2405 = vmatprep.subr.mxu0 0.0
  %2406 = vmatpush1.msra.mxu0 0.0
  %2407 = vmatprep.subr.mxu0 0.0
  %2408 = vmatpush1.msra.mxu0 0.0
  %2409 = vmatprep.subr.mxu0 0.0
  %2410 = vmatpush1.msra.mxu0 0.0
  %2411 = vmatprep.subr.mxu0 0.0
  %2412 = vmatpush1.msra.mxu0 0.0
  %2413 = vmatprep.subr.mxu0 0.0
  %2414 = vmatpush1.msra.mxu0 0.0
  %2415 = vmatprep.subr.mxu0 0.0
  %2416 = vmatpush1.msra.mxu0 0.0
  %2417 = vmatprep.subr.mxu0 0.0
  %2418 = vmatpush1.msra.mxu0 0.0
  %2419 = vmatprep.subr.mxu0 0.0
  %2420 = vmatpush1.msra.mxu0 0.0
  %2421 = vmatprep.subr.mxu0 0.0
  %2422 = vmatpush1.msra.mxu0 0.0
  %2423 = vmatprep.subr.mxu0 0.0
  %2424 = vmatpush1.msra.mxu0 0.0
  %2425 = vmatprep.mubr.f32.mxu0 0.0
  %v2426 = vand.u32 %v2041, 4294901760
  %2427 = vmatmul.mubr.f32.gmra.mrb[0].mxu0 %v2426
  %v2428 = vpop.f32.mrb[0].mxu0
  %v2429 = vadd.f32 %v2352, %v2428
  %v2430 = vpop.f32.mrb[0].mxu0
  %2431 = vdwg.mxu0
  %2432 = vmatprep.subr.mxu0 0.0
  %v2433 = vand.u32 %v2030, 4294901760
  %2434 = vmatpush1.msra.mxu0 %v2433
  %2435 = vmatprep.subr.mxu0 0.0
  %v2436 = vand.u32 %v2044, 4294901760
  %2437 = vmatpush1.msra.mxu0 %v2436
  %2438 = vmatprep.subr.mxu0 0.0
  %2439 = vmatpush1.msra.mxu0 0.0
  %2440 = vmatprep.subr.mxu0 0.0
  %2441 = vmatpush1.msra.mxu0 0.0
  %2442 = vmatprep.subr.mxu0 0.0
  %2443 = vmatpush1.msra.mxu0 0.0
  %2444 = vmatprep.subr.mxu0 0.0
  %2445 = vmatpush1.msra.mxu0 0.0
  %2446 = vmatprep.subr.mxu0 0.0
  %2447 = vmatpush1.msra.mxu0 0.0
  %2448 = vmatprep.subr.mxu0 0.0
  %2449 = vmatpush1.msra.mxu0 0.0
  %2450 = vmatprep.subr.mxu0 0.0
  %2451 = vmatpush1.msra.mxu0 0.0
  %2452 = vmatprep.subr.mxu0 0.0
  %2453 = vmatpush1.msra.mxu0 0.0
  %2454 = vmatprep.subr.mxu0 0.0
  %2455 = vmatpush1.msra.mxu0 0.0
  %2456 = vmatprep.subr.mxu0 0.0
  %2457 = vmatpush1.msra.mxu0 0.0
  %2458 = vmatprep.subr.mxu0 0.0
  %2459 = vmatpush1.msra.mxu0 0.0
  %2460 = vmatprep.subr.mxu0 0.0
  %2461 = vmatpush1.msra.mxu0 0.0
  %2462 = vmatprep.subr.mxu0 0.0
  %2463 = vmatpush1.msra.mxu0 0.0
  %2464 = vmatprep.subr.mxu0 0.0
  %2465 = vmatpush1.msra.mxu0 0.0
  %2466 = vmatprep.subr.mxu0 0.0
  %2467 = vmatpush1.msra.mxu0 0.0
  %2468 = vmatprep.subr.mxu0 0.0
  %2469 = vmatpush1.msra.mxu0 0.0
  %2470 = vmatprep.subr.mxu0 0.0
  %2471 = vmatpush1.msra.mxu0 0.0
  %2472 = vmatprep.subr.mxu0 0.0
  %2473 = vmatpush1.msra.mxu0 0.0
  %2474 = vmatprep.subr.mxu0 0.0
  %2475 = vmatpush1.msra.mxu0 0.0
  %2476 = vmatprep.subr.mxu0 0.0
  %2477 = vmatpush1.msra.mxu0 0.0
  %2478 = vmatprep.subr.mxu0 0.0
  %2479 = vmatpush1.msra.mxu0 0.0
  %2480 = vmatprep.subr.mxu0 0.0
  %2481 = vmatpush1.msra.mxu0 0.0
  %2482 = vmatprep.subr.mxu0 0.0
  %2483 = vmatpush1.msra.mxu0 0.0
  %2484 = vmatprep.subr.mxu0 0.0
  %2485 = vmatpush1.msra.mxu0 0.0
  %2486 = vmatprep.subr.mxu0 0.0
  %2487 = vmatpush1.msra.mxu0 0.0
  %2488 = vmatprep.subr.mxu0 0.0
  %2489 = vmatpush1.msra.mxu0 0.0
  %2490 = vmatprep.subr.mxu0 0.0
  %2491 = vmatpush1.msra.mxu0 0.0
  %2492 = vmatprep.subr.mxu0 0.0
  %2493 = vmatpush1.msra.mxu0 0.0
  %2494 = vmatprep.subr.mxu0 0.0
  %2495 = vmatpush1.msra.mxu0 0.0
  %2496 = vmatprep.subr.mxu0 0.0
  %2497 = vmatpush1.msra.mxu0 0.0
  %2498 = vmatprep.mubr.f32.mxu0 0.0
  %v2499 = vand.u32 %v2041, 4294901760
  %2500 = vmatmul.mubr.f32.gmra.mrb[0].mxu0 %v2499
  %v2501 = vpop.f32.mrb[0].mxu0
  %v2502 = vadd.f32 %v2429, %v2501
  %v2503 = vpop.f32.mrb[0].mxu0
  %2504 = vdwg.mxu0
  %v2505 = vtanh.pop %v2502
  %v2506 = vld [vmem:[%s9] sm:$0xff]
  %v2507 = vld [vmem:[%s9 + $0x8] sm:$0x3]
  %v2508 = vld [vmem:[%s10] sm:$0xff]
  %v2509 = vld [vmem:[%s10 + $0x8] sm:$0x3]
  %2511 = vset.pattern.permute.xlu0 0
  %2512 = vperm.xlu0 %2511, %v2508
  %v2513 = vpop.permute.xlu0 %2512
  %2516 = vset.pattern.permute.xlu0 0
  %2517 = vperm.xlu0 %2516, %v2509
  %v2518 = vpop.permute.xlu0 %2517
  %vm2520 = vcmask 15360
  %v2522 = vsel %vm2520, %v2506, 0
  %v2525 = vsel %vm2520, %v2507, 0
  %v2528 = vsel %vm874, %v2505, 0
  %2530 = vmatprep.subr.mxu0 0.0
  %v2531 = vand.u32 %v2528, 4294901760
  %2532 = vmatpush1.msra.mxu0 %v2531
  %2533 = vmatprep.subr.mxu0 0.0
  %2534 = vmatpush1.msra.mxu0 0.0
  %2535 = vmatprep.subr.mxu0 0.0
  %2536 = vmatpush1.msra.mxu0 0.0
  %2537 = vmatprep.subr.mxu0 0.0
  %2538 = vmatpush1.msra.mxu0 0.0
  %2539 = vmatprep.subr.mxu0 0.0
  %2540 = vmatpush1.msra.mxu0 0.0
  %2541 = vmatprep.subr.mxu0 0.0
  %2542 = vmatpush1.msra.mxu0 0.0
  %2543 = vmatprep.subr.mxu0 0.0
  %2544 = vmatpush1.msra.mxu0 0.0
  %2545 = vmatprep.subr.mxu0 0.0
  %2546 = vmatpush1.msra.mxu0 0.0
  %2547 = vmatprep.subr.mxu0 0.0
  %2548 = vmatpush1.msra.mxu0 0.0
  %2549 = vmatprep.subr.mxu0 0.0
  %2550 = vmatpush1.msra.mxu0 0.0
  %2551 = vmatprep.subr.mxu0 0.0
  %2552 = vmatpush1.msra.mxu0 0.0
  %2553 = vmatprep.subr.mxu0 0.0
  %2554 = vmatpush1.msra.mxu0 0.0
  %2555 = vmatprep.subr.mxu0 0.0
  %2556 = vmatpush1.msra.mxu0 0.0
  %2557 = vmatprep.subr.mxu0 0.0
  %2558 = vmatpush1.msra.mxu0 0.0
  %2559 = vmatprep.subr.mxu0 0.0
  %2560 = vmatpush1.msra.mxu0 0.0
  %2561 = vmatprep.subr.mxu0 0.0
  %2562 = vmatpush1.msra.mxu0 0.0
  %2563 = vmatprep.subr.mxu0 0.0
  %2564 = vmatpush1.msra.mxu0 0.0
  %2565 = vmatprep.subr.mxu0 0.0
  %2566 = vmatpush1.msra.mxu0 0.0
  %2567 = vmatprep.subr.mxu0 0.0
  %2568 = vmatpush1.msra.mxu0 0.0
  %2569 = vmatprep.subr.mxu0 0.0
  %2570 = vmatpush1.msra.mxu0 0.0
  %2571 = vmatprep.subr.mxu0 0.0
  %2572 = vmatpush1.msra.mxu0 0.0
  %2573 = vmatprep.subr.mxu0 0.0
  %2574 = vmatpush1.msra.mxu0 0.0
  %2575 = vmatprep.subr.mxu0 0.0
  %2576 = vmatpush1.msra.mxu0 0.0
  %2577 = vmatprep.subr.mxu0 0.0
  %2578 = vmatpush1.msra.mxu0 0.0
  %2579 = vmatprep.subr.mxu0 0.0
  %2580 = vmatpush1.msra.mxu0 0.0
  %2581 = vmatprep.subr.mxu0 0.0
  %2582 = vmatpush1.msra.mxu0 0.0
  %2583 = vmatprep.subr.mxu0 0.0
  %2584 = vmatpush1.msra.mxu0 0.0
  %2585 = vmatprep.subr.mxu0 0.0
  %2586 = vmatpush1.msra.mxu0 0.0
  %2587 = vmatprep.subr.mxu0 0.0
  %2588 = vmatpush1.msra.mxu0 0.0
  %2589 = vmatprep.subr.mxu0 0.0
  %2590 = vmatpush1.msra.mxu0 0.0
  %2591 = vmatprep.subr.mxu0 0.0
  %2592 = vmatpush1.msra.mxu0 0.0
  %2593 = vmatprep.subr.mxu0 0.0
  %2594 = vmatpush1.msra.mxu0 0.0
  %2595 = vmatprep.mubr.f32.mxu0 0.0
  %v2596 = vand.u32 %v2522, 4294901760
  %v2597 = vsub.f32 %v2522, %v2596
  %v2598 = vand.u32 %v2597, 4294901760
  %v2599 = vsub.f32 %v2597, %v2598
  %v2600 = vand.u32 %v2599, 4294901760
  %2601 = vmatmul.mubr.f32.gmra.mrb[0].mxu0 %v2600
  %v2602 = vpop.f32.mrb[0].mxu0
  %v2603 = vadd.f32 %v2513, %v2602
  %v2604 = vpop.f32.mrb[0].mxu0
  %2605 = vmatprep.mubr.f32.mxu0 0.0
  %v2606 = vand.u32 %v2525, 4294901760
  %v2607 = vsub.f32 %v2525, %v2606
  %v2608 = vand.u32 %v2607, 4294901760
  %v2609 = vsub.f32 %v2607, %v2608
  %v2610 = vand.u32 %v2609, 4294901760
  %2611 = vmatmul.mubr.f32.gmra.mrb[0].mxu0 %v2610
  %v2612 = vpop.f32.mrb[0].mxu0
  %v2613 = vadd.f32 %v2518, %v2612
  %v2614 = vpop.f32.mrb[0].mxu0
  %2615 = vdwg.mxu0
  %2616 = vmatprep.subr.mxu0 0.0
  %v2617 = vand.u32 %v2528, 4294901760
  %v2618 = vsub.f32 %v2528, %v2617
  %v2619 = vand.u32 %v2618, 4294901760
  %v2620 = vsub.f32 %v2618, %v2619
  %v2621 = vand.u32 %v2620, 4294901760
  %2622 = vmatpush1.msra.mxu0 %v2621
  %2623 = vmatprep.subr.mxu0 0.0
  %2624 = vmatpush1.msra.mxu0 0.0
  %2625 = vmatprep.subr.mxu0 0.0
  %2626 = vmatpush1.msra.mxu0 0.0
  %2627 = vmatprep.subr.mxu0 0.0
  %2628 = vmatpush1.msra.mxu0 0.0
  %2629 = vmatprep.subr.mxu0 0.0
  %2630 = vmatpush1.msra.mxu0 0.0
  %2631 = vmatprep.subr.mxu0 0.0
  %2632 = vmatpush1.msra.mxu0 0.0
  %2633 = vmatprep.subr.mxu0 0.0
  %2634 = vmatpush1.msra.mxu0 0.0
  %2635 = vmatprep.subr.mxu0 0.0
  %2636 = vmatpush1.msra.mxu0 0.0
  %2637 = vmatprep.subr.mxu0 0.0
  %2638 = vmatpush1.msra.mxu0 0.0
  %2639 = vmatprep.subr.mxu0 0.0
  %2640 = vmatpush1.msra.mxu0 0.0
  %2641 = vmatprep.subr.mxu0 0.0
  %2642 = vmatpush1.msra.mxu0 0.0
  %2643 = vmatprep.subr.mxu0 0.0
  %2644 = vmatpush1.msra.mxu0 0.0
  %2645 = vmatprep.subr.mxu0 0.0
  %2646 = vmatpush1.msra.mxu0 0.0
  %2647 = vmatprep.subr.mxu0 0.0
  %2648 = vmatpush1.msra.mxu0 0.0
  %2649 = vmatprep.subr.mxu0 0.0
  %2650 = vmatpush1.msra.mxu0 0.0
  %2651 = vmatprep.subr.mxu0 0.0
  %2652 = vmatpush1.msra.mxu0 0.0
  %2653 = vmatprep.subr.mxu0 0.0
  %2654 = vmatpush1.msra.mxu0 0.0
  %2655 = vmatprep.subr.mxu0 0.0
  %2656 = vmatpush1.msra.mxu0 0.0
  %2657 = vmatprep.subr.mxu0 0.0
  %2658 = vmatpush1.msra.mxu0 0.0
  %2659 = vmatprep.subr.mxu0 0.0
  %2660 = vmatpush1.msra.mxu0 0.0
  %2661 = vmatprep.subr.mxu0 0.0
  %2662 = vmatpush1.msra.mxu0 0.0
  %2663 = vmatprep.subr.mxu0 0.0
  %2664 = vmatpush1.msra.mxu0 0.0
  %2665 = vmatprep.subr.mxu0 0.0
  %2666 = vmatpush1.msra.mxu0 0.0
  %2667 = vmatprep.subr.mxu0 0.0
  %2668 = vmatpush1.msra.mxu0 0.0
  %2669 = vmatprep.subr.mxu0 0.0
  %2670 = vmatpush1.msra.mxu0 0.0
  %2671 = vmatprep.subr.mxu0 0.0
  %2672 = vmatpush1.msra.mxu0 0.0
  %2673 = vmatprep.subr.mxu0 0.0
  %2674 = vmatpush1.msra.mxu0 0.0
  %2675 = vmatprep.subr.mxu0 0.0
  %2676 = vmatpush1.msra.mxu0 0.0
  %2677 = vmatprep.subr.mxu0 0.0
  %2678 = vmatpush1.msra.mxu0 0.0
  %2679 = vmatprep.subr.mxu0 0.0
  %2680 = vmatpush1.msra.mxu0 0.0
  %2681 = vmatprep.subr.mxu0 0.0
  %2682 = vmatpush1.msra.mxu0 0.0
  %2683 = vmatprep.subr.mxu0 0.0
  %2684 = vmatpush1.msra.mxu0 0.0
  %2685 = vmatprep.mubr.f32.mxu0 0.0
  %v2686 = vand.u32 %v2522, 4294901760
  %2687 = vmatmul.mubr.f32.gmra.mrb[0].mxu0 %v2686
  %v2688 = vpop.f32.mrb[0].mxu0
  %v2689 = vadd.f32 %v2603, %v2688
  %v2690 = vpop.f32.mrb[0].mxu0
  %2691 = vmatprep.mubr.f32.mxu0 0.0
  %v2692 = vand.u32 %v2525, 4294901760
  %2693 = vmatmul.mubr.f32.gmra.mrb[0].mxu0 %v2692
  %v2694 = vpop.f32.mrb[0].mxu0
  %v2695 = vadd.f32 %v2613, %v2694
  %v2696 = vpop.f32.mrb[0].mxu0
  %2697 = vdwg.mxu0
  %2698 = vmatprep.subr.mxu0 0.0
  %v2699 = vand.u32 %v2528, 4294901760
  %v2700 = vsub.f32 %v2528, %v2699
  %2701 = vmatpush1.msra.mxu0 %v2700
  %2702 = vmatprep.subr.mxu0 0.0
  %2703 = vmatpush1.msra.mxu0 0.0
  %2704 = vmatprep.subr.mxu0 0.0
  %2705 = vmatpush1.msra.mxu0 0.0
  %2706 = vmatprep.subr.mxu0 0.0
  %2707 = vmatpush1.msra.mxu0 0.0
  %2708 = vmatprep.subr.mxu0 0.0
  %2709 = vmatpush1.msra.mxu0 0.0
  %2710 = vmatprep.subr.mxu0 0.0
  %2711 = vmatpush1.msra.mxu0 0.0
  %2712 = vmatprep.subr.mxu0 0.0
  %2713 = vmatpush1.msra.mxu0 0.0
  %2714 = vmatprep.subr.mxu0 0.0
  %2715 = vmatpush1.msra.mxu0 0.0
  %2716 = vmatprep.subr.mxu0 0.0
  %2717 = vmatpush1.msra.mxu0 0.0
  %2718 = vmatprep.subr.mxu0 0.0
  %2719 = vmatpush1.msra.mxu0 0.0
  %2720 = vmatprep.subr.mxu0 0.0
  %2721 = vmatpush1.msra.mxu0 0.0
  %2722 = vmatprep.subr.mxu0 0.0
  %2723 = vmatpush1.msra.mxu0 0.0
  %2724 = vmatprep.subr.mxu0 0.0
  %2725 = vmatpush1.msra.mxu0 0.0
  %2726 = vmatprep.subr.mxu0 0.0
  %2727 = vmatpush1.msra.mxu0 0.0
  %2728 = vmatprep.subr.mxu0 0.0
  %2729 = vmatpush1.msra.mxu0 0.0
  %2730 = vmatprep.subr.mxu0 0.0
  %2731 = vmatpush1.msra.mxu0 0.0
  %2732 = vmatprep.subr.mxu0 0.0
  %2733 = vmatpush1.msra.mxu0 0.0
  %2734 = vmatprep.subr.mxu0 0.0
  %2735 = vmatpush1.msra.mxu0 0.0
  %2736 = vmatprep.subr.mxu0 0.0
  %2737 = vmatpush1.msra.mxu0 0.0
  %2738 = vmatprep.subr.mxu0 0.0
  %2739 = vmatpush1.msra.mxu0 0.0
  %2740 = vmatprep.subr.mxu0 0.0
  %2741 = vmatpush1.msra.mxu0 0.0
  %2742 = vmatprep.subr.mxu0 0.0
  %2743 = vmatpush1.msra.mxu0 0.0
  %2744 = vmatprep.subr.mxu0 0.0
  %2745 = vmatpush1.msra.mxu0 0.0
  %2746 = vmatprep.subr.mxu0 0.0
  %2747 = vmatpush1.msra.mxu0 0.0
  %2748 = vmatprep.subr.mxu0 0.0
  %2749 = vmatpush1.msra.mxu0 0.0
  %2750 = vmatprep.subr.mxu0 0.0
  %2751 = vmatpush1.msra.mxu0 0.0
  %2752 = vmatprep.subr.mxu0 0.0
  %2753 = vmatpush1.msra.mxu0 0.0
  %2754 = vmatprep.subr.mxu0 0.0
  %2755 = vmatpush1.msra.mxu0 0.0
  %2756 = vmatprep.subr.mxu0 0.0
  %2757 = vmatpush1.msra.mxu0 0.0
  %2758 = vmatprep.subr.mxu0 0.0
  %2759 = vmatpush1.msra.mxu0 0.0
  %2760 = vmatprep.subr.mxu0 0.0
  %2761 = vmatpush1.msra.mxu0 0.0
  %2762 = vmatprep.subr.mxu0 0.0
  %2763 = vmatpush1.msra.mxu0 0.0
  %2764 = vmatprep.mubr.f32.mxu0 0.0
  %v2765 = vand.u32 %v2522, 4294901760
  %v2766 = vsub.f32 %v2522, %v2765
  %2767 = vmatmul.mubr.f32.gmra.mrb[0].mxu0 %v2766
  %v2768 = vpop.f32.mrb[0].mxu0
  %v2769 = vadd.f32 %v2689, %v2768
  %v2770 = vpop.f32.mrb[0].mxu0
  %2771 = vmatprep.mubr.f32.mxu0 0.0
  %v2772 = vand.u32 %v2525, 4294901760
  %v2773 = vsub.f32 %v2525, %v2772
  %2774 = vmatmul.mubr.f32.gmra.mrb[0].mxu0 %v2773
  %v2775 = vpop.f32.mrb[0].mxu0
  %v2776 = vadd.f32 %v2695, %v2775
  %v2777 = vpop.f32.mrb[0].mxu0
  %2778 = vdwg.mxu0
  %2779 = vmatprep.subr.mxu0 0.0
  %v2780 = vand.u32 %v2528, 4294901760
  %2781 = vmatpush1.msra.mxu0 %v2780
  %2782 = vmatprep.subr.mxu0 0.0
  %2783 = vmatpush1.msra.mxu0 0.0
  %2784 = vmatprep.subr.mxu0 0.0
  %2785 = vmatpush1.msra.mxu0 0.0
  %2786 = vmatprep.subr.mxu0 0.0
  %2787 = vmatpush1.msra.mxu0 0.0
  %2788 = vmatprep.subr.mxu0 0.0
  %2789 = vmatpush1.msra.mxu0 0.0
  %2790 = vmatprep.subr.mxu0 0.0
  %2791 = vmatpush1.msra.mxu0 0.0
  %2792 = vmatprep.subr.mxu0 0.0
  %2793 = vmatpush1.msra.mxu0 0.0
  %2794 = vmatprep.subr.mxu0 0.0
  %2795 = vmatpush1.msra.mxu0 0.0
  %2796 = vmatprep.subr.mxu0 0.0
  %2797 = vmatpush1.msra.mxu0 0.0
  %2798 = vmatprep.subr.mxu0 0.0
  %2799 = vmatpush1.msra.mxu0 0.0
  %2800 = vmatprep.subr.mxu0 0.0
  %2801 = vmatpush1.msra.mxu0 0.0
  %2802 = vmatprep.subr.mxu0 0.0
  %2803 = vmatpush1.msra.mxu0 0.0
  %2804 = vmatprep.subr.mxu0 0.0
  %2805 = vmatpush1.msra.mxu0 0.0
  %2806 = vmatprep.subr.mxu0 0.0
  %2807 = vmatpush1.msra.mxu0 0.0
  %2808 = vmatprep.subr.mxu0 0.0
  %2809 = vmatpush1.msra.mxu0 0.0
  %2810 = vmatprep.subr.mxu0 0.0
  %2811 = vmatpush1.msra.mxu0 0.0
  %2812 = vmatprep.subr.mxu0 0.0
  %2813 = vmatpush1.msra.mxu0 0.0
  %2814 = vmatprep.subr.mxu0 0.0
  %2815 = vmatpush1.msra.mxu0 0.0
  %2816 = vmatprep.subr.mxu0 0.0
  %2817 = vmatpush1.msra.mxu0 0.0
  %2818 = vmatprep.subr.mxu0 0.0
  %2819 = vmatpush1.msra.mxu0 0.0
  %2820 = vmatprep.subr.mxu0 0.0
  %2821 = vmatpush1.msra.mxu0 0.0
  %2822 = vmatprep.subr.mxu0 0.0
  %2823 = vmatpush1.msra.mxu0 0.0
  %2824 = vmatprep.subr.mxu0 0.0
  %2825 = vmatpush1.msra.mxu0 0.0
  %2826 = vmatprep.subr.mxu0 0.0
  %2827 = vmatpush1.msra.mxu0 0.0
  %2828 = vmatprep.subr.mxu0 0.0
  %2829 = vmatpush1.msra.mxu0 0.0
  %2830 = vmatprep.subr.mxu0 0.0
  %2831 = vmatpush1.msra.mxu0 0.0
  %2832 = vmatprep.subr.mxu0 0.0
  %2833 = vmatpush1.msra.mxu0 0.0
  %2834 = vmatprep.subr.mxu0 0.0
  %2835 = vmatpush1.msra.mxu0 0.0
  %2836 = vmatprep.subr.mxu0 0.0
  %2837 = vmatpush1.msra.mxu0 0.0
  %2838 = vmatprep.subr.mxu0 0.0
  %2839 = vmatpush1.msra.mxu0 0.0
  %2840 = vmatprep.subr.mxu0 0.0
  %2841 = vmatpush1.msra.mxu0 0.0
  %2842 = vmatprep.subr.mxu0 0.0
  %2843 = vmatpush1.msra.mxu0 0.0
  %2844 = vmatprep.mubr.f32.mxu0 0.0
  %v2845 = vand.u32 %v2522, 4294901760
  %v2846 = vsub.f32 %v2522, %v2845
  %v2847 = vand.u32 %v2846, 4294901760
  %2848 = vmatmul.mubr.f32.gmra.mrb[0].mxu0 %v2847
  %v2849 = vpop.f32.mrb[0].mxu0
  %v2850 = vadd.f32 %v2769, %v2849
  %v2851 = vpop.f32.mrb[0].mxu0
  %2852 = vmatprep.mubr.f32.mxu0 0.0
  %v2853 = vand.u32 %v2525, 4294901760
  %v2854 = vsub.f32 %v2525, %v2853
  %v2855 = vand.u32 %v2854, 4294901760
  %2856 = vmatmul.mubr.f32.gmra.mrb[0].mxu0 %v2855
  %v2857 = vpop.f32.mrb[0].mxu0
  %v2858 = vadd.f32 %v2776, %v2857
  %v2859 = vpop.f32.mrb[0].mxu0
  %2860 = vdwg.mxu0
  %2861 = vmatprep.subr.mxu0 0.0
  %v2862 = vand.u32 %v2528, 4294901760
  %v2863 = vsub.f32 %v2528, %v2862
  %v2864 = vand.u32 %v2863, 4294901760
  %2865 = vmatpush1.msra.mxu0 %v2864
  %2866 = vmatprep.subr.mxu0 0.0
  %2867 = vmatpush1.msra.mxu0 0.0
  %2868 = vmatprep.subr.mxu0 0.0
  %2869 = vmatpush1.msra.mxu0 0.0
  %2870 = vmatprep.subr.mxu0 0.0
  %2871 = vmatpush1.msra.mxu0 0.0
  %2872 = vmatprep.subr.mxu0 0.0
  %2873 = vmatpush1.msra.mxu0 0.0
  %2874 = vmatprep.subr.mxu0 0.0
  %2875 = vmatpush1.msra.mxu0 0.0
  %2876 = vmatprep.subr.mxu0 0.0
  %2877 = vmatpush1.msra.mxu0 0.0
  %2878 = vmatprep.subr.mxu0 0.0
  %2879 = vmatpush1.msra.mxu0 0.0
  %2880 = vmatprep.subr.mxu0 0.0
  %2881 = vmatpush1.msra.mxu0 0.0
  %2882 = vmatprep.subr.mxu0 0.0
  %2883 = vmatpush1.msra.mxu0 0.0
  %2884 = vmatprep.subr.mxu0 0.0
  %2885 = vmatpush1.msra.mxu0 0.0
  %2886 = vmatprep.subr.mxu0 0.0
  %2887 = vmatpush1.msra.mxu0 0.0
  %2888 = vmatprep.subr.mxu0 0.0
  %2889 = vmatpush1.msra.mxu0 0.0
  %2890 = vmatprep.subr.mxu0 0.0
  %2891 = vmatpush1.msra.mxu0 0.0
  %2892 = vmatprep.subr.mxu0 0.0
  %2893 = vmatpush1.msra.mxu0 0.0
  %2894 = vmatprep.subr.mxu0 0.0
  %2895 = vmatpush1.msra.mxu0 0.0
  %2896 = vmatprep.subr.mxu0 0.0
  %2897 = vmatpush1.msra.mxu0 0.0
  %2898 = vmatprep.subr.mxu0 0.0
  %2899 = vmatpush1.msra.mxu0 0.0
  %2900 = vmatprep.subr.mxu0 0.0
  %2901 = vmatpush1.msra.mxu0 0.0
  %2902 = vmatprep.subr.mxu0 0.0
  %2903 = vmatpush1.msra.mxu0 0.0
  %2904 = vmatprep.subr.mxu0 0.0
  %2905 = vmatpush1.msra.mxu0 0.0
  %2906 = vmatprep.subr.mxu0 0.0
  %2907 = vmatpush1.msra.mxu0 0.0
  %2908 = vmatprep.subr.mxu0 0.0
  %2909 = vmatpush1.msra.mxu0 0.0
  %2910 = vmatprep.subr.mxu0 0.0
  %2911 = vmatpush1.msra.mxu0 0.0
  %2912 = vmatprep.subr.mxu0 0.0
  %2913 = vmatpush1.msra.mxu0 0.0
  %2914 = vmatprep.subr.mxu0 0.0
  %2915 = vmatpush1.msra.mxu0 0.0
  %2916 = vmatprep.subr.mxu0 0.0
  %2917 = vmatpush1.msra.mxu0 0.0
  %2918 = vmatprep.subr.mxu0 0.0
  %2919 = vmatpush1.msra.mxu0 0.0
  %2920 = vmatprep.subr.mxu0 0.0
  %2921 = vmatpush1.msra.mxu0 0.0
  %2922 = vmatprep.subr.mxu0 0.0
  %2923 = vmatpush1.msra.mxu0 0.0
  %2924 = vmatprep.subr.mxu0 0.0
  %2925 = vmatpush1.msra.mxu0 0.0
  %2926 = vmatprep.subr.mxu0 0.0
  %2927 = vmatpush1.msra.mxu0 0.0
  %2928 = vmatprep.mubr.f32.mxu0 0.0
  %v2929 = vand.u32 %v2522, 4294901760
  %2930 = vmatmul.mubr.f32.gmra.mrb[0].mxu0 %v2929
  %v2931 = vpop.f32.mrb[0].mxu0
  %v2932 = vadd.f32 %v2850, %v2931
  %v2933 = vpop.f32.mrb[0].mxu0
  %2934 = vmatprep.mubr.f32.mxu0 0.0
  %v2935 = vand.u32 %v2525, 4294901760
  %2936 = vmatmul.mubr.f32.gmra.mrb[0].mxu0 %v2935
  %v2937 = vpop.f32.mrb[0].mxu0
  %v2938 = vadd.f32 %v2858, %v2937
  %v2939 = vpop.f32.mrb[0].mxu0
  %2940 = vdwg.mxu0
  %2941 = vmatprep.subr.mxu0 0.0
  %v2942 = vand.u32 %v2528, 4294901760
  %2943 = vmatpush1.msra.mxu0 %v2942
  %2944 = vmatprep.subr.mxu0 0.0
  %2945 = vmatpush1.msra.mxu0 0.0
  %2946 = vmatprep.subr.mxu0 0.0
  %2947 = vmatpush1.msra.mxu0 0.0
  %2948 = vmatprep.subr.mxu0 0.0
  %2949 = vmatpush1.msra.mxu0 0.0
  %2950 = vmatprep.subr.mxu0 0.0
  %2951 = vmatpush1.msra.mxu0 0.0
  %2952 = vmatprep.subr.mxu0 0.0
  %2953 = vmatpush1.msra.mxu0 0.0
  %2954 = vmatprep.subr.mxu0 0.0
  %2955 = vmatpush1.msra.mxu0 0.0
  %2956 = vmatprep.subr.mxu0 0.0
  %2957 = vmatpush1.msra.mxu0 0.0
  %2958 = vmatprep.subr.mxu0 0.0
  %2959 = vmatpush1.msra.mxu0 0.0
  %2960 = vmatprep.subr.mxu0 0.0
  %2961 = vmatpush1.msra.mxu0 0.0
  %2962 = vmatprep.subr.mxu0 0.0
  %2963 = vmatpush1.msra.mxu0 0.0
  %2964 = vmatprep.subr.mxu0 0.0
  %2965 = vmatpush1.msra.mxu0 0.0
  %2966 = vmatprep.subr.mxu0 0.0
  %2967 = vmatpush1.msra.mxu0 0.0
  %2968 = vmatprep.subr.mxu0 0.0
  %2969 = vmatpush1.msra.mxu0 0.0
  %2970 = vmatprep.subr.mxu0 0.0
  %2971 = vmatpush1.msra.mxu0 0.0
  %2972 = vmatprep.subr.mxu0 0.0
  %2973 = vmatpush1.msra.mxu0 0.0
  %2974 = vmatprep.subr.mxu0 0.0
  %2975 = vmatpush1.msra.mxu0 0.0
  %2976 = vmatprep.subr.mxu0 0.0
  %2977 = vmatpush1.msra.mxu0 0.0
  %2978 = vmatprep.subr.mxu0 0.0
  %2979 = vmatpush1.msra.mxu0 0.0
  %2980 = vmatprep.subr.mxu0 0.0
  %2981 = vmatpush1.msra.mxu0 0.0
  %2982 = vmatprep.subr.mxu0 0.0
  %2983 = vmatpush1.msra.mxu0 0.0
  %2984 = vmatprep.subr.mxu0 0.0
  %2985 = vmatpush1.msra.mxu0 0.0
  %2986 = vmatprep.subr.mxu0 0.0
  %2987 = vmatpush1.msra.mxu0 0.0
  %2988 = vmatprep.subr.mxu0 0.0
  %2989 = vmatpush1.msra.mxu0 0.0
  %2990 = vmatprep.subr.mxu0 0.0
  %2991 = vmatpush1.msra.mxu0 0.0
  %2992 = vmatprep.subr.mxu0 0.0
  %2993 = vmatpush1.msra.mxu0 0.0
  %2994 = vmatprep.subr.mxu0 0.0
  %2995 = vmatpush1.msra.mxu0 0.0
  %2996 = vmatprep.subr.mxu0 0.0
  %2997 = vmatpush1.msra.mxu0 0.0
  %2998 = vmatprep.subr.mxu0 0.0
  %2999 = vmatpush1.msra.mxu0 0.0
  %3000 = vmatprep.subr.mxu0 0.0
  %3001 = vmatpush1.msra.mxu0 0.0
  %3002 = vmatprep.subr.mxu0 0.0
  %3003 = vmatpush1.msra.mxu0 0.0
  %3004 = vmatprep.subr.mxu0 0.0
  %3005 = vmatpush1.msra.mxu0 0.0
  %3006 = vmatprep.mubr.f32.mxu0 0.0
  %v3007 = vand.u32 %v2522, 4294901760
  %3008 = vmatmul.mubr.f32.gmra.mrb[0].mxu0 %v3007
  %v3009 = vpop.f32.mrb[0].mxu0
  %v3010 = vadd.f32 %v2932, %v3009
  %v3011 = vpop.f32.mrb[0].mxu0
  %3012 = vmatprep.mubr.f32.mxu0 0.0
  %v3013 = vand.u32 %v2525, 4294901760
  %3014 = vmatmul.mubr.f32.gmra.mrb[0].mxu0 %v3013
  %v3015 = vpop.f32.mrb[0].mxu0
  %v3016 = vadd.f32 %v2938, %v3015
  %v3017 = vpop.f32.mrb[0].mxu0
  %3018 = vdwg.mxu0
  %v3019 = vtanh.pop %v3010
  %v3020 = vtanh.pop %v3016
  %v3021 = vld [vmem:[%s11] sm:$0xff]
  %v3022 = vld [vmem:[%s11 + $0x8] sm:$0xff]
  %v3023 = vld [vmem:[%s11 + $0x10] sm:$0xf]
  %v3024 = vld [vmem:[%s12] sm:$0xff]
  %v3025 = vld [vmem:[%s12 + $0x8] sm:$0xff]
  %v3026 = vld [vmem:[%s12 + $0x10] sm:$0xf]
  %3028 = vset.pattern.permute.xlu0 0
  %3029 = vperm.xlu0 %3028, %v3024
  %v3030 = vpop.permute.xlu0 %3029
  %3033 = vset.pattern.permute.xlu0 0
  %3034 = vperm.xlu0 %3033, %v3025
  %v3035 = vpop.permute.xlu0 %3034
  %3038 = vset.pattern.permute.xlu0 0
  %3039 = vperm.xlu0 %3038, %v3026
  %v3040 = vpop.permute.xlu0 %3039
  %v3043 = vsel %vm2039, %v3021, 0
  %v3046 = vsel %vm2039, %v3022, 0
  %v3049 = vsel %vm2039, %v3023, 0
  %v3052 = vsel %vm874, %v3020, 0
  %3054 = vmatprep.subr.mxu0 0.0
  %v3055 = vand.u32 %v3019, 4294901760
  %3056 = vmatpush1.msra.mxu0 %v3055
  %3057 = vmatprep.subr.mxu0 0.0
  %v3058 = vand.u32 %v3052, 4294901760
  %3059 = vmatpush1.msra.mxu0 %v3058
  %3060 = vmatprep.subr.mxu0 0.0
  %3061 = vmatpush1.msra.mxu0 0.0
  %3062 = vmatprep.subr.mxu0 0.0
  %3063 = vmatpush1.msra.mxu0 0.0
  %3064 = vmatprep.subr.mxu0 0.0
  %3065 = vmatpush1.msra.mxu0 0.0
  %3066 = vmatprep.subr.mxu0 0.0
  %3067 = vmatpush1.msra.mxu0 0.0
  %3068 = vmatprep.subr.mxu0 0.0
  %3069 = vmatpush1.msra.mxu0 0.0
  %3070 = vmatprep.subr.mxu0 0.0
  %3071 = vmatpush1.msra.mxu0 0.0
  %3072 = vmatprep.subr.mxu0 0.0
  %3073 = vmatpush1.msra.mxu0 0.0
  %3074 = vmatprep.subr.mxu0 0.0
  %3075 = vmatpush1.msra.mxu0 0.0
  %3076 = vmatprep.subr.mxu0 0.0
  %3077 = vmatpush1.msra.mxu0 0.0
  %3078 = vmatprep.subr.mxu0 0.0
  %3079 = vmatpush1.msra.mxu0 0.0
  %3080 = vmatprep.subr.mxu0 0.0
  %3081 = vmatpush1.msra.mxu0 0.0
  %3082 = vmatprep.subr.mxu0 0.0
  %3083 = vmatpush1.msra.mxu0 0.0
  %3084 = vmatprep.subr.mxu0 0.0
  %3085 = vmatpush1.msra.mxu0 0.0
  %3086 = vmatprep.subr.mxu0 0.0
  %3087 = vmatpush1.msra.mxu0 0.0
  %3088 = vmatprep.subr.mxu0 0.0
  %3089 = vmatpush1.msra.mxu0 0.0
  %3090 = vmatprep.subr.mxu0 0.0
  %3091 = vmatpush1.msra.mxu0 0.0
  %3092 = vmatprep.subr.mxu0 0.0
  %3093 = vmatpush1.msra.mxu0 0.0
  %3094 = vmatprep.subr.mxu0 0.0
  %3095 = vmatpush1.msra.mxu0 0.0
  %3096 = vmatprep.subr.mxu0 0.0
  %3097 = vmatpush1.msra.mxu0 0.0
  %3098 = vmatprep.subr.mxu0 0.0
  %3099 = vmatpush1.msra.mxu0 0.0
  %3100 = vmatprep.subr.mxu0 0.0
  %3101 = vmatpush1.msra.mxu0 0.0
  %3102 = vmatprep.subr.mxu0 0.0
  %3103 = vmatpush1.msra.mxu0 0.0
  %3104 = vmatprep.subr.mxu0 0.0
  %3105 = vmatpush1.msra.mxu0 0.0
  %3106 = vmatprep.subr.mxu0 0.0
  %3107 = vmatpush1.msra.mxu0 0.0
  %3108 = vmatprep.subr.mxu0 0.0
  %3109 = vmatpush1.msra.mxu0 0.0
  %3110 = vmatprep.subr.mxu0 0.0
  %3111 = vmatpush1.msra.mxu0 0.0
  %3112 = vmatprep.subr.mxu0 0.0
  %3113 = vmatpush1.msra.mxu0 0.0
  %3114 = vmatprep.subr.mxu0 0.0
  %3115 = vmatpush1.msra.mxu0 0.0
  %3116 = vmatprep.subr.mxu0 0.0
  %3117 = vmatpush1.msra.mxu0 0.0
  %3118 = vmatprep.subr.mxu0 0.0
  %3119 = vmatpush1.msra.mxu0 0.0
  %3120 = vmatprep.mubr.f32.mxu0 0.0
  %v3121 = vand.u32 %v3043, 4294901760
  %v3122 = vsub.f32 %v3043, %v3121
  %v3123 = vand.u32 %v3122, 4294901760
  %v3124 = vsub.f32 %v3122, %v3123
  %v3125 = vand.u32 %v3124, 4294901760
  %3126 = vmatmul.mubr.f32.gmra.mrb[0].mxu0 %v3125
  %v3127 = vpop.f32.mrb[0].mxu0
  %v3128 = vadd.f32 %v3030, %v3127
  %v3129 = vpop.f32.mrb[0].mxu0
  %3130 = vmatprep.mubr.f32.mxu0 0.0
  %v3131 = vand.u32 %v3046, 4294901760
  %v3132 = vsub.f32 %v3046, %v3131
  %v3133 = vand.u32 %v3132, 4294901760
  %v3134 = vsub.f32 %v3132, %v3133
  %v3135 = vand.u32 %v3134, 4294901760
  %3136 = vmatmul.mubr.f32.gmra.mrb[0].mxu0 %v3135
  %v3137 = vpop.f32.mrb[0].mxu0
  %v3138 = vadd.f32 %v3035, %v3137
  %v3139 = vpop.f32.mrb[0].mxu0
  %3140 = vmatprep.mubr.f32.mxu0 0.0
  %v3141 = vand.u32 %v3049, 4294901760
  %v3142 = vsub.f32 %v3049, %v3141
  %v3143 = vand.u32 %v3142, 4294901760
  %v3144 = vsub.f32 %v3142, %v3143
  %v3145 = vand.u32 %v3144, 4294901760
  %3146 = vmatmul.mubr.f32.gmra.mrb[0].mxu0 %v3145
  %v3147 = vpop.f32.mrb[0].mxu0
  %v3148 = vadd.f32 %v3040, %v3147
  %v3149 = vpop.f32.mrb[0].mxu0
  %3150 = vdwg.mxu0
  %3151 = vmatprep.subr.mxu0 0.0
  %v3152 = vand.u32 %v3019, 4294901760
  %v3153 = vsub.f32 %v3019, %v3152
  %v3154 = vand.u32 %v3153, 4294901760
  %v3155 = vsub.f32 %v3153, %v3154
  %v3156 = vand.u32 %v3155, 4294901760
  %3157 = vmatpush1.msra.mxu0 %v3156
  %3158 = vmatprep.subr.mxu0 0.0
  %v3159 = vand.u32 %v3052, 4294901760
  %v3160 = vsub.f32 %v3052, %v3159
  %v3161 = vand.u32 %v3160, 4294901760
  %v3162 = vsub.f32 %v3160, %v3161
  %v3163 = vand.u32 %v3162, 4294901760
  %3164 = vmatpush1.msra.mxu0 %v3163
  %3165 = vmatprep.subr.mxu0 0.0
  %3166 = vmatpush1.msra.mxu0 0.0
  %3167 = vmatprep.subr.mxu0 0.0
  %3168 = vmatpush1.msra.mxu0 0.0
  %3169 = vmatprep.subr.mxu0 0.0
  %3170 = vmatpush1.msra.mxu0 0.0
  %3171 = vmatprep.subr.mxu0 0.0
  %3172 = vmatpush1.msra.mxu0 0.0
  %3173 = vmatprep.subr.mxu0 0.0
  %3174 = vmatpush1.msra.mxu0 0.0
  %3175 = vmatprep.subr.mxu0 0.0
  %3176 = vmatpush1.msra.mxu0 0.0
  %3177 = vmatprep.subr.mxu0 0.0
  %3178 = vmatpush1.msra.mxu0 0.0
  %3179 = vmatprep.subr.mxu0 0.0
  %3180 = vmatpush1.msra.mxu0 0.0
  %3181 = vmatprep.subr.mxu0 0.0
  %3182 = vmatpush1.msra.mxu0 0.0
  %3183 = vmatprep.subr.mxu0 0.0
  %3184 = vmatpush1.msra.mxu0 0.0
  %3185 = vmatprep.subr.mxu0 0.0
  %3186 = vmatpush1.msra.mxu0 0.0
  %3187 = vmatprep.subr.mxu0 0.0
  %3188 = vmatpush1.msra.mxu0 0.0
  %3189 = vmatprep.subr.mxu0 0.0
  %3190 = vmatpush1.msra.mxu0 0.0
  %3191 = vmatprep.subr.mxu0 0.0
  %3192 = vmatpush1.msra.mxu0 0.0
  %3193 = vmatprep.subr.mxu0 0.0
  %3194 = vmatpush1.msra.mxu0 0.0
  %3195 = vmatprep.subr.mxu0 0.0
  %3196 = vmatpush1.msra.mxu0 0.0
  %3197 = vmatprep.subr.mxu0 0.0
  %3198 = vmatpush1.msra.mxu0 0.0
  %3199 = vmatprep.subr.mxu0 0.0
  %3200 = vmatpush1.msra.mxu0 0.0
  %3201 = vmatprep.subr.mxu0 0.0
  %3202 = vmatpush1.msra.mxu0 0.0
  %3203 = vmatprep.subr.mxu0 0.0
  %3204 = vmatpush1.msra.mxu0 0.0
  %3205 = vmatprep.subr.mxu0 0.0
  %3206 = vmatpush1.msra.mxu0 0.0
  %3207 = vmatprep.subr.mxu0 0.0
  %3208 = vmatpush1.msra.mxu0 0.0
  %3209 = vmatprep.subr.mxu0 0.0
  %3210 = vmatpush1.msra.mxu0 0.0
  %3211 = vmatprep.subr.mxu0 0.0
  %3212 = vmatpush1.msra.mxu0 0.0
  %3213 = vmatprep.subr.mxu0 0.0
  %3214 = vmatpush1.msra.mxu0 0.0
  %3215 = vmatprep.subr.mxu0 0.0
  %3216 = vmatpush1.msra.mxu0 0.0
  %3217 = vmatprep.subr.mxu0 0.0
  %3218 = vmatpush1.msra.mxu0 0.0
  %3219 = vmatprep.subr.mxu0 0.0
  %3220 = vmatpush1.msra.mxu0 0.0
  %3221 = vmatprep.subr.mxu0 0.0
  %3222 = vmatpush1.msra.mxu0 0.0
  %3223 = vmatprep.subr.mxu0 0.0
  %3224 = vmatpush1.msra.mxu0 0.0
  %3225 = vmatprep.mubr.f32.mxu0 0.0
  %v3226 = vand.u32 %v3043, 4294901760
  %3227 = vmatmul.mubr.f32.gmra.mrb[0].mxu0 %v3226
  %v3228 = vpop.f32.mrb[0].mxu0
  %v3229 = vadd.f32 %v3128, %v3228
  %v3230 = vpop.f32.mrb[0].mxu0
  %3231 = vmatprep.mubr.f32.mxu0 0.0
  %v3232 = vand.u32 %v3046, 4294901760
  %3233 = vmatmul.mubr.f32.gmra.mrb[0].mxu0 %v3232
  %v3234 = vpop.f32.mrb[0].mxu0
  %v3235 = vadd.f32 %v3138, %v3234
  %v3236 = vpop.f32.mrb[0].mxu0
  %3237 = vmatprep.mubr.f32.mxu0 0.0
  %v3238 = vand.u32 %v3049, 4294901760
  %3239 = vmatmul.mubr.f32.gmra.mrb[0].mxu0 %v3238
  %v3240 = vpop.f32.mrb[0].mxu0
  %v3241 = vadd.f32 %v3148, %v3240
  %v3242 = vpop.f32.mrb[0].mxu0
  %3243 = vdwg.mxu0
  %3244 = vmatprep.subr.mxu0 0.0
  %v3245 = vand.u32 %v3019, 4294901760
  %v3246 = vsub.f32 %v3019, %v3245
  %3247 = vmatpush1.msra.mxu0 %v3246
  %3248 = vmatprep.subr.mxu0 0.0
  %v3249 = vand.u32 %v3052, 4294901760
  %v3250 = vsub.f32 %v3052, %v3249
  %3251 = vmatpush1.msra.mxu0 %v3250
  %3252 = vmatprep.subr.mxu0 0.0
  %3253 = vmatpush1.msra.mxu0 0.0
  %3254 = vmatprep.subr.mxu0 0.0
  %3255 = vmatpush1.msra.mxu0 0.0
  %3256 = vmatprep.subr.mxu0 0.0
  %3257 = vmatpush1.msra.mxu0 0.0
  %3258 = vmatprep.subr.mxu0 0.0
  %3259 = vmatpush1.msra.mxu0 0.0
  %3260 = vmatprep.subr.mxu0 0.0
  %3261 = vmatpush1.msra.mxu0 0.0
  %3262 = vmatprep.subr.mxu0 0.0
  %3263 = vmatpush1.msra.mxu0 0.0
  %3264 = vmatprep.subr.mxu0 0.0
  %3265 = vmatpush1.msra.mxu0 0.0
  %3266 = vmatprep.subr.mxu0 0.0
  %3267 = vmatpush1.msra.mxu0 0.0
  %3268 = vmatprep.subr.mxu0 0.0
  %3269 = vmatpush1.msra.mxu0 0.0
  %3270 = vmatprep.subr.mxu0 0.0
  %3271 = vmatpush1.msra.mxu0 0.0
  %3272 = vmatprep.subr.mxu0 0.0
  %3273 = vmatpush1.msra.mxu0 0.0
  %3274 = vmatprep.subr.mxu0 0.0
  %3275 = vmatpush1.msra.mxu0 0.0
  %3276 = vmatprep.subr.mxu0 0.0
  %3277 = vmatpush1.msra.mxu0 0.0
  %3278 = vmatprep.subr.mxu0 0.0
  %3279 = vmatpush1.msra.mxu0 0.0
  %3280 = vmatprep.subr.mxu0 0.0
  %3281 = vmatpush1.msra.mxu0 0.0
  %3282 = vmatprep.subr.mxu0 0.0
  %3283 = vmatpush1.msra.mxu0 0.0
  %3284 = vmatprep.subr.mxu0 0.0
  %3285 = vmatpush1.msra.mxu0 0.0
  %3286 = vmatprep.subr.mxu0 0.0
  %3287 = vmatpush1.msra.mxu0 0.0
  %3288 = vmatprep.subr.mxu0 0.0
  %3289 = vmatpush1.msra.mxu0 0.0
  %3290 = vmatprep.subr.mxu0 0.0
  %3291 = vmatpush1.msra.mxu0 0.0
  %3292 = vmatprep.subr.mxu0 0.0
  %3293 = vmatpush1.msra.mxu0 0.0
  %3294 = vmatprep.subr.mxu0 0.0
  %3295 = vmatpush1.msra.mxu0 0.0
  %3296 = vmatprep.subr.mxu0 0.0
  %3297 = vmatpush1.msra.mxu0 0.0
  %3298 = vmatprep.subr.mxu0 0.0
  %3299 = vmatpush1.msra.mxu0 0.0
  %3300 = vmatprep.subr.mxu0 0.0
  %3301 = vmatpush1.msra.mxu0 0.0
  %3302 = vmatprep.subr.mxu0 0.0
  %3303 = vmatpush1.msra.mxu0 0.0
  %3304 = vmatprep.subr.mxu0 0.0
  %3305 = vmatpush1.msra.mxu0 0.0
  %3306 = vmatprep.subr.mxu0 0.0
  %3307 = vmatpush1.msra.mxu0 0.0
  %3308 = vmatprep.subr.mxu0 0.0
  %3309 = vmatpush1.msra.mxu0 0.0
  %3310 = vmatprep.subr.mxu0 0.0
  %3311 = vmatpush1.msra.mxu0 0.0
  %3312 = vmatprep.mubr.f32.mxu0 0.0
  %v3313 = vand.u32 %v3043, 4294901760
  %v3314 = vsub.f32 %v3043, %v3313
  %3315 = vmatmul.mubr.f32.gmra.mrb[0].mxu0 %v3314
  %v3316 = vpop.f32.mrb[0].mxu0
  %v3317 = vadd.f32 %v3229, %v3316
  %v3318 = vpop.f32.mrb[0].mxu0
  %3319 = vmatprep.mubr.f32.mxu0 0.0
  %v3320 = vand.u32 %v3046, 4294901760
  %v3321 = vsub.f32 %v3046, %v3320
  %3322 = vmatmul.mubr.f32.gmra.mrb[0].mxu0 %v3321
  %v3323 = vpop.f32.mrb[0].mxu0
  %v3324 = vadd.f32 %v3235, %v3323
  %v3325 = vpop.f32.mrb[0].mxu0
  %3326 = vmatprep.mubr.f32.mxu0 0.0
  %v3327 = vand.u32 %v3049, 4294901760
  %v3328 = vsub.f32 %v3049, %v3327
  %3329 = vmatmul.mubr.f32.gmra.mrb[0].mxu0 %v3328
  %v3330 = vpop.f32.mrb[0].mxu0
  %v3331 = vadd.f32 %v3241, %v3330
  %v3332 = vpop.f32.mrb[0].mxu0
  %3333 = vdwg.mxu0
  %3334 = vmatprep.subr.mxu0 0.0
  %v3335 = vand.u32 %v3019, 4294901760
  %3336 = vmatpush1.msra.mxu0 %v3335
  %3337 = vmatprep.subr.mxu0 0.0
  %v3338 = vand.u32 %v3052, 4294901760
  %3339 = vmatpush1.msra.mxu0 %v3338
  %3340 = vmatprep.subr.mxu0 0.0
  %3341 = vmatpush1.msra.mxu0 0.0
  %3342 = vmatprep.subr.mxu0 0.0
  %3343 = vmatpush1.msra.mxu0 0.0
  %3344 = vmatprep.subr.mxu0 0.0
  %3345 = vmatpush1.msra.mxu0 0.0
  %3346 = vmatprep.subr.mxu0 0.0
  %3347 = vmatpush1.msra.mxu0 0.0
  %3348 = vmatprep.subr.mxu0 0.0
  %3349 = vmatpush1.msra.mxu0 0.0
  %3350 = vmatprep.subr.mxu0 0.0
  %3351 = vmatpush1.msra.mxu0 0.0
  %3352 = vmatprep.subr.mxu0 0.0
  %3353 = vmatpush1.msra.mxu0 0.0
  %3354 = vmatprep.subr.mxu0 0.0
  %3355 = vmatpush1.msra.mxu0 0.0
  %3356 = vmatprep.subr.mxu0 0.0
  %3357 = vmatpush1.msra.mxu0 0.0
  %3358 = vmatprep.subr.mxu0 0.0
  %3359 = vmatpush1.msra.mxu0 0.0
  %3360 = vmatprep.subr.mxu0 0.0
  %3361 = vmatpush1.msra.mxu0 0.0
  %3362 = vmatprep.subr.mxu0 0.0
  %3363 = vmatpush1.msra.mxu0 0.0
  %3364 = vmatprep.subr.mxu0 0.0
  %3365 = vmatpush1.msra.mxu0 0.0
  %3366 = vmatprep.subr.mxu0 0.0
  %3367 = vmatpush1.msra.mxu0 0.0
  %3368 = vmatprep.subr.mxu0 0.0
  %3369 = vmatpush1.msra.mxu0 0.0
  %3370 = vmatprep.subr.mxu0 0.0
  %3371 = vmatpush1.msra.mxu0 0.0
  %3372 = vmatprep.subr.mxu0 0.0
  %3373 = vmatpush1.msra.mxu0 0.0
  %3374 = vmatprep.subr.mxu0 0.0
  %3375 = vmatpush1.msra.mxu0 0.0
  %3376 = vmatprep.subr.mxu0 0.0
  %3377 = vmatpush1.msra.mxu0 0.0
  %3378 = vmatprep.subr.mxu0 0.0
  %3379 = vmatpush1.msra.mxu0 0.0
  %3380 = vmatprep.subr.mxu0 0.0
  %3381 = vmatpush1.msra.mxu0 0.0
  %3382 = vmatprep.subr.mxu0 0.0
  %3383 = vmatpush1.msra.mxu0 0.0
  %3384 = vmatprep.subr.mxu0 0.0
  %3385 = vmatpush1.msra.mxu0 0.0
  %3386 = vmatprep.subr.mxu0 0.0
  %3387 = vmatpush1.msra.mxu0 0.0
  %3388 = vmatprep.subr.mxu0 0.0
  %3389 = vmatpush1.msra.mxu0 0.0
  %3390 = vmatprep.subr.mxu0 0.0
  %3391 = vmatpush1.msra.mxu0 0.0
  %3392 = vmatprep.subr.mxu0 0.0
  %3393 = vmatpush1.msra.mxu0 0.0
  %3394 = vmatprep.subr.mxu0 0.0
  %3395 = vmatpush1.msra.mxu0 0.0
  %3396 = vmatprep.subr.mxu0 0.0
  %3397 = vmatpush1.msra.mxu0 0.0
  %3398 = vmatprep.subr.mxu0 0.0
  %3399 = vmatpush1.msra.mxu0 0.0
  %3400 = vmatprep.mubr.f32.mxu0 0.0
  %v3401 = vand.u32 %v3043, 4294901760
  %v3402 = vsub.f32 %v3043, %v3401
  %v3403 = vand.u32 %v3402, 4294901760
  %3404 = vmatmul.mubr.f32.gmra.mrb[0].mxu0 %v3403
  %v3405 = vpop.f32.mrb[0].mxu0
  %v3406 = vadd.f32 %v3317, %v3405
  %v3407 = vpop.f32.mrb[0].mxu0
  %3408 = vmatprep.mubr.f32.mxu0 0.0
  %v3409 = vand.u32 %v3046, 4294901760
  %v3410 = vsub.f32 %v3046, %v3409
  %v3411 = vand.u32 %v3410, 4294901760
  %3412 = vmatmul.mubr.f32.gmra.mrb[0].mxu0 %v3411
  %v3413 = vpop.f32.mrb[0].mxu0
  %v3414 = vadd.f32 %v3324, %v3413
  %v3415 = vpop.f32.mrb[0].mxu0
  %3416 = vmatprep.mubr.f32.mxu0 0.0
  %v3417 = vand.u32 %v3049, 4294901760
  %v3418 = vsub.f32 %v3049, %v3417
  %v3419 = vand.u32 %v3418, 4294901760
  %3420 = vmatmul.mubr.f32.gmra.mrb[0].mxu0 %v3419
  %v3421 = vpop.f32.mrb[0].mxu0
  %v3422 = vadd.f32 %v3331, %v3421
  %v3423 = vpop.f32.mrb[0].mxu0
  %3424 = vdwg.mxu0
  %3425 = vmatprep.subr.mxu0 0.0
  %v3426 = vand.u32 %v3019, 4294901760
  %v3427 = vsub.f32 %v3019, %v3426
  %v3428 = vand.u32 %v3427, 4294901760
  %3429 = vmatpush1.msra.mxu0 %v3428
  %3430 = vmatprep.subr.mxu0 0.0
  %v3431 = vand.u32 %v3052, 4294901760
  %v3432 = vsub.f32 %v3052, %v3431
  %v3433 = vand.u32 %v3432, 4294901760
  %3434 = vmatpush1.msra.mxu0 %v3433
  %3435 = vmatprep.subr.mxu0 0.0
  %3436 = vmatpush1.msra.mxu0 0.0
  %3437 = vmatprep.subr.mxu0 0.0
  %3438 = vmatpush1.msra.mxu0 0.0
  %3439 = vmatprep.subr.mxu0 0.0
  %3440 = vmatpush1.msra.mxu0 0.0
  %3441 = vmatprep.subr.mxu0 0.0
  %3442 = vmatpush1.msra.mxu0 0.0
  %3443 = vmatprep.subr.mxu0 0.0
  %3444 = vmatpush1.msra.mxu0 0.0
  %3445 = vmatprep.subr.mxu0 0.0
  %3446 = vmatpush1.msra.mxu0 0.0
  %3447 = vmatprep.subr.mxu0 0.0
  %3448 = vmatpush1.msra.mxu0 0.0
  %3449 = vmatprep.subr.mxu0 0.0
  %3450 = vmatpush1.msra.mxu0 0.0
  %3451 = vmatprep.subr.mxu0 0.0
  %3452 = vmatpush1.msra.mxu0 0.0
  %3453 = vmatprep.subr.mxu0 0.0
  %3454 = vmatpush1.msra.mxu0 0.0
  %3455 = vmatprep.subr.mxu0 0.0
  %3456 = vmatpush1.msra.mxu0 0.0
  %3457 = vmatprep.subr.mxu0 0.0
  %3458 = vmatpush1.msra.mxu0 0.0
  %3459 = vmatprep.subr.mxu0 0.0
  %3460 = vmatpush1.msra.mxu0 0.0
  %3461 = vmatprep.subr.mxu0 0.0
  %3462 = vmatpush1.msra.mxu0 0.0
  %3463 = vmatprep.subr.mxu0 0.0
  %3464 = vmatpush1.msra.mxu0 0.0
  %3465 = vmatprep.subr.mxu0 0.0
  %3466 = vmatpush1.msra.mxu0 0.0
  %3467 = vmatprep.subr.mxu0 0.0
  %3468 = vmatpush1.msra.mxu0 0.0
  %3469 = vmatprep.subr.mxu0 0.0
  %3470 = vmatpush1.msra.mxu0 0.0
  %3471 = vmatprep.subr.mxu0 0.0
  %3472 = vmatpush1.msra.mxu0 0.0
  %3473 = vmatprep.subr.mxu0 0.0
  %3474 = vmatpush1.msra.mxu0 0.0
  %3475 = vmatprep.subr.mxu0 0.0
  %3476 = vmatpush1.msra.mxu0 0.0
  %3477 = vmatprep.subr.mxu0 0.0
  %3478 = vmatpush1.msra.mxu0 0.0
  %3479 = vmatprep.subr.mxu0 0.0
  %3480 = vmatpush1.msra.mxu0 0.0
  %3481 = vmatprep.subr.mxu0 0.0
  %3482 = vmatpush1.msra.mxu0 0.0
  %3483 = vmatprep.subr.mxu0 0.0
  %3484 = vmatpush1.msra.mxu0 0.0
  %3485 = vmatprep.subr.mxu0 0.0
  %3486 = vmatpush1.msra.mxu0 0.0
  %3487 = vmatprep.subr.mxu0 0.0
  %3488 = vmatpush1.msra.mxu0 0.0
  %3489 = vmatprep.subr.mxu0 0.0
  %3490 = vmatpush1.msra.mxu0 0.0
  %3491 = vmatprep.subr.mxu0 0.0
  %3492 = vmatpush1.msra.mxu0 0.0
  %3493 = vmatprep.subr.mxu0 0.0
  %3494 = vmatpush1.msra.mxu0 0.0
  %3495 = vmatprep.mubr.f32.mxu0 0.0
  %v3496 = vand.u32 %v3043, 4294901760
  %3497 = vmatmul.mubr.f32.gmra.mrb[0].mxu0 %v3496
  %v3498 = vpop.f32.mrb[0].mxu0
  %v3499 = vadd.f32 %v3406, %v3498
  %v3500 = vpop.f32.mrb[0].mxu0
  %3501 = vmatprep.mubr.f32.mxu0 0.0
  %v3502 = vand.u32 %v3046, 4294901760
  %3503 = vmatmul.mubr.f32.gmra.mrb[0].mxu0 %v3502
  %v3504 = vpop.f32.mrb[0].mxu0
  %v3505 = vadd.f32 %v3414, %v3504
  %v3506 = vpop.f32.mrb[0].mxu0
  %3507 = vmatprep.mubr.f32.mxu0 0.0
  %v3508 = vand.u32 %v3049, 4294901760
  %3509 = vmatmul.mubr.f32.gmra.mrb[0].mxu0 %v3508
  %v3510 = vpop.f32.mrb[0].mxu0
  %v3511 = vadd.f32 %v3422, %v3510
  %v3512 = vpop.f32.mrb[0].mxu0
  %3513 = vdwg.mxu0
  %3514 = vmatprep.subr.mxu0 0.0
  %v3515 = vand.u32 %v3019, 4294901760
  %3516 = vmatpush1.msra.mxu0 %v3515
  %3517 = vmatprep.subr.mxu0 0.0
  %v3518 = vand.u32 %v3052, 4294901760
  %3519 = vmatpush1.msra.mxu0 %v3518
  %3520 = vmatprep.subr.mxu0 0.0
  %3521 = vmatpush1.msra.mxu0 0.0
  %3522 = vmatprep.subr.mxu0 0.0
  %3523 = vmatpush1.msra.mxu0 0.0
  %3524 = vmatprep.subr.mxu0 0.0
  %3525 = vmatpush1.msra.mxu0 0.0
  %3526 = vmatprep.subr.mxu0 0.0
  %3527 = vmatpush1.msra.mxu0 0.0
  %3528 = vmatprep.subr.mxu0 0.0
  %3529 = vmatpush1.msra.mxu0 0.0
  %3530 = vmatprep.subr.mxu0 0.0
  %3531 = vmatpush1.msra.mxu0 0.0
  %3532 = vmatprep.subr.mxu0 0.0
  %3533 = vmatpush1.msra.mxu0 0.0
  %3534 = vmatprep.subr.mxu0 0.0
  %3535 = vmatpush1.msra.mxu0 0.0
  %3536 = vmatprep.subr.mxu0 0.0
  %3537 = vmatpush1.msra.mxu0 0.0
  %3538 = vmatprep.subr.mxu0 0.0
  %3539 = vmatpush1.msra.mxu0 0.0
  %3540 = vmatprep.subr.mxu0 0.0
  %3541 = vmatpush1.msra.mxu0 0.0
  %3542 = vmatprep.subr.mxu0 0.0
  %3543 = vmatpush1.msra.mxu0 0.0
  %3544 = vmatprep.subr.mxu0 0.0
  %3545 = vmatpush1.msra.mxu0 0.0
  %3546 = vmatprep.subr.mxu0 0.0
  %3547 = vmatpush1.msra.mxu0 0.0
  %3548 = vmatprep.subr.mxu0 0.0
  %3549 = vmatpush1.msra.mxu0 0.0
  %3550 = vmatprep.subr.mxu0 0.0
  %3551 = vmatpush1.msra.mxu0 0.0
  %3552 = vmatprep.subr.mxu0 0.0
  %3553 = vmatpush1.msra.mxu0 0.0
  %3554 = vmatprep.subr.mxu0 0.0
  %3555 = vmatpush1.msra.mxu0 0.0
  %3556 = vmatprep.subr.mxu0 0.0
  %3557 = vmatpush1.msra.mxu0 0.0
  %3558 = vmatprep.subr.mxu0 0.0
  %3559 = vmatpush1.msra.mxu0 0.0
  %3560 = vmatprep.subr.mxu0 0.0
  %3561 = vmatpush1.msra.mxu0 0.0
  %3562 = vmatprep.subr.mxu0 0.0
  %3563 = vmatpush1.msra.mxu0 0.0
  %3564 = vmatprep.subr.mxu0 0.0
  %3565 = vmatpush1.msra.mxu0 0.0
  %3566 = vmatprep.subr.mxu0 0.0
  %3567 = vmatpush1.msra.mxu0 0.0
  %3568 = vmatprep.subr.mxu0 0.0
  %3569 = vmatpush1.msra.mxu0 0.0
  %3570 = vmatprep.subr.mxu0 0.0
  %3571 = vmatpush1.msra.mxu0 0.0
  %3572 = vmatprep.subr.mxu0 0.0
  %3573 = vmatpush1.msra.mxu0 0.0
  %3574 = vmatprep.subr.mxu0 0.0
  %3575 = vmatpush1.msra.mxu0 0.0
  %3576 = vmatprep.subr.mxu0 0.0
  %3577 = vmatpush1.msra.mxu0 0.0
  %3578 = vmatprep.subr.mxu0 0.0
  %3579 = vmatpush1.msra.mxu0 0.0
  %3580 = vmatprep.mubr.f32.mxu0 0.0
  %v3581 = vand.u32 %v3043, 4294901760
  %3582 = vmatmul.mubr.f32.gmra.mrb[0].mxu0 %v3581
  %v3583 = vpop.f32.mrb[0].mxu0
  %v3584 = vadd.f32 %v3499, %v3583
  %v3585 = vpop.f32.mrb[0].mxu0
  %3586 = vmatprep.mubr.f32.mxu0 0.0
  %v3587 = vand.u32 %v3046, 4294901760
  %3588 = vmatmul.mubr.f32.gmra.mrb[0].mxu0 %v3587
  %v3589 = vpop.f32.mrb[0].mxu0
  %v3590 = vadd.f32 %v3505, %v3589
  %v3591 = vpop.f32.mrb[0].mxu0
  %3592 = vmatprep.mubr.f32.mxu0 0.0
  %v3593 = vand.u32 %v3049, 4294901760
  %3594 = vmatmul.mubr.f32.gmra.mrb[0].mxu0 %v3593
  %v3595 = vpop.f32.mrb[0].mxu0
  %v3596 = vadd.f32 %v3511, %v3595
  %v3597 = vpop.f32.mrb[0].mxu0
  %3598 = vdwg.mxu0
  %v3599 = vtanh.pop %v3584
  %v3600 = vtanh.pop %v3590
  %v3601 = vtanh.pop %v3596
  %v3602 = vld [vmem:[%s13] sm:$0xff]
  %v3603 = vld [vmem:[%s13 + $0x8] sm:$0xff]
  %v3604 = vld [vmem:[%s13 + $0x10] sm:$0xff]
  %v3605 = vld [vmem:[%s13 + $0x18] sm:$0xff]
  %v3606 = vld [vmem:[%s13 + $0x20] sm:$0xff]
  %v3607 = vld [vmem:[%s13 + $0x28] sm:$0xff]
  %v3608 = vld [vmem:[%s13 + $0x30] sm:$0x3]
  %v3609 = vld [vmem:[%s14] sm:$0xff]
  %v3610 = vld [vmem:[%s14 + $0x8] sm:$0xff]
  %v3611 = vld [vmem:[%s14 + $0x10] sm:$0xff]
  %v3612 = vld [vmem:[%s14 + $0x18] sm:$0xff]
  %v3613 = vld [vmem:[%s14 + $0x20] sm:$0xff]
  %v3614 = vld [vmem:[%s14 + $0x28] sm:$0xff]
  %v3615 = vld [vmem:[%s14 + $0x30] sm:$0x3]
  %3617 = vset.pattern.permute.xlu0 0
  %3618 = vperm.xlu0 %3617, %v3609
  %v3619 = vpop.permute.xlu0 %3618
  %3622 = vset.pattern.permute.xlu0 0
  %3623 = vperm.xlu0 %3622, %v3610
  %v3624 = vpop.permute.xlu0 %3623
  %3627 = vset.pattern.permute.xlu0 0
  %3628 = vperm.xlu0 %3627, %v3611
  %v3629 = vpop.permute.xlu0 %3628
  %3632 = vset.pattern.permute.xlu0 0
  %3633 = vperm.xlu0 %3632, %v3612
  %v3634 = vpop.permute.xlu0 %3633
  %3637 = vset.pattern.permute.xlu0 0
  %3638 = vperm.xlu0 %3637, %v3613
  %v3639 = vpop.permute.xlu0 %3638
  %3642 = vset.pattern.permute.xlu0 0
  %3643 = vperm.xlu0 %3642, %v3614
  %v3644 = vpop.permute.xlu0 %3643
  %3647 = vset.pattern.permute.xlu0 0
  %3648 = vperm.xlu0 %3647, %v3615
  %v3649 = vpop.permute.xlu0 %3648
  %v3652 = vsel %vm1505, %v3602, 0
  %v3655 = vsel %vm1505, %v3603, 0
  %v3658 = vsel %vm1505, %v3604, 0
  %v3661 = vsel %vm1505, %v3605, 0
  %v3664 = vsel %vm1505, %v3606, 0
  %v3667 = vsel %vm1505, %v3607, 0
  %v3670 = vsel %vm1505, %v3608, 0
  %v3673 = vsel %vm128, %v3601, 0
  %3675 = vmatprep.subr.mxu0 0.0
  %v3676 = vand.u32 %v3599, 4294901760
  %3677 = vmatpush1.msra.mxu0 %v3676
  %3678 = vmatprep.subr.mxu0 0.0
  %v3679 = vand.u32 %v3600, 4294901760
  %3680 = vmatpush1.msra.mxu0 %v3679
  %3681 = vmatprep.subr.mxu0 0.0
  %v3682 = vand.u32 %v3673, 4294901760
  %3683 = vmatpush1.msra.mxu0 %v3682
  %3684 = vmatprep.subr.mxu0 0.0
  %3685 = vmatpush1.msra.mxu0 0.0
  %3686 = vmatprep.subr.mxu0 0.0
  %3687 = vmatpush1.msra.mxu0 0.0
  %3688 = vmatprep.subr.mxu0 0.0
  %3689 = vmatpush1.msra.mxu0 0.0
  %3690 = vmatprep.subr.mxu0 0.0
  %3691 = vmatpush1.msra.mxu0 0.0
  %3692 = vmatprep.subr.mxu0 0.0
  %3693 = vmatpush1.msra.mxu0 0.0
  %3694 = vmatprep.subr.mxu0 0.0
  %3695 = vmatpush1.msra.mxu0 0.0
  %3696 = vmatprep.subr.mxu0 0.0
  %3697 = vmatpush1.msra.mxu0 0.0
  %3698 = vmatprep.subr.mxu0 0.0
  %3699 = vmatpush1.msra.mxu0 0.0
  %3700 = vmatprep.subr.mxu0 0.0
  %3701 = vmatpush1.msra.mxu0 0.0
  %3702 = vmatprep.subr.mxu0 0.0
  %3703 = vmatpush1.msra.mxu0 0.0
  %3704 = vmatprep.subr.mxu0 0.0
  %3705 = vmatpush1.msra.mxu0 0.0
  %3706 = vmatprep.subr.mxu0 0.0
  %3707 = vmatpush1.msra.mxu0 0.0
  %3708 = vmatprep.subr.mxu0 0.0
  %3709 = vmatpush1.msra.mxu0 0.0
  %3710 = vmatprep.subr.mxu0 0.0
  %3711 = vmatpush1.msra.mxu0 0.0
  %3712 = vmatprep.subr.mxu0 0.0
  %3713 = vmatpush1.msra.mxu0 0.0
  %3714 = vmatprep.subr.mxu0 0.0
  %3715 = vmatpush1.msra.mxu0 0.0
  %3716 = vmatprep.subr.mxu0 0.0
  %3717 = vmatpush1.msra.mxu0 0.0
  %3718 = vmatprep.subr.mxu0 0.0
  %3719 = vmatpush1.msra.mxu0 0.0
  %3720 = vmatprep.subr.mxu0 0.0
  %3721 = vmatpush1.msra.mxu0 0.0
  %3722 = vmatprep.subr.mxu0 0.0
  %3723 = vmatpush1.msra.mxu0 0.0
  %3724 = vmatprep.subr.mxu0 0.0
  %3725 = vmatpush1.msra.mxu0 0.0
  %3726 = vmatprep.subr.mxu0 0.0
  %3727 = vmatpush1.msra.mxu0 0.0
  %3728 = vmatprep.subr.mxu0 0.0
  %3729 = vmatpush1.msra.mxu0 0.0
  %3730 = vmatprep.subr.mxu0 0.0
  %3731 = vmatpush1.msra.mxu0 0.0
  %3732 = vmatprep.subr.mxu0 0.0
  %3733 = vmatpush1.msra.mxu0 0.0
  %3734 = vmatprep.subr.mxu0 0.0
  %3735 = vmatpush1.msra.mxu0 0.0
  %3736 = vmatprep.subr.mxu0 0.0
  %3737 = vmatpush1.msra.mxu0 0.0
  %3738 = vmatprep.subr.mxu0 0.0
  %3739 = vmatpush1.msra.mxu0 0.0
  %3740 = vmatprep.subr.mxu0 0.0
  %3741 = vmatpush1.msra.mxu0 0.0
  %3742 = vmatprep.mubr.f32.mxu0 0.0
  %v3743 = vand.u32 %v3652, 4294901760
  %v3744 = vsub.f32 %v3652, %v3743
  %v3745 = vand.u32 %v3744, 4294901760
  %v3746 = vsub.f32 %v3744, %v3745
  %v3747 = vand.u32 %v3746, 4294901760
  %3748 = vmatmul.mubr.f32.gmra.mrb[0].mxu0 %v3747
  %v3749 = vpop.f32.mrb[0].mxu0
  %v3750 = vadd.f32 %v3619, %v3749
  %v3751 = vpop.f32.mrb[0].mxu0
  %3752 = vmatprep.mubr.f32.mxu0 0.0
  %v3753 = vand.u32 %v3655, 4294901760
  %v3754 = vsub.f32 %v3655, %v3753
  %v3755 = vand.u32 %v3754, 4294901760
  %v3756 = vsub.f32 %v3754, %v3755
  %v3757 = vand.u32 %v3756, 4294901760
  %3758 = vmatmul.mubr.f32.gmra.mrb[0].mxu0 %v3757
  %v3759 = vpop.f32.mrb[0].mxu0
  %v3760 = vadd.f32 %v3624, %v3759
  %v3761 = vpop.f32.mrb[0].mxu0
  %3762 = vmatprep.mubr.f32.mxu0 0.0
  %v3763 = vand.u32 %v3658, 4294901760
  %v3764 = vsub.f32 %v3658, %v3763
  %v3765 = vand.u32 %v3764, 4294901760
  %v3766 = vsub.f32 %v3764, %v3765
  %v3767 = vand.u32 %v3766, 4294901760
  %3768 = vmatmul.mubr.f32.gmra.mrb[0].mxu0 %v3767
  %v3769 = vpop.f32.mrb[0].mxu0
  %v3770 = vadd.f32 %v3629, %v3769
  %v3771 = vpop.f32.mrb[0].mxu0
  %3772 = vmatprep.mubr.f32.mxu0 0.0
  %v3773 = vand.u32 %v3661, 4294901760
  %v3774 = vsub.f32 %v3661, %v3773
  %v3775 = vand.u32 %v3774, 4294901760
  %v3776 = vsub.f32 %v3774, %v3775
  %v3777 = vand.u32 %v3776, 4294901760
  %3778 = vmatmul.mubr.f32.gmra.mrb[0].mxu0 %v3777
  %v3779 = vpop.f32.mrb[0].mxu0
  %v3780 = vadd.f32 %v3634, %v3779
  %v3781 = vpop.f32.mrb[0].mxu0
  %3782 = vmatprep.mubr.f32.mxu0 0.0
  %v3783 = vand.u32 %v3664, 4294901760
  %v3784 = vsub.f32 %v3664, %v3783
  %v3785 = vand.u32 %v3784, 4294901760
  %v3786 = vsub.f32 %v3784, %v3785
  %v3787 = vand.u32 %v3786, 4294901760
  %3788 = vmatmul.mubr.f32.gmra.mrb[0].mxu0 %v3787
  %v3789 = vpop.f32.mrb[0].mxu0
  %v3790 = vadd.f32 %v3639, %v3789
  %v3791 = vpop.f32.mrb[0].mxu0
  %3792 = vmatprep.mubr.f32.mxu0 0.0
  %v3793 = vand.u32 %v3667, 4294901760
  %v3794 = vsub.f32 %v3667, %v3793
  %v3795 = vand.u32 %v3794, 4294901760
  %v3796 = vsub.f32 %v3794, %v3795
  %v3797 = vand.u32 %v3796, 4294901760
  %3798 = vmatmul.mubr.f32.gmra.mrb[0].mxu0 %v3797
  %v3799 = vpop.f32.mrb[0].mxu0
  %v3800 = vadd.f32 %v3644, %v3799
  %v3801 = vpop.f32.mrb[0].mxu0
  %3802 = vmatprep.mubr.f32.mxu0 0.0
  %v3803 = vand.u32 %v3670, 4294901760
  %v3804 = vsub.f32 %v3670, %v3803
  %v3805 = vand.u32 %v3804, 4294901760
  %v3806 = vsub.f32 %v3804, %v3805
  %v3807 = vand.u32 %v3806, 4294901760
  %3808 = vmatmul.mubr.f32.gmra.mrb[0].mxu0 %v3807
  %v3809 = vpop.f32.mrb[0].mxu0
  %v3810 = vadd.f32 %v3649, %v3809
  %v3811 = vpop.f32.mrb[0].mxu0
  %3812 = vdwg.mxu0
  %3813 = vmatprep.subr.mxu0 0.0
  %v3814 = vand.u32 %v3599, 4294901760
  %v3815 = vsub.f32 %v3599, %v3814
  %v3816 = vand.u32 %v3815, 4294901760
  %v3817 = vsub.f32 %v3815, %v3816
  %v3818 = vand.u32 %v3817, 4294901760
  %3819 = vmatpush1.msra.mxu0 %v3818
  %3820 = vmatprep.subr.mxu0 0.0
  %v3821 = vand.u32 %v3600, 4294901760
  %v3822 = vsub.f32 %v3600, %v3821
  %v3823 = vand.u32 %v3822, 4294901760
  %v3824 = vsub.f32 %v3822, %v3823
  %v3825 = vand.u32 %v3824, 4294901760
  %3826 = vmatpush1.msra.mxu0 %v3825
  %3827 = vmatprep.subr.mxu0 0.0
  %v3828 = vand.u32 %v3673, 4294901760
  %v3829 = vsub.f32 %v3673, %v3828
  %v3830 = vand.u32 %v3829, 4294901760
  %v3831 = vsub.f32 %v3829, %v3830
  %v3832 = vand.u32 %v3831, 4294901760
  %3833 = vmatpush1.msra.mxu0 %v3832
  %3834 = vmatprep.subr.mxu0 0.0
  %3835 = vmatpush1.msra.mxu0 0.0
  %3836 = vmatprep.subr.mxu0 0.0
  %3837 = vmatpush1.msra.mxu0 0.0
  %3838 = vmatprep.subr.mxu0 0.0
  %3839 = vmatpush1.msra.mxu0 0.0
  %3840 = vmatprep.subr.mxu0 0.0
  %3841 = vmatpush1.msra.mxu0 0.0
  %3842 = vmatprep.subr.mxu0 0.0
  %3843 = vmatpush1.msra.mxu0 0.0
  %3844 = vmatprep.subr.mxu0 0.0
  %3845 = vmatpush1.msra.mxu0 0.0
  %3846 = vmatprep.subr.mxu0 0.0
  %3847 = vmatpush1.msra.mxu0 0.0
  %3848 = vmatprep.subr.mxu0 0.0
  %3849 = vmatpush1.msra.mxu0 0.0
  %3850 = vmatprep.subr.mxu0 0.0
  %3851 = vmatpush1.msra.mxu0 0.0
  %3852 = vmatprep.subr.mxu0 0.0
  %3853 = vmatpush1.msra.mxu0 0.0
  %3854 = vmatprep.subr.mxu0 0.0
  %3855 = vmatpush1.msra.mxu0 0.0
  %3856 = vmatprep.subr.mxu0 0.0
  %3857 = vmatpush1.msra.mxu0 0.0
  %3858 = vmatprep.subr.mxu0 0.0
  %3859 = vmatpush1.msra.mxu0 0.0
  %3860 = vmatprep.subr.mxu0 0.0
  %3861 = vmatpush1.msra.mxu0 0.0
  %3862 = vmatprep.subr.mxu0 0.0
  %3863 = vmatpush1.msra.mxu0 0.0
  %3864 = vmatprep.subr.mxu0 0.0
  %3865 = vmatpush1.msra.mxu0 0.0
  %3866 = vmatprep.subr.mxu0 0.0
  %3867 = vmatpush1.msra.mxu0 0.0
  %3868 = vmatprep.subr.mxu0 0.0
  %3869 = vmatpush1.msra.mxu0 0.0
  %3870 = vmatprep.subr.mxu0 0.0
  %3871 = vmatpush1.msra.mxu0 0.0
  %3872 = vmatprep.subr.mxu0 0.0
  %3873 = vmatpush1.msra.mxu0 0.0
  %3874 = vmatprep.subr.mxu0 0.0
  %3875 = vmatpush1.msra.mxu0 0.0
  %3876 = vmatprep.subr.mxu0 0.0
  %3877 = vmatpush1.msra.mxu0 0.0
  %3878 = vmatprep.subr.mxu0 0.0
  %3879 = vmatpush1.msra.mxu0 0.0
  %3880 = vmatprep.subr.mxu0 0.0
  %3881 = vmatpush1.msra.mxu0 0.0
  %3882 = vmatprep.subr.mxu0 0.0
  %3883 = vmatpush1.msra.mxu0 0.0
  %3884 = vmatprep.subr.mxu0 0.0
  %3885 = vmatpush1.msra.mxu0 0.0
  %3886 = vmatprep.subr.mxu0 0.0
  %3887 = vmatpush1.msra.mxu0 0.0
  %3888 = vmatprep.subr.mxu0 0.0
  %3889 = vmatpush1.msra.mxu0 0.0
  %3890 = vmatprep.subr.mxu0 0.0
  %3891 = vmatpush1.msra.mxu0 0.0
  %3892 = vmatprep.mubr.f32.mxu0 0.0
  %v3893 = vand.u32 %v3652, 4294901760
  %3894 = vmatmul.mubr.f32.gmra.mrb[0].mxu0 %v3893
  %v3895 = vpop.f32.mrb[0].mxu0
  %v3896 = vadd.f32 %v3750, %v3895
  %v3897 = vpop.f32.mrb[0].mxu0
  %3898 = vmatprep.mubr.f32.mxu0 0.0
  %v3899 = vand.u32 %v3655, 4294901760
  %3900 = vmatmul.mubr.f32.gmra.mrb[0].mxu0 %v3899
  %v3901 = vpop.f32.mrb[0].mxu0
  %v3902 = vadd.f32 %v3760, %v3901
  %v3903 = vpop.f32.mrb[0].mxu0
  %3904 = vmatprep.mubr.f32.mxu0 0.0
  %v3905 = vand.u32 %v3658, 4294901760
  %3906 = vmatmul.mubr.f32.gmra.mrb[0].mxu0 %v3905
  %v3907 = vpop.f32.mrb[0].mxu0
  %v3908 = vadd.f32 %v3770, %v3907
  %v3909 = vpop.f32.mrb[0].mxu0
  %3910 = vmatprep.mubr.f32.mxu0 0.0
  %v3911 = vand.u32 %v3661, 4294901760
  %3912 = vmatmul.mubr.f32.gmra.mrb[0].mxu0 %v3911
  %v3913 = vpop.f32.mrb[0].mxu0
  %v3914 = vadd.f32 %v3780, %v3913
  %v3915 = vpop.f32.mrb[0].mxu0
  %3916 = vmatprep.mubr.f32.mxu0 0.0
  %v3917 = vand.u32 %v3664, 4294901760
  %3918 = vmatmul.mubr.f32.gmra.mrb[0].mxu0 %v3917
  %v3919 = vpop.f32.mrb[0].mxu0
  %v3920 = vadd.f32 %v3790, %v3919
  %v3921 = vpop.f32.mrb[0].mxu0
  %3922 = vmatprep.mubr.f32.mxu0 0.0
  %v3923 = vand.u32 %v3667, 4294901760
  %3924 = vmatmul.mubr.f32.gmra.mrb[0].mxu0 %v3923
  %v3925 = vpop.f32.mrb[0].mxu0
  %v3926 = vadd.f32 %v3800, %v3925
  %v3927 = vpop.f32.mrb[0].mxu0
  %3928 = vmatprep.mubr.f32.mxu0 0.0
  %v3929 = vand.u32 %v3670, 4294901760
  %3930 = vmatmul.mubr.f32.gmra.mrb[0].mxu0 %v3929
  %v3931 = vpop.f32.mrb[0].mxu0
  %v3932 = vadd.f32 %v3810, %v3931
  %v3933 = vpop.f32.mrb[0].mxu0
  %3934 = vdwg.mxu0
  %3935 = vmatprep.subr.mxu0 0.0
  %v3936 = vand.u32 %v3599, 4294901760
  %v3937 = vsub.f32 %v3599, %v3936
  %3938 = vmatpush1.msra.mxu0 %v3937
  %3939 = vmatprep.subr.mxu0 0.0
  %v3940 = vand.u32 %v3600, 4294901760
  %v3941 = vsub.f32 %v3600, %v3940
  %3942 = vmatpush1.msra.mxu0 %v3941
  %3943 = vmatprep.subr.mxu0 0.0
  %v3944 = vand.u32 %v3673, 4294901760
  %v3945 = vsub.f32 %v3673, %v3944
  %3946 = vmatpush1.msra.mxu0 %v3945
  %3947 = vmatprep.subr.mxu0 0.0
  %3948 = vmatpush1.msra.mxu0 0.0
  %3949 = vmatprep.subr.mxu0 0.0
  %3950 = vmatpush1.msra.mxu0 0.0
  %3951 = vmatprep.subr.mxu0 0.0
  %3952 = vmatpush1.msra.mxu0 0.0
  %3953 = vmatprep.subr.mxu0 0.0
  %3954 = vmatpush1.msra.mxu0 0.0
  %3955 = vmatprep.subr.mxu0 0.0
  %3956 = vmatpush1.msra.mxu0 0.0
  %3957 = vmatprep.subr.mxu0 0.0
  %3958 = vmatpush1.msra.mxu0 0.0
  %3959 = vmatprep.subr.mxu0 0.0
  %3960 = vmatpush1.msra.mxu0 0.0
  %3961 = vmatprep.subr.mxu0 0.0
  %3962 = vmatpush1.msra.mxu0 0.0
  %3963 = vmatprep.subr.mxu0 0.0
  %3964 = vmatpush1.msra.mxu0 0.0
  %3965 = vmatprep.subr.mxu0 0.0
  %3966 = vmatpush1.msra.mxu0 0.0
  %3967 = vmatprep.subr.mxu0 0.0
  %3968 = vmatpush1.msra.mxu0 0.0
  %3969 = vmatprep.subr.mxu0 0.0
  %3970 = vmatpush1.msra.mxu0 0.0
  %3971 = vmatprep.subr.mxu0 0.0
  %3972 = vmatpush1.msra.mxu0 0.0
  %3973 = vmatprep.subr.mxu0 0.0
  %3974 = vmatpush1.msra.mxu0 0.0
  %3975 = vmatprep.subr.mxu0 0.0
  %3976 = vmatpush1.msra.mxu0 0.0
  %3977 = vmatprep.subr.mxu0 0.0
  %3978 = vmatpush1.msra.mxu0 0.0
  %3979 = vmatprep.subr.mxu0 0.0
  %3980 = vmatpush1.msra.mxu0 0.0
  %3981 = vmatprep.subr.mxu0 0.0
  %3982 = vmatpush1.msra.mxu0 0.0
  %3983 = vmatprep.subr.mxu0 0.0
  %3984 = vmatpush1.msra.mxu0 0.0
  %3985 = vmatprep.subr.mxu0 0.0
  %3986 = vmatpush1.msra.mxu0 0.0
  %3987 = vmatprep.subr.mxu0 0.0
  %3988 = vmatpush1.msra.mxu0 0.0
  %3989 = vmatprep.subr.mxu0 0.0
  %3990 = vmatpush1.msra.mxu0 0.0
  %3991 = vmatprep.subr.mxu0 0.0
  %3992 = vmatpush1.msra.mxu0 0.0
  %3993 = vmatprep.subr.mxu0 0.0
  %3994 = vmatpush1.msra.mxu0 0.0
  %3995 = vmatprep.subr.mxu0 0.0
  %3996 = vmatpush1.msra.mxu0 0.0
  %3997 = vmatprep.subr.mxu0 0.0
  %3998 = vmatpush1.msra.mxu0 0.0
  %3999 = vmatprep.subr.mxu0 0.0
  %4000 = vmatpush1.msra.mxu0 0.0
  %4001 = vmatprep.subr.mxu0 0.0
  %4002 = vmatpush1.msra.mxu0 0.0
  %4003 = vmatprep.subr.mxu0 0.0
  %4004 = vmatpush1.msra.mxu0 0.0
  %4005 = vmatprep.mubr.f32.mxu0 0.0
  %v4006 = vand.u32 %v3652, 4294901760
  %v4007 = vsub.f32 %v3652, %v4006
  %4008 = vmatmul.mubr.f32.gmra.mrb[0].mxu0 %v4007
  %v4009 = vpop.f32.mrb[0].mxu0
  %v4010 = vadd.f32 %v3896, %v4009
  %v4011 = vpop.f32.mrb[0].mxu0
  %4012 = vmatprep.mubr.f32.mxu0 0.0
  %v4013 = vand.u32 %v3655, 4294901760
  %v4014 = vsub.f32 %v3655, %v4013
  %4015 = vmatmul.mubr.f32.gmra.mrb[0].mxu0 %v4014
  %v4016 = vpop.f32.mrb[0].mxu0
  %v4017 = vadd.f32 %v3902, %v4016
  %v4018 = vpop.f32.mrb[0].mxu0
  %4019 = vmatprep.mubr.f32.mxu0 0.0
  %v4020 = vand.u32 %v3658, 4294901760
  %v4021 = vsub.f32 %v3658, %v4020
  %4022 = vmatmul.mubr.f32.gmra.mrb[0].mxu0 %v4021
  %v4023 = vpop.f32.mrb[0].mxu0
  %v4024 = vadd.f32 %v3908, %v4023
  %v4025 = vpop.f32.mrb[0].mxu0
  %4026 = vmatprep.mubr.f32.mxu0 0.0
  %v4027 = vand.u32 %v3661, 4294901760
  %v4028 = vsub.f32 %v3661, %v4027
  %4029 = vmatmul.mubr.f32.gmra.mrb[0].mxu0 %v4028
  %v4030 = vpop.f32.mrb[0].mxu0
  %v4031 = vadd.f32 %v3914, %v4030
  %v4032 = vpop.f32.mrb[0].mxu0
  %4033 = vmatprep.mubr.f32.mxu0 0.0
  %v4034 = vand.u32 %v3664, 4294901760
  %v4035 = vsub.f32 %v3664, %v4034
  %4036 = vmatmul.mubr.f32.gmra.mrb[0].mxu0 %v4035
  %v4037 = vpop.f32.mrb[0].mxu0
  %v4038 = vadd.f32 %v3920, %v4037
  %v4039 = vpop.f32.mrb[0].mxu0
  %4040 = vmatprep.mubr.f32.mxu0 0.0
  %v4041 = vand.u32 %v3667, 4294901760
  %v4042 = vsub.f32 %v3667, %v4041
  %4043 = vmatmul.mubr.f32.gmra.mrb[0].mxu0 %v4042
  %v4044 = vpop.f32.mrb[0].mxu0
  %v4045 = vadd.f32 %v3926, %v4044
  %v4046 = vpop.f32.mrb[0].mxu0
  %4047 = vmatprep.mubr.f32.mxu0 0.0
  %v4048 = vand.u32 %v3670, 4294901760
  %v4049 = vsub.f32 %v3670, %v4048
  %4050 = vmatmul.mubr.f32.gmra.mrb[0].mxu0 %v4049
  %v4051 = vpop.f32.mrb[0].mxu0
  %v4052 = vadd.f32 %v3932, %v4051
  %v4053 = vpop.f32.mrb[0].mxu0
  %4054 = vdwg.mxu0
  %4055 = vmatprep.subr.mxu0 0.0
  %v4056 = vand.u32 %v3599, 4294901760
  %4057 = vmatpush1.msra.mxu0 %v4056
  %4058 = vmatprep.subr.mxu0 0.0
  %v4059 = vand.u32 %v3600, 4294901760
  %4060 = vmatpush1.msra.mxu0 %v4059
  %4061 = vmatprep.subr.mxu0 0.0
  %v4062 = vand.u32 %v3673, 4294901760
  %4063 = vmatpush1.msra.mxu0 %v4062
  %4064 = vmatprep.subr.mxu0 0.0
  %4065 = vmatpush1.msra.mxu0 0.0
  %4066 = vmatprep.subr.mxu0 0.0
  %4067 = vmatpush1.msra.mxu0 0.0
  %4068 = vmatprep.subr.mxu0 0.0
  %4069 = vmatpush1.msra.mxu0 0.0
  %4070 = vmatprep.subr.mxu0 0.0
  %4071 = vmatpush1.msra.mxu0 0.0
  %4072 = vmatprep.subr.mxu0 0.0
  %4073 = vmatpush1.msra.mxu0 0.0
  %4074 = vmatprep.subr.mxu0 0.0
  %4075 = vmatpush1.msra.mxu0 0.0
  %4076 = vmatprep.subr.mxu0 0.0
  %4077 = vmatpush1.msra.mxu0 0.0
  %4078 = vmatprep.subr.mxu0 0.0
  %4079 = vmatpush1.msra.mxu0 0.0
  %4080 = vmatprep.subr.mxu0 0.0
  %4081 = vmatpush1.msra.mxu0 0.0
  %4082 = vmatprep.subr.mxu0 0.0
  %4083 = vmatpush1.msra.mxu0 0.0
  %4084 = vmatprep.subr.mxu0 0.0
  %4085 = vmatpush1.msra.mxu0 0.0
  %4086 = vmatprep.subr.mxu0 0.0
  %4087 = vmatpush1.msra.mxu0 0.0
  %4088 = vmatprep.subr.mxu0 0.0
  %4089 = vmatpush1.msra.mxu0 0.0
  %4090 = vmatprep.subr.mxu0 0.0
  %4091 = vmatpush1.msra.mxu0 0.0
  %4092 = vmatprep.subr.mxu0 0.0
  %4093 = vmatpush1.msra.mxu0 0.0
  %4094 = vmatprep.subr.mxu0 0.0
  %4095 = vmatpush1.msra.mxu0 0.0
  %4096 = vmatprep.subr.mxu0 0.0
  %4097 = vmatpush1.msra.mxu0 0.0
  %4098 = vmatprep.subr.mxu0 0.0
  %4099 = vmatpush1.msra.mxu0 0.0
  %4100 = vmatprep.subr.mxu0 0.0
  %4101 = vmatpush1.msra.mxu0 0.0
  %4102 = vmatprep.subr.mxu0 0.0
  %4103 = vmatpush1.msra.mxu0 0.0
  %4104 = vmatprep.subr.mxu0 0.0
  %4105 = vmatpush1.msra.mxu0 0.0
  %4106 = vmatprep.subr.mxu0 0.0
  %4107 = vmatpush1.msra.mxu0 0.0
  %4108 = vmatprep.subr.mxu0 0.0
  %4109 = vmatpush1.msra.mxu0 0.0
  %4110 = vmatprep.subr.mxu0 0.0
  %4111 = vmatpush1.msra.mxu0 0.0
  %4112 = vmatprep.subr.mxu0 0.0
  %4113 = vmatpush1.msra.mxu0 0.0
  %4114 = vmatprep.subr.mxu0 0.0
  %4115 = vmatpush1.msra.mxu0 0.0
  %4116 = vmatprep.subr.mxu0 0.0
  %4117 = vmatpush1.msra.mxu0 0.0
  %4118 = vmatprep.subr.mxu0 0.0
  %4119 = vmatpush1.msra.mxu0 0.0
  %4120 = vmatprep.subr.mxu0 0.0
  %4121 = vmatpush1.msra.mxu0 0.0
  %4122 = vmatprep.mubr.f32.mxu0 0.0
  %v4123 = vand.u32 %v3652, 4294901760
  %v4124 = vsub.f32 %v3652, %v4123
  %v4125 = vand.u32 %v4124, 4294901760
  %4126 = vmatmul.mubr.f32.gmra.mrb[0].mxu0 %v4125
  %v4127 = vpop.f32.mrb[0].mxu0
  %v4128 = vadd.f32 %v4010, %v4127
  %v4129 = vpop.f32.mrb[0].mxu0
  %4130 = vmatprep.mubr.f32.mxu0 0.0
  %v4131 = vand.u32 %v3655, 4294901760
  %v4132 = vsub.f32 %v3655, %v4131
  %v4133 = vand.u32 %v4132, 4294901760
  %4134 = vmatmul.mubr.f32.gmra.mrb[0].mxu0 %v4133
  %v4135 = vpop.f32.mrb[0].mxu0
  %v4136 = vadd.f32 %v4017, %v4135
  %v4137 = vpop.f32.mrb[0].mxu0
  %4138 = vmatprep.mubr.f32.mxu0 0.0
  %v4139 = vand.u32 %v3658, 4294901760
  %v4140 = vsub.f32 %v3658, %v4139
  %v4141 = vand.u32 %v4140, 4294901760
  %4142 = vmatmul.mubr.f32.gmra.mrb[0].mxu0 %v4141
  %v4143 = vpop.f32.mrb[0].mxu0
  %v4144 = vadd.f32 %v4024, %v4143
  %v4145 = vpop.f32.mrb[0].mxu0
  %4146 = vmatprep.mubr.f32.mxu0 0.0
  %v4147 = vand.u32 %v3661, 4294901760
  %v4148 = vsub.f32 %v3661, %v4147
  %v4149 = vand.u32 %v4148, 4294901760
  %4150 = vmatmul.mubr.f32.gmra.mrb[0].mxu0 %v4149
  %v4151 = vpop.f32.mrb[0].mxu0
  %v4152 = vadd.f32 %v4031, %v4151
  %v4153 = vpop.f32.mrb[0].mxu0
  %4154 = vmatprep.mubr.f32.mxu0 0.0
  %v4155 = vand.u32 %v3664, 4294901760
  %v4156 = vsub.f32 %v3664, %v4155
  %v4157 = vand.u32 %v4156, 4294901760
  %4158 = vmatmul.mubr.f32.gmra.mrb[0].mxu0 %v4157
  %v4159 = vpop.f32.mrb[0].mxu0
  %v4160 = vadd.f32 %v4038, %v4159
  %v4161 = vpop.f32.mrb[0].mxu0
  %4162 = vmatprep.mubr.f32.mxu0 0.0
  %v4163 = vand.u32 %v3667, 4294901760
  %v4164 = vsub.f32 %v3667, %v4163
  %v4165 = vand.u32 %v4164, 4294901760
  %4166 = vmatmul.mubr.f32.gmra.mrb[0].mxu0 %v4165
  %v4167 = vpop.f32.mrb[0].mxu0
  %v4168 = vadd.f32 %v4045, %v4167
  %v4169 = vpop.f32.mrb[0].mxu0
  %4170 = vmatprep.mubr.f32.mxu0 0.0
  %v4171 = vand.u32 %v3670, 4294901760
  %v4172 = vsub.f32 %v3670, %v4171
  %v4173 = vand.u32 %v4172, 4294901760
  %4174 = vmatmul.mubr.f32.gmra.mrb[0].mxu0 %v4173
  %v4175 = vpop.f32.mrb[0].mxu0
  %v4176 = vadd.f32 %v4052, %v4175
  %v4177 = vpop.f32.mrb[0].mxu0
  %4178 = vdwg.mxu0
  %4179 = vmatprep.subr.mxu0 0.0
  %v4180 = vand.u32 %v3599, 4294901760
  %v4181 = vsub.f32 %v3599, %v4180
  %v4182 = vand.u32 %v4181, 4294901760
  %4183 = vmatpush1.msra.mxu0 %v4182
  %4184 = vmatprep.subr.mxu0 0.0
  %v4185 = vand.u32 %v3600, 4294901760
  %v4186 = vsub.f32 %v3600, %v4185
  %v4187 = vand.u32 %v4186, 4294901760
  %4188 = vmatpush1.msra.mxu0 %v4187
  %4189 = vmatprep.subr.mxu0 0.0
  %v4190 = vand.u32 %v3673, 4294901760
  %v4191 = vsub.f32 %v3673, %v4190
  %v4192 = vand.u32 %v4191, 4294901760
  %4193 = vmatpush1.msra.mxu0 %v4192
  %4194 = vmatprep.subr.mxu0 0.0
  %4195 = vmatpush1.msra.mxu0 0.0
  %4196 = vmatprep.subr.mxu0 0.0
  %4197 = vmatpush1.msra.mxu0 0.0
  %4198 = vmatprep.subr.mxu0 0.0
  %4199 = vmatpush1.msra.mxu0 0.0
  %4200 = vmatprep.subr.mxu0 0.0
  %4201 = vmatpush1.msra.mxu0 0.0
  %4202 = vmatprep.subr.mxu0 0.0
  %4203 = vmatpush1.msra.mxu0 0.0
  %4204 = vmatprep.subr.mxu0 0.0
  %4205 = vmatpush1.msra.mxu0 0.0
  %4206 = vmatprep.subr.mxu0 0.0
  %4207 = vmatpush1.msra.mxu0 0.0
  %4208 = vmatprep.subr.mxu0 0.0
  %4209 = vmatpush1.msra.mxu0 0.0
  %4210 = vmatprep.subr.mxu0 0.0
  %4211 = vmatpush1.msra.mxu0 0.0
  %4212 = vmatprep.subr.mxu0 0.0
  %4213 = vmatpush1.msra.mxu0 0.0
  %4214 = vmatprep.subr.mxu0 0.0
  %4215 = vmatpush1.msra.mxu0 0.0
  %4216 = vmatprep.subr.mxu0 0.0
  %4217 = vmatpush1.msra.mxu0 0.0
  %4218 = vmatprep.subr.mxu0 0.0
  %4219 = vmatpush1.msra.mxu0 0.0
  %4220 = vmatprep.subr.mxu0 0.0
  %4221 = vmatpush1.msra.mxu0 0.0
  %4222 = vmatprep.subr.mxu0 0.0
  %4223 = vmatpush1.msra.mxu0 0.0
  %4224 = vmatprep.subr.mxu0 0.0
  %4225 = vmatpush1.msra.mxu0 0.0
  %4226 = vmatprep.subr.mxu0 0.0
  %4227 = vmatpush1.msra.mxu0 0.0
  %4228 = vmatprep.subr.mxu0 0.0
  %4229 = vmatpush1.msra.mxu0 0.0
  %4230 = vmatprep.subr.mxu0 0.0
  %4231 = vmatpush1.msra.mxu0 0.0
  %4232 = vmatprep.subr.mxu0 0.0
  %4233 = vmatpush1.msra.mxu0 0.0
  %4234 = vmatprep.subr.mxu0 0.0
  %4235 = vmatpush1.msra.mxu0 0.0
  %4236 = vmatprep.subr.mxu0 0.0
  %4237 = vmatpush1.msra.mxu0 0.0
  %4238 = vmatprep.subr.mxu0 0.0
  %4239 = vmatpush1.msra.mxu0 0.0
  %4240 = vmatprep.subr.mxu0 0.0
  %4241 = vmatpush1.msra.mxu0 0.0
  %4242 = vmatprep.subr.mxu0 0.0
  %4243 = vmatpush1.msra.mxu0 0.0
  %4244 = vmatprep.subr.mxu0 0.0
  %4245 = vmatpush1.msra.mxu0 0.0
  %4246 = vmatprep.subr.mxu0 0.0
  %4247 = vmatpush1.msra.mxu0 0.0
  %4248 = vmatprep.subr.mxu0 0.0
  %4249 = vmatpush1.msra.mxu0 0.0
  %4250 = vmatprep.subr.mxu0 0.0
  %4251 = vmatpush1.msra.mxu0 0.0
  %4252 = vmatprep.mubr.f32.mxu0 0.0
  %v4253 = vand.u32 %v3652, 4294901760
  %4254 = vmatmul.mubr.f32.gmra.mrb[0].mxu0 %v4253
  %v4255 = vpop.f32.mrb[0].mxu0
  %v4256 = vadd.f32 %v4128, %v4255
  %v4257 = vpop.f32.mrb[0].mxu0
  %4258 = vmatprep.mubr.f32.mxu0 0.0
  %v4259 = vand.u32 %v3655, 4294901760
  %4260 = vmatmul.mubr.f32.gmra.mrb[0].mxu0 %v4259
  %v4261 = vpop.f32.mrb[0].mxu0
  %v4262 = vadd.f32 %v4136, %v4261
  %v4263 = vpop.f32.mrb[0].mxu0
  %4264 = vmatprep.mubr.f32.mxu0 0.0
  %v4265 = vand.u32 %v3658, 4294901760
  %4266 = vmatmul.mubr.f32.gmra.mrb[0].mxu0 %v4265
  %v4267 = vpop.f32.mrb[0].mxu0
  %v4268 = vadd.f32 %v4144, %v4267
  %v4269 = vpop.f32.mrb[0].mxu0
  %4270 = vmatprep.mubr.f32.mxu0 0.0
  %v4271 = vand.u32 %v3661, 4294901760
  %4272 = vmatmul.mubr.f32.gmra.mrb[0].mxu0 %v4271
  %v4273 = vpop.f32.mrb[0].mxu0
  %v4274 = vadd.f32 %v4152, %v4273
  %v4275 = vpop.f32.mrb[0].mxu0
  %4276 = vmatprep.mubr.f32.mxu0 0.0
  %v4277 = vand.u32 %v3664, 4294901760
  %4278 = vmatmul.mubr.f32.gmra.mrb[0].mxu0 %v4277
  %v4279 = vpop.f32.mrb[0].mxu0
  %v4280 = vadd.f32 %v4160, %v4279
  %v4281 = vpop.f32.mrb[0].mxu0
  %4282 = vmatprep.mubr.f32.mxu0 0.0
  %v4283 = vand.u32 %v3667, 4294901760
  %4284 = vmatmul.mubr.f32.gmra.mrb[0].mxu0 %v4283
  %v4285 = vpop.f32.mrb[0].mxu0
  %v4286 = vadd.f32 %v4168, %v4285
  %v4287 = vpop.f32.mrb[0].mxu0
  %4288 = vmatprep.mubr.f32.mxu0 0.0
  %v4289 = vand.u32 %v3670, 4294901760
  %4290 = vmatmul.mubr.f32.gmra.mrb[0].mxu0 %v4289
  %v4291 = vpop.f32.mrb[0].mxu0
  %v4292 = vadd.f32 %v4176, %v4291
  %v4293 = vpop.f32.mrb[0].mxu0
  %4294 = vdwg.mxu0
  %4295 = vmatprep.subr.mxu0 0.0
  %v4296 = vand.u32 %v3599, 4294901760
  %4297 = vmatpush1.msra.mxu0 %v4296
  %4298 = vmatprep.subr.mxu0 0.0
  %v4299 = vand.u32 %v3600, 4294901760
  %4300 = vmatpush1.msra.mxu0 %v4299
  %4301 = vmatprep.subr.mxu0 0.0
  %v4302 = vand.u32 %v3673, 4294901760
  %4303 = vmatpush1.msra.mxu0 %v4302
  %4304 = vmatprep.subr.mxu0 0.0
  %4305 = vmatpush1.msra.mxu0 0.0
  %4306 = vmatprep.subr.mxu0 0.0
  %4307 = vmatpush1.msra.mxu0 0.0
  %4308 = vmatprep.subr.mxu0 0.0
  %4309 = vmatpush1.msra.mxu0 0.0
  %4310 = vmatprep.subr.mxu0 0.0
  %4311 = vmatpush1.msra.mxu0 0.0
  %4312 = vmatprep.subr.mxu0 0.0
  %4313 = vmatpush1.msra.mxu0 0.0
  %4314 = vmatprep.subr.mxu0 0.0
  %4315 = vmatpush1.msra.mxu0 0.0
  %4316 = vmatprep.subr.mxu0 0.0
  %4317 = vmatpush1.msra.mxu0 0.0
  %4318 = vmatprep.subr.mxu0 0.0
  %4319 = vmatpush1.msra.mxu0 0.0
  %4320 = vmatprep.subr.mxu0 0.0
  %4321 = vmatpush1.msra.mxu0 0.0
  %4322 = vmatprep.subr.mxu0 0.0
  %4323 = vmatpush1.msra.mxu0 0.0
  %4324 = vmatprep.subr.mxu0 0.0
  %4325 = vmatpush1.msra.mxu0 0.0
  %4326 = vmatprep.subr.mxu0 0.0
  %4327 = vmatpush1.msra.mxu0 0.0
  %4328 = vmatprep.subr.mxu0 0.0
  %4329 = vmatpush1.msra.mxu0 0.0
  %4330 = vmatprep.subr.mxu0 0.0
  %4331 = vmatpush1.msra.mxu0 0.0
  %4332 = vmatprep.subr.mxu0 0.0
  %4333 = vmatpush1.msra.mxu0 0.0
  %4334 = vmatprep.subr.mxu0 0.0
  %4335 = vmatpush1.msra.mxu0 0.0
  %4336 = vmatprep.subr.mxu0 0.0
  %4337 = vmatpush1.msra.mxu0 0.0
  %4338 = vmatprep.subr.mxu0 0.0
  %4339 = vmatpush1.msra.mxu0 0.0
  %4340 = vmatprep.subr.mxu0 0.0
  %4341 = vmatpush1.msra.mxu0 0.0
  %4342 = vmatprep.subr.mxu0 0.0
  %4343 = vmatpush1.msra.mxu0 0.0
  %4344 = vmatprep.subr.mxu0 0.0
  %4345 = vmatpush1.msra.mxu0 0.0
  %4346 = vmatprep.subr.mxu0 0.0
  %4347 = vmatpush1.msra.mxu0 0.0
  %4348 = vmatprep.subr.mxu0 0.0
  %4349 = vmatpush1.msra.mxu0 0.0
  %4350 = vmatprep.subr.mxu0 0.0
  %4351 = vmatpush1.msra.mxu0 0.0
  %4352 = vmatprep.subr.mxu0 0.0
  %4353 = vmatpush1.msra.mxu0 0.0
  %4354 = vmatprep.subr.mxu0 0.0
  %4355 = vmatpush1.msra.mxu0 0.0
  %4356 = vmatprep.subr.mxu0 0.0
  %4357 = vmatpush1.msra.mxu0 0.0
  %4358 = vmatprep.subr.mxu0 0.0
  %4359 = vmatpush1.msra.mxu0 0.0
  %4360 = vmatprep.subr.mxu0 0.0
  %4361 = vmatpush1.msra.mxu0 0.0
  %4362 = vmatprep.mubr.f32.mxu0 0.0
  %v4363 = vand.u32 %v3652, 4294901760
  %4364 = vmatmul.mubr.f32.gmra.mrb[0].mxu0 %v4363
  %v4365 = vpop.f32.mrb[0].mxu0
  %v4366 = vadd.f32 %v4256, %v4365
  %v4367 = vpop.f32.mrb[0].mxu0
  %4368 = vmatprep.mubr.f32.mxu0 0.0
  %v4369 = vand.u32 %v3655, 4294901760
  %4370 = vmatmul.mubr.f32.gmra.mrb[0].mxu0 %v4369
  %v4371 = vpop.f32.mrb[0].mxu0
  %v4372 = vadd.f32 %v4262, %v4371
  %v4373 = vpop.f32.mrb[0].mxu0
  %4374 = vmatprep.mubr.f32.mxu0 0.0
  %v4375 = vand.u32 %v3658, 4294901760
  %4376 = vmatmul.mubr.f32.gmra.mrb[0].mxu0 %v4375
  %v4377 = vpop.f32.mrb[0].mxu0
  %v4378 = vadd.f32 %v4268, %v4377
  %v4379 = vpop.f32.mrb[0].mxu0
  %4380 = vmatprep.mubr.f32.mxu0 0.0
  %v4381 = vand.u32 %v3661, 4294901760
  %4382 = vmatmul.mubr.f32.gmra.mrb[0].mxu0 %v4381
  %v4383 = vpop.f32.mrb[0].mxu0
  %v4384 = vadd.f32 %v4274, %v4383
  %v4385 = vpop.f32.mrb[0].mxu0
  %4386 = vmatprep.mubr.f32.mxu0 0.0
  %v4387 = vand.u32 %v3664, 4294901760
  %4388 = vmatmul.mubr.f32.gmra.mrb[0].mxu0 %v4387
  %v4389 = vpop.f32.mrb[0].mxu0
  %v4390 = vadd.f32 %v4280, %v4389
  %v4391 = vpop.f32.mrb[0].mxu0
  %4392 = vmatprep.mubr.f32.mxu0 0.0
  %v4393 = vand.u32 %v3667, 4294901760
  %4394 = vmatmul.mubr.f32.gmra.mrb[0].mxu0 %v4393
  %v4395 = vpop.f32.mrb[0].mxu0
  %v4396 = vadd.f32 %v4286, %v4395
  %v4397 = vpop.f32.mrb[0].mxu0
  %4398 = vmatprep.mubr.f32.mxu0 0.0
  %v4399 = vand.u32 %v3670, 4294901760
  %4400 = vmatmul.mubr.f32.gmra.mrb[0].mxu0 %v4399
  %v4401 = vpop.f32.mrb[0].mxu0
  %v4402 = vadd.f32 %v4292, %v4401
  %v4403 = vpop.f32.mrb[0].mxu0
  %4404 = vdwg.mxu0
  %v4405 = vtanh.pop %v4366
  %v4406 = vtanh.pop %v4372
  %v4407 = vtanh.pop %v4378
  %v4408 = vtanh.pop %v4384
  %v4409 = vtanh.pop %v4390
  %v4410 = vtanh.pop %v4396
  %v4411 = vtanh.pop %v4402
  %v4412 = vld [vmem:[%s15] sm:$0xf]
  %v4413 = vld [vmem:[%s16] sm:$0xf]
  %4415 = vset.pattern.permute.xlu0 0
  %4416 = vperm.xlu0 %4415, %v4413
  %v4417 = vpop.permute.xlu0 %4416
  %v4420 = vsel %vm864, %v4412, 0
  %v4423 = vsel %vm874, %v4411, 0
  %4425 = vmatprep.subr.mxu0 0.0
  %v4426 = vand.u32 %v4405, 4294901760
  %4427 = vmatpush1.msra.mxu0 %v4426
  %4428 = vmatprep.subr.mxu0 0.0
  %v4429 = vand.u32 %v4406, 4294901760
  %4430 = vmatpush1.msra.mxu0 %v4429
  %4431 = vmatprep.subr.mxu0 0.0
  %v4432 = vand.u32 %v4407, 4294901760
  %4433 = vmatpush1.msra.mxu0 %v4432
  %4434 = vmatprep.subr.mxu0 0.0
  %v4435 = vand.u32 %v4408, 4294901760
  %4436 = vmatpush1.msra.mxu0 %v4435
  %4437 = vmatprep.subr.mxu0 0.0
  %v4438 = vand.u32 %v4409, 4294901760
  %4439 = vmatpush1.msra.mxu0 %v4438
  %4440 = vmatprep.subr.mxu0 0.0
  %v4441 = vand.u32 %v4410, 4294901760
  %4442 = vmatpush1.msra.mxu0 %v4441
  %4443 = vmatprep.subr.mxu0 0.0
  %v4444 = vand.u32 %v4423, 4294901760
  %4445 = vmatpush1.msra.mxu0 %v4444
  %4446 = vmatprep.subr.mxu0 0.0
  %4447 = vmatpush1.msra.mxu0 0.0
  %4448 = vmatprep.subr.mxu0 0.0
  %4449 = vmatpush1.msra.mxu0 0.0
  %4450 = vmatprep.subr.mxu0 0.0
  %4451 = vmatpush1.msra.mxu0 0.0
  %4452 = vmatprep.subr.mxu0 0.0
  %4453 = vmatpush1.msra.mxu0 0.0
  %4454 = vmatprep.subr.mxu0 0.0
  %4455 = vmatpush1.msra.mxu0 0.0
  %4456 = vmatprep.subr.mxu0 0.0
  %4457 = vmatpush1.msra.mxu0 0.0
  %4458 = vmatprep.subr.mxu0 0.0
  %4459 = vmatpush1.msra.mxu0 0.0
  %4460 = vmatprep.subr.mxu0 0.0
  %4461 = vmatpush1.msra.mxu0 0.0
  %4462 = vmatprep.subr.mxu0 0.0
  %4463 = vmatpush1.msra.mxu0 0.0
  %4464 = vmatprep.subr.mxu0 0.0
  %4465 = vmatpush1.msra.mxu0 0.0
  %4466 = vmatprep.subr.mxu0 0.0
  %4467 = vmatpush1.msra.mxu0 0.0
  %4468 = vmatprep.subr.mxu0 0.0
  %4469 = vmatpush1.msra.mxu0 0.0
  %4470 = vmatprep.subr.mxu0 0.0
  %4471 = vmatpush1.msra.mxu0 0.0
  %4472 = vmatprep.subr.mxu0 0.0
  %4473 = vmatpush1.msra.mxu0 0.0
  %4474 = vmatprep.subr.mxu0 0.0
  %4475 = vmatpush1.msra.mxu0 0.0
  %4476 = vmatprep.subr.mxu0 0.0
  %4477 = vmatpush1.msra.mxu0 0.0
  %4478 = vmatprep.subr.mxu0 0.0
  %4479 = vmatpush1.msra.mxu0 0.0
  %4480 = vmatprep.subr.mxu0 0.0
  %4481 = vmatpush1.msra.mxu0 0.0
  %4482 = vmatprep.subr.mxu0 0.0
  %4483 = vmatpush1.msra.mxu0 0.0
  %4484 = vmatprep.subr.mxu0 0.0
  %4485 = vmatpush1.msra.mxu0 0.0
  %4486 = vmatprep.subr.mxu0 0.0
  %4487 = vmatpush1.msra.mxu0 0.0
  %4488 = vmatprep.subr.mxu0 0.0
  %4489 = vmatpush1.msra.mxu0 0.0
  %4490 = vmatprep.subr.mxu0 0.0
  %4491 = vmatpush1.msra.mxu0 0.0
  %4492 = vmatprep.subr.mxu0 0.0
  %4493 = vmatpush1.msra.mxu0 0.0
  %4494 = vmatprep.subr.mxu0 0.0
  %4495 = vmatpush1.msra.mxu0 0.0
  %4496 = vmatprep.mubr.f32.mxu0 0.0
  %v4497 = vand.u32 %v4420, 4294901760
  %v4498 = vsub.f32 %v4420, %v4497
  %v4499 = vand.u32 %v4498, 4294901760
  %v4500 = vsub.f32 %v4498, %v4499
  %v4501 = vand.u32 %v4500, 4294901760
  %4502 = vmatmul.mubr.f32.gmra.mrb[0].mxu0 %v4501
  %v4503 = vpop.f32.mrb[0].mxu0
  %v4504 = vadd.f32 %v4417, %v4503
  %v4505 = vpop.f32.mrb[0].mxu0
  %4506 = vdwg.mxu0
  %4507 = vmatprep.subr.mxu0 0.0
  %v4508 = vand.u32 %v4405, 4294901760
  %v4509 = vsub.f32 %v4405, %v4508
  %v4510 = vand.u32 %v4509, 4294901760
  %v4511 = vsub.f32 %v4509, %v4510
  %v4512 = vand.u32 %v4511, 4294901760
  %4513 = vmatpush1.msra.mxu0 %v4512
  %4514 = vmatprep.subr.mxu0 0.0
  %v4515 = vand.u32 %v4406, 4294901760
  %v4516 = vsub.f32 %v4406, %v4515
  %v4517 = vand.u32 %v4516, 4294901760
  %v4518 = vsub.f32 %v4516, %v4517
  %v4519 = vand.u32 %v4518, 4294901760
  %4520 = vmatpush1.msra.mxu0 %v4519
  %4521 = vmatprep.subr.mxu0 0.0
  %v4522 = vand.u32 %v4407, 4294901760
  %v4523 = vsub.f32 %v4407, %v4522
  %v4524 = vand.u32 %v4523, 4294901760
  %v4525 = vsub.f32 %v4523, %v4524
  %v4526 = vand.u32 %v4525, 4294901760
  %4527 = vmatpush1.msra.mxu0 %v4526
  %4528 = vmatprep.subr.mxu0 0.0
  %v4529 = vand.u32 %v4408, 4294901760
  %v4530 = vsub.f32 %v4408, %v4529
  %v4531 = vand.u32 %v4530, 4294901760
  %v4532 = vsub.f32 %v4530, %v4531
  %v4533 = vand.u32 %v4532, 4294901760
  %4534 = vmatpush1.msra.mxu0 %v4533
  %4535 = vmatprep.subr.mxu0 0.0
  %v4536 = vand.u32 %v4409, 4294901760
  %v4537 = vsub.f32 %v4409, %v4536
  %v4538 = vand.u32 %v4537, 4294901760
  %v4539 = vsub.f32 %v4537, %v4538
  %v4540 = vand.u32 %v4539, 4294901760
  %4541 = vmatpush1.msra.mxu0 %v4540
  %4542 = vmatprep.subr.mxu0 0.0
  %v4543 = vand.u32 %v4410, 4294901760
  %v4544 = vsub.f32 %v4410, %v4543
  %v4545 = vand.u32 %v4544, 4294901760
  %v4546 = vsub.f32 %v4544, %v4545
  %v4547 = vand.u32 %v4546, 4294901760
  %4548 = vmatpush1.msra.mxu0 %v4547
  %4549 = vmatprep.subr.mxu0 0.0
  %v4550 = vand.u32 %v4423, 4294901760
  %v4551 = vsub.f32 %v4423, %v4550
  %v4552 = vand.u32 %v4551, 4294901760
  %v4553 = vsub.f32 %v4551, %v4552
  %v4554 = vand.u32 %v4553, 4294901760
  %4555 = vmatpush1.msra.mxu0 %v4554
  %4556 = vmatprep.subr.mxu0 0.0
  %4557 = vmatpush1.msra.mxu0 0.0
  %4558 = vmatprep.subr.mxu0 0.0
  %4559 = vmatpush1.msra.mxu0 0.0
  %4560 = vmatprep.subr.mxu0 0.0
  %4561 = vmatpush1.msra.mxu0 0.0
  %4562 = vmatprep.subr.mxu0 0.0
  %4563 = vmatpush1.msra.mxu0 0.0
  %4564 = vmatprep.subr.mxu0 0.0
  %4565 = vmatpush1.msra.mxu0 0.0
  %4566 = vmatprep.subr.mxu0 0.0
  %4567 = vmatpush1.msra.mxu0 0.0
  %4568 = vmatprep.subr.mxu0 0.0
  %4569 = vmatpush1.msra.mxu0 0.0
  %4570 = vmatprep.subr.mxu0 0.0
  %4571 = vmatpush1.msra.mxu0 0.0
  %4572 = vmatprep.subr.mxu0 0.0
  %4573 = vmatpush1.msra.mxu0 0.0
  %4574 = vmatprep.subr.mxu0 0.0
  %4575 = vmatpush1.msra.mxu0 0.0
  %4576 = vmatprep.subr.mxu0 0.0
  %4577 = vmatpush1.msra.mxu0 0.0
  %4578 = vmatprep.subr.mxu0 0.0
  %4579 = vmatpush1.msra.mxu0 0.0
  %4580 = vmatprep.subr.mxu0 0.0
  %4581 = vmatpush1.msra.mxu0 0.0
  %4582 = vmatprep.subr.mxu0 0.0
  %4583 = vmatpush1.msra.mxu0 0.0
  %4584 = vmatprep.subr.mxu0 0.0
  %4585 = vmatpush1.msra.mxu0 0.0
  %4586 = vmatprep.subr.mxu0 0.0
  %4587 = vmatpush1.msra.mxu0 0.0
  %4588 = vmatprep.subr.mxu0 0.0
  %4589 = vmatpush1.msra.mxu0 0.0
  %4590 = vmatprep.subr.mxu0 0.0
  %4591 = vmatpush1.msra.mxu0 0.0
  %4592 = vmatprep.subr.mxu0 0.0
  %4593 = vmatpush1.msra.mxu0 0.0
  %4594 = vmatprep.subr.mxu0 0.0
  %4595 = vmatpush1.msra.mxu0 0.0
  %4596 = vmatprep.subr.mxu0 0.0
  %4597 = vmatpush1.msra.mxu0 0.0
  %4598 = vmatprep.subr.mxu0 0.0
  %4599 = vmatpush1.msra.mxu0 0.0
  %4600 = vmatprep.subr.mxu0 0.0
  %4601 = vmatpush1.msra.mxu0 0.0
  %4602 = vmatprep.subr.mxu0 0.0
  %4603 = vmatpush1.msra.mxu0 0.0
  %4604 = vmatprep.subr.mxu0 0.0
  %4605 = vmatpush1.msra.mxu0 0.0
  %4606 = vmatprep.mubr.f32.mxu0 0.0
  %v4607 = vand.u32 %v4420, 4294901760
  %4608 = vmatmul.mubr.f32.gmra.mrb[0].mxu0 %v4607
  %v4609 = vpop.f32.mrb[0].mxu0
  %v4610 = vadd.f32 %v4504, %v4609
  %v4611 = vpop.f32.mrb[0].mxu0
  %4612 = vdwg.mxu0
  %4613 = vmatprep.subr.mxu0 0.0
  %v4614 = vand.u32 %v4405, 4294901760
  %v4615 = vsub.f32 %v4405, %v4614
  %4616 = vmatpush1.msra.mxu0 %v4615
  %4617 = vmatprep.subr.mxu0 0.0
  %v4618 = vand.u32 %v4406, 4294901760
  %v4619 = vsub.f32 %v4406, %v4618
  %4620 = vmatpush1.msra.mxu0 %v4619
  %4621 = vmatprep.subr.mxu0 0.0
  %v4622 = vand.u32 %v4407, 4294901760
  %v4623 = vsub.f32 %v4407, %v4622
  %4624 = vmatpush1.msra.mxu0 %v4623
  %4625 = vmatprep.subr.mxu0 0.0
  %v4626 = vand.u32 %v4408, 4294901760
  %v4627 = vsub.f32 %v4408, %v4626
  %4628 = vmatpush1.msra.mxu0 %v4627
  %4629 = vmatprep.subr.mxu0 0.0
  %v4630 = vand.u32 %v4409, 4294901760
  %v4631 = vsub.f32 %v4409, %v4630
  %4632 = vmatpush1.msra.mxu0 %v4631
  %4633 = vmatprep.subr.mxu0 0.0
  %v4634 = vand.u32 %v4410, 4294901760
  %v4635 = vsub.f32 %v4410, %v4634
  %4636 = vmatpush1.msra.mxu0 %v4635
  %4637 = vmatprep.subr.mxu0 0.0
  %v4638 = vand.u32 %v4423, 4294901760
  %v4639 = vsub.f32 %v4423, %v4638
  %4640 = vmatpush1.msra.mxu0 %v4639
  %4641 = vmatprep.subr.mxu0 0.0
  %4642 = vmatpush1.msra.mxu0 0.0
  %4643 = vmatprep.subr.mxu0 0.0
  %4644 = vmatpush1.msra.mxu0 0.0
  %4645 = vmatprep.subr.mxu0 0.0
  %4646 = vmatpush1.msra.mxu0 0.0
  %4647 = vmatprep.subr.mxu0 0.0
  %4648 = vmatpush1.msra.mxu0 0.0
  %4649 = vmatprep.subr.mxu0 0.0
  %4650 = vmatpush1.msra.mxu0 0.0
  %4651 = vmatprep.subr.mxu0 0.0
  %4652 = vmatpush1.msra.mxu0 0.0
  %4653 = vmatprep.subr.mxu0 0.0
  %4654 = vmatpush1.msra.mxu0 0.0
  %4655 = vmatprep.subr.mxu0 0.0
  %4656 = vmatpush1.msra.mxu0 0.0
  %4657 = vmatprep.subr.mxu0 0.0
  %4658 = vmatpush1.msra.mxu0 0.0
  %4659 = vmatprep.subr.mxu0 0.0
  %4660 = vmatpush1.msra.mxu0 0.0
  %4661 = vmatprep.subr.mxu0 0.0
  %4662 = vmatpush1.msra.mxu0 0.0
  %4663 = vmatprep.subr.mxu0 0.0
  %4664 = vmatpush1.msra.mxu0 0.0
  %4665 = vmatprep.subr.mxu0 0.0
  %4666 = vmatpush1.msra.mxu0 0.0
  %4667 = vmatprep.subr.mxu0 0.0
  %4668 = vmatpush1.msra.mxu0 0.0
  %4669 = vmatprep.subr.mxu0 0.0
  %4670 = vmatpush1.msra.mxu0 0.0
  %4671 = vmatprep.subr.mxu0 0.0
  %4672 = vmatpush1.msra.mxu0 0.0
  %4673 = vmatprep.subr.mxu0 0.0
  %4674 = vmatpush1.msra.mxu0 0.0
  %4675 = vmatprep.subr.mxu0 0.0
  %4676 = vmatpush1.msra.mxu0 0.0
  %4677 = vmatprep.subr.mxu0 0.0
  %4678 = vmatpush1.msra.mxu0 0.0
  %4679 = vmatprep.subr.mxu0 0.0
  %4680 = vmatpush1.msra.mxu0 0.0
  %4681 = vmatprep.subr.mxu0 0.0
  %4682 = vmatpush1.msra.mxu0 0.0
  %4683 = vmatprep.subr.mxu0 0.0
  %4684 = vmatpush1.msra.mxu0 0.0
  %4685 = vmatprep.subr.mxu0 0.0
  %4686 = vmatpush1.msra.mxu0 0.0
  %4687 = vmatprep.subr.mxu0 0.0
  %4688 = vmatpush1.msra.mxu0 0.0
  %4689 = vmatprep.subr.mxu0 0.0
  %4690 = vmatpush1.msra.mxu0 0.0
  %4691 = vmatprep.mubr.f32.mxu0 0.0
  %v4692 = vand.u32 %v4420, 4294901760
  %v4693 = vsub.f32 %v4420, %v4692
  %4694 = vmatmul.mubr.f32.gmra.mrb[0].mxu0 %v4693
  %v4695 = vpop.f32.mrb[0].mxu0
  %v4696 = vadd.f32 %v4610, %v4695
  %v4697 = vpop.f32.mrb[0].mxu0
  %4698 = vdwg.mxu0
  %4699 = vmatprep.subr.mxu0 0.0
  %v4700 = vand.u32 %v4405, 4294901760
  %4701 = vmatpush1.msra.mxu0 %v4700
  %4702 = vmatprep.subr.mxu0 0.0
  %v4703 = vand.u32 %v4406, 4294901760
  %4704 = vmatpush1.msra.mxu0 %v4703
  %4705 = vmatprep.subr.mxu0 0.0
  %v4706 = vand.u32 %v4407, 4294901760
  %4707 = vmatpush1.msra.mxu0 %v4706
  %4708 = vmatprep.subr.mxu0 0.0
  %v4709 = vand.u32 %v4408, 4294901760
  %4710 = vmatpush1.msra.mxu0 %v4709
  %4711 = vmatprep.subr.mxu0 0.0
  %v4712 = vand.u32 %v4409, 4294901760
  %4713 = vmatpush1.msra.mxu0 %v4712
  %4714 = vmatprep.subr.mxu0 0.0
  %v4715 = vand.u32 %v4410, 4294901760
  %4716 = vmatpush1.msra.mxu0 %v4715
  %4717 = vmatprep.subr.mxu0 0.0
  %v4718 = vand.u32 %v4423, 4294901760
  %4719 = vmatpush1.msra.mxu0 %v4718
  %4720 = vmatprep.subr.mxu0 0.0
  %4721 = vmatpush1.msra.mxu0 0.0
  %4722 = vmatprep.subr.mxu0 0.0
  %4723 = vmatpush1.msra.mxu0 0.0
  %4724 = vmatprep.subr.mxu0 0.0
  %4725 = vmatpush1.msra.mxu0 0.0
  %4726 = vmatprep.subr.mxu0 0.0
  %4727 = vmatpush1.msra.mxu0 0.0
  %4728 = vmatprep.subr.mxu0 0.0
  %4729 = vmatpush1.msra.mxu0 0.0
  %4730 = vmatprep.subr.mxu0 0.0
  %4731 = vmatpush1.msra.mxu0 0.0
  %4732 = vmatprep.subr.mxu0 0.0
  %4733 = vmatpush1.msra.mxu0 0.0
  %4734 = vmatprep.subr.mxu0 0.0
  %4735 = vmatpush1.msra.mxu0 0.0
  %4736 = vmatprep.subr.mxu0 0.0
  %4737 = vmatpush1.msra.mxu0 0.0
  %4738 = vmatprep.subr.mxu0 0.0
  %4739 = vmatpush1.msra.mxu0 0.0
  %4740 = vmatprep.subr.mxu0 0.0
  %4741 = vmatpush1.msra.mxu0 0.0
  %4742 = vmatprep.subr.mxu0 0.0
  %4743 = vmatpush1.msra.mxu0 0.0
  %4744 = vmatprep.subr.mxu0 0.0
  %4745 = vmatpush1.msra.mxu0 0.0
  %4746 = vmatprep.subr.mxu0 0.0
  %4747 = vmatpush1.msra.mxu0 0.0
  %4748 = vmatprep.subr.mxu0 0.0
  %4749 = vmatpush1.msra.mxu0 0.0
  %4750 = vmatprep.subr.mxu0 0.0
  %4751 = vmatpush1.msra.mxu0 0.0
  %4752 = vmatprep.subr.mxu0 0.0
  %4753 = vmatpush1.msra.mxu0 0.0
  %4754 = vmatprep.subr.mxu0 0.0
  %4755 = vmatpush1.msra.mxu0 0.0
  %4756 = vmatprep.subr.mxu0 0.0
  %4757 = vmatpush1.msra.mxu0 0.0
  %4758 = vmatprep.subr.mxu0 0.0
  %4759 = vmatpush1.msra.mxu0 0.0
  %4760 = vmatprep.subr.mxu0 0.0
  %4761 = vmatpush1.msra.mxu0 0.0
  %4762 = vmatprep.subr.mxu0 0.0
  %4763 = vmatpush1.msra.mxu0 0.0
  %4764 = vmatprep.subr.mxu0 0.0
  %4765 = vmatpush1.msra.mxu0 0.0
  %4766 = vmatprep.subr.mxu0 0.0
  %4767 = vmatpush1.msra.mxu0 0.0
  %4768 = vmatprep.subr.mxu0 0.0
  %4769 = vmatpush1.msra.mxu0 0.0
  %4770 = vmatprep.mubr.f32.mxu0 0.0
  %v4771 = vand.u32 %v4420, 4294901760
  %v4772 = vsub.f32 %v4420, %v4771
  %v4773 = vand.u32 %v4772, 4294901760
  %4774 = vmatmul.mubr.f32.gmra.mrb[0].mxu0 %v4773
  %v4775 = vpop.f32.mrb[0].mxu0
  %v4776 = vadd.f32 %v4696, %v4775
  %v4777 = vpop.f32.mrb[0].mxu0
  %4778 = vdwg.mxu0
  %4779 = vmatprep.subr.mxu0 0.0
  %v4780 = vand.u32 %v4405, 4294901760
  %v4781 = vsub.f32 %v4405, %v4780
  %v4782 = vand.u32 %v4781, 4294901760
  %4783 = vmatpush1.msra.mxu0 %v4782
  %4784 = vmatprep.subr.mxu0 0.0
  %v4785 = vand.u32 %v4406, 4294901760
  %v4786 = vsub.f32 %v4406, %v4785
  %v4787 = vand.u32 %v4786, 4294901760
  %4788 = vmatpush1.msra.mxu0 %v4787
  %4789 = vmatprep.subr.mxu0 0.0
  %v4790 = vand.u32 %v4407, 4294901760
  %v4791 = vsub.f32 %v4407, %v4790
  %v4792 = vand.u32 %v4791, 4294901760
  %4793 = vmatpush1.msra.mxu0 %v4792
  %4794 = vmatprep.subr.mxu0 0.0
  %v4795 = vand.u32 %v4408, 4294901760
  %v4796 = vsub.f32 %v4408, %v4795
  %v4797 = vand.u32 %v4796, 4294901760
  %4798 = vmatpush1.msra.mxu0 %v4797
  %4799 = vmatprep.subr.mxu0 0.0
  %v4800 = vand.u32 %v4409, 4294901760
  %v4801 = vsub.f32 %v4409, %v4800
  %v4802 = vand.u32 %v4801, 4294901760
  %4803 = vmatpush1.msra.mxu0 %v4802
  %4804 = vmatprep.subr.mxu0 0.0
  %v4805 = vand.u32 %v4410, 4294901760
  %v4806 = vsub.f32 %v4410, %v4805
  %v4807 = vand.u32 %v4806, 4294901760
  %4808 = vmatpush1.msra.mxu0 %v4807
  %4809 = vmatprep.subr.mxu0 0.0
  %v4810 = vand.u32 %v4423, 4294901760
  %v4811 = vsub.f32 %v4423, %v4810
  %v4812 = vand.u32 %v4811, 4294901760
  %4813 = vmatpush1.msra.mxu0 %v4812
  %4814 = vmatprep.subr.mxu0 0.0
  %4815 = vmatpush1.msra.mxu0 0.0
  %4816 = vmatprep.subr.mxu0 0.0
  %4817 = vmatpush1.msra.mxu0 0.0
  %4818 = vmatprep.subr.mxu0 0.0
  %4819 = vmatpush1.msra.mxu0 0.0
  %4820 = vmatprep.subr.mxu0 0.0
  %4821 = vmatpush1.msra.mxu0 0.0
  %4822 = vmatprep.subr.mxu0 0.0
  %4823 = vmatpush1.msra.mxu0 0.0
  %4824 = vmatprep.subr.mxu0 0.0
  %4825 = vmatpush1.msra.mxu0 0.0
  %4826 = vmatprep.subr.mxu0 0.0
  %4827 = vmatpush1.msra.mxu0 0.0
  %4828 = vmatprep.subr.mxu0 0.0
  %4829 = vmatpush1.msra.mxu0 0.0
  %4830 = vmatprep.subr.mxu0 0.0
  %4831 = vmatpush1.msra.mxu0 0.0
  %4832 = vmatprep.subr.mxu0 0.0
  %4833 = vmatpush1.msra.mxu0 0.0
  %4834 = vmatprep.subr.mxu0 0.0
  %4835 = vmatpush1.msra.mxu0 0.0
  %4836 = vmatprep.subr.mxu0 0.0
  %4837 = vmatpush1.msra.mxu0 0.0
  %4838 = vmatprep.subr.mxu0 0.0
  %4839 = vmatpush1.msra.mxu0 0.0
  %4840 = vmatprep.subr.mxu0 0.0
  %4841 = vmatpush1.msra.mxu0 0.0
  %4842 = vmatprep.subr.mxu0 0.0
  %4843 = vmatpush1.msra.mxu0 0.0
  %4844 = vmatprep.subr.mxu0 0.0
  %4845 = vmatpush1.msra.mxu0 0.0
  %4846 = vmatprep.subr.mxu0 0.0
  %4847 = vmatpush1.msra.mxu0 0.0
  %4848 = vmatprep.subr.mxu0 0.0
  %4849 = vmatpush1.msra.mxu0 0.0
  %4850 = vmatprep.subr.mxu0 0.0
  %4851 = vmatpush1.msra.mxu0 0.0
  %4852 = vmatprep.subr.mxu0 0.0
  %4853 = vmatpush1.msra.mxu0 0.0
  %4854 = vmatprep.subr.mxu0 0.0
  %4855 = vmatpush1.msra.mxu0 0.0
  %4856 = vmatprep.subr.mxu0 0.0
  %4857 = vmatpush1.msra.mxu0 0.0
  %4858 = vmatprep.subr.mxu0 0.0
  %4859 = vmatpush1.msra.mxu0 0.0
  %4860 = vmatprep.subr.mxu0 0.0
  %4861 = vmatpush1.msra.mxu0 0.0
  %4862 = vmatprep.subr.mxu0 0.0
  %4863 = vmatpush1.msra.mxu0 0.0
  %4864 = vmatprep.mubr.f32.mxu0 0.0
  %v4865 = vand.u32 %v4420, 4294901760
  %4866 = vmatmul.mubr.f32.gmra.mrb[0].mxu0 %v4865
  %v4867 = vpop.f32.mrb[0].mxu0
  %v4868 = vadd.f32 %v4776, %v4867
  %v4869 = vpop.f32.mrb[0].mxu0
  %4870 = vdwg.mxu0
  %4871 = vmatprep.subr.mxu0 0.0
  %v4872 = vand.u32 %v4405, 4294901760
  %4873 = vmatpush1.msra.mxu0 %v4872
  %4874 = vmatprep.subr.mxu0 0.0
  %v4875 = vand.u32 %v4406, 4294901760
  %4876 = vmatpush1.msra.mxu0 %v4875
  %4877 = vmatprep.subr.mxu0 0.0
  %v4878 = vand.u32 %v4407, 4294901760
  %4879 = vmatpush1.msra.mxu0 %v4878
  %4880 = vmatprep.subr.mxu0 0.0
  %v4881 = vand.u32 %v4408, 4294901760
  %4882 = vmatpush1.msra.mxu0 %v4881
  %4883 = vmatprep.subr.mxu0 0.0
  %v4884 = vand.u32 %v4409, 4294901760
  %4885 = vmatpush1.msra.mxu0 %v4884
  %4886 = vmatprep.subr.mxu0 0.0
  %v4887 = vand.u32 %v4410, 4294901760
  %4888 = vmatpush1.msra.mxu0 %v4887
  %4889 = vmatprep.subr.mxu0 0.0
  %v4890 = vand.u32 %v4423, 4294901760
  %4891 = vmatpush1.msra.mxu0 %v4890
  %4892 = vmatprep.subr.mxu0 0.0
  %4893 = vmatpush1.msra.mxu0 0.0
  %4894 = vmatprep.subr.mxu0 0.0
  %4895 = vmatpush1.msra.mxu0 0.0
  %4896 = vmatprep.subr.mxu0 0.0
  %4897 = vmatpush1.msra.mxu0 0.0
  %4898 = vmatprep.subr.mxu0 0.0
  %4899 = vmatpush1.msra.mxu0 0.0
  %4900 = vmatprep.subr.mxu0 0.0
  %4901 = vmatpush1.msra.mxu0 0.0
  %4902 = vmatprep.subr.mxu0 0.0
  %4903 = vmatpush1.msra.mxu0 0.0
  %4904 = vmatprep.subr.mxu0 0.0
  %4905 = vmatpush1.msra.mxu0 0.0
  %4906 = vmatprep.subr.mxu0 0.0
  %4907 = vmatpush1.msra.mxu0 0.0
  %4908 = vmatprep.subr.mxu0 0.0
  %4909 = vmatpush1.msra.mxu0 0.0
  %4910 = vmatprep.subr.mxu0 0.0
  %4911 = vmatpush1.msra.mxu0 0.0
  %4912 = vmatprep.subr.mxu0 0.0
  %4913 = vmatpush1.msra.mxu0 0.0
  %4914 = vmatprep.subr.mxu0 0.0
  %4915 = vmatpush1.msra.mxu0 0.0
  %4916 = vmatprep.subr.mxu0 0.0
  %4917 = vmatpush1.msra.mxu0 0.0
  %4918 = vmatprep.subr.mxu0 0.0
  %4919 = vmatpush1.msra.mxu0 0.0
  %4920 = vmatprep.subr.mxu0 0.0
  %4921 = vmatpush1.msra.mxu0 0.0
  %4922 = vmatprep.subr.mxu0 0.0
  %4923 = vmatpush1.msra.mxu0 0.0
  %4924 = vmatprep.subr.mxu0 0.0
  %4925 = vmatpush1.msra.mxu0 0.0
  %4926 = vmatprep.subr.mxu0 0.0
  %4927 = vmatpush1.msra.mxu0 0.0
  %4928 = vmatprep.subr.mxu0 0.0
  %4929 = vmatpush1.msra.mxu0 0.0
  %4930 = vmatprep.subr.mxu0 0.0
  %4931 = vmatpush1.msra.mxu0 0.0
  %4932 = vmatprep.subr.mxu0 0.0
  %4933 = vmatpush1.msra.mxu0 0.0
  %4934 = vmatprep.subr.mxu0 0.0
  %4935 = vmatpush1.msra.mxu0 0.0
  %4936 = vmatprep.subr.mxu0 0.0
  %4937 = vmatpush1.msra.mxu0 0.0
  %4938 = vmatprep.subr.mxu0 0.0
  %4939 = vmatpush1.msra.mxu0 0.0
  %4940 = vmatprep.subr.mxu0 0.0
  %4941 = vmatpush1.msra.mxu0 0.0
  %4942 = vmatprep.mubr.f32.mxu0 0.0
  %v4943 = vand.u32 %v4420, 4294901760
  %4944 = vmatmul.mubr.f32.gmra.mrb[0].mxu0 %v4943
  %v4945 = vpop.f32.mrb[0].mxu0
  %v4946 = vadd.f32 %v4868, %v4945
  %v4947 = vpop.f32.mrb[0].mxu0
  %4948 = vdwg.mxu0
  %4949 = vst [vmem:[%s17] sm:$0xf] %v4946
  // Predicated region
  $region70: #{ae_2d_v2_forward.1} parent=0 // pred_check
    _
  $region71: #{ae_2d_v2_forward.1} parent=0 // pred_check_branch
    %4951 = sbr.rel (0) target = $region73
  $region72: #{ae_2d_v2_forward.1} parent=0 // pred_region
    _
  $region73: #{ae_2d_v2_forward.1} parent=0 // pred_fallthru
    _
  // Predicated region
  $region74: #{ae_2d_v2_forward.1} parent=0 // pred_check
    _
  $region75: #{ae_2d_v2_forward.1} parent=0 // pred_check_branch
    %4953 = sbr.rel (0) target = $region77
  $region76: #{ae_2d_v2_forward.1} parent=0 // pred_region
    _
  $region77: #{ae_2d_v2_forward.1} parent=0 // pred_fallthru
    _

</llo_original>
